<compile_context>
chip_gen: v6e
topology: v6e:2x2x1
jax: 0.10.0
libtpu: 0.0.40
codegen_flags: <defaults>
</compile_context>

<pallas_src>
import functools

import jax
import jax.numpy as jnp
from jax.experimental import pallas as pl
from jax.experimental.pallas import tpu as pltpu  # noqa: F401  (TPU backend)

HIDDEN = 32            # opt.hiddenSize
HEADS = 8              # conv1 heads
N_NODE = 40            # n_node (number of classes / vocab - 1)
STEPS = 2              # opt.step == GRU num_layers
NEG_SLOPE = 0.2        # GATConv leaky_relu negative slope
PRED_PAD = 128         # lane-padded predictor width (>= N_NODE, multiple of 128)
GRU_ROWS = 2 * HIDDEN + 2   # rows per GRU layer inside the packed GRU slab


# ---------------------------------------------------------------------------
# Fused forward kernel (single program, no grid; everything stays in VMEM)
# ---------------------------------------------------------------------------
def _fused_forward_kernel(
        feats_ref, adjb_ref, sel_ref, mask_ref,
        conv1_ref, w2_ref, vec_ref, gru_ref, out_ref,
        *, heads, hidden, seq_len, batch_size, num_layers):
    """conv1(ELU) -> conv2 -> pack -> masked multi-layer GRU -> linear."""
    f32 = jnp.float32
    bf16 = jnp.bfloat16
    n = feats_ref.shape[0]
    h3 = 3 * hidden

    # ---------------- GAT conv1 (heads=8, concat) + ELU ---------------------
    x = feats_ref[...]                                              # [N, d] f32
    w1 = conv1_ref[0:hidden, :]                                     # [d, H*d]
    att_dst1 = conv1_ref[hidden:hidden + heads, 0:hidden][:, None, :]              # [H,1,d]
    att_src1 = conv1_ref[hidden + heads:hidden + 2 * heads, 0:hidden][:, None, :]  # [H,1,d]
    bias1 = conv1_ref[hidden + 2 * heads:hidden + 3 * heads, 0:hidden][:, None, :]  # [H,1,d]

    # one lane-dense projection matmul (bf16 operands, f32 accumulate)
    xp_flat = jnp.dot(x.astype(bf16), w1.astype(bf16),
                      preferred_element_type=f32)                   # [N, H*d]
    # head-major view for attention logits / aggregation (cheap lane slices)
    xp_h = jnp.stack(
        [xp_flat[:, h * hidden:(h + 1) * hidden] for h in range(heads)],
        axis=0)                                                     # [H, N, d]

    # attention logits: dst term along sublanes, src term along lanes (f32)
    a_dst = jnp.sum(xp_h * att_dst1, axis=-1, keepdims=True)        # [H, N, 1]
    a_src = jnp.einsum('hod,hnd->hon', att_src1.astype(bf16), xp_h.astype(bf16),
                       preferred_element_type=f32)                  # [H, 1, N]
    e = a_dst + a_src                                               # [H, N, N]
    e = jnp.where(e > 0, e, NEG_SLOPE * e)                          # leaky_relu
    e = e + adjb_ref[...][None, :, :]                               # additive adj mask
    e = e - jnp.max(e, axis=-1, keepdims=True)
    p = jnp.exp(e)                                 # masked entries underflow to 0
    alpha = p * pl.reciprocal(jnp.sum(p, axis=-1, keepdims=True), approx=True)

    h1 = jnp.einsum('hij,hjd->hid', alpha.astype(bf16), xp_h.astype(bf16),
                    preferred_element_type=f32)                     # [H, N, d]
    h1 = h1 + bias1
    h1 = jnp.where(h1 > 0, h1, jnp.exp(h1) - 1.0)                   # ELU(alpha=1)
    # lane-concat heads -> [N, H*d] so conv2 is a single K=256 MXU op
    h1_flat = jnp.concatenate([h1[h] for h in range(heads)], axis=-1)

    # ---------------- GAT conv2 (heads=1, concat=False) ---------------------
    att_dst2 = vec_ref[0:1, 0:hidden]
    att_src2 = vec_ref[1:2, 0:hidden]
    bias2 = vec_ref[2:3, 0:hidden]
    xp2 = jnp.dot(h1_flat.astype(bf16), w2_ref[...].astype(bf16),
                  preferred_element_type=f32)                       # [N, d]
    a_dst2 = jnp.sum(xp2 * att_dst2, axis=-1, keepdims=True)        # [N, 1]
    a_src2 = jnp.einsum('od,nd->on', att_src2.astype(bf16), xp2.astype(bf16),
                        preferred_element_type=f32)                 # [1, N]
    e2 = a_dst2 + a_src2
    e2 = jnp.where(e2 > 0, e2, NEG_SLOPE * e2)
    e2 = e2 + adjb_ref[...]
    e2 = e2 - jnp.max(e2, axis=-1, keepdims=True)
    p2 = jnp.exp(e2)
    alpha2 = p2 * pl.reciprocal(jnp.sum(p2, axis=-1, keepdims=True), approx=True)
    h2 = jnp.dot(alpha2.astype(bf16), xp2.astype(bf16),
                 preferred_element_type=f32) + bias2                # [N, d]

    # ---------------- pack nodes -> time-major padded sequences -------------
    seq = jnp.dot(sel_ref[...].astype(bf16), h2.astype(bf16),
                  preferred_element_type=f32)                       # [T*B, d]
    mask = mask_ref[...]                                            # [T*B, 1]

    # ---------------- stacked GRU; masked update == packed-sequence h_n -----
    layer_in = seq
    h = jnp.zeros((batch_size, hidden), f32)
    for layer in range(num_layers):
        base = layer * GRU_ROWS
        wih = gru_ref[base:base + hidden, 0:h3]                     # [d, 3d]
        whh = gru_ref[base + hidden:base + 2 * hidden, 0:h3]        # [d, 3d]
        b_comb = gru_ref[base + 2 * hidden:base + 2 * hidden + 1, 0:h3]        # [1, 3d]
        bhn = gru_ref[base + 2 * hidden + 1:base + 2 * hidden + 2, 0:hidden]   # [1, d]

        # hoisted input projection: one matmul for the whole sequence
        # (b_hr / b_hz are pre-folded into b_comb at parameter-prep time)
        gx_all = jnp.dot(layer_in.astype(bf16), wih.astype(bf16),
                         preferred_element_type=f32) + b_comb       # [T*B, 3d]
        whh_b = whh.astype(bf16)
        h = jnp.zeros((batch_size, hidden), f32)
        outs = []
        for t in range(seq_len):              # fully unrolled, static slices
            lo = t * batch_size
            gx = gx_all[lo:lo + batch_size, :]
            gh = jnp.dot(h.astype(bf16), whh_b,
                         preferred_element_type=f32)                # [B, 3d]
            rz = jax.nn.sigmoid(gx[:, :2 * hidden] + gh[:, :2 * hidden])
            r = rz[:, :hidden]
            z = rz[:, hidden:]
            c = jnp.tanh(gx[:, 2 * hidden:] + r * (gh[:, 2 * hidden:] + bhn))
            h_new = (1.0 - z) * c + z * h
            m = mask[lo:lo + batch_size, :]                  # [B, 1] validity
            h = m * h_new + (1.0 - m) * h                    # freeze past length
            if layer + 1 < num_layers:
                outs.append(m * h_new)                       # next layer's input
        if layer + 1 < num_layers:
            layer_in = jnp.concatenate(outs, axis=0)                # [T*B, d]

    # ---------------- predictor: single lane-dense (128-wide) store ---------
    pred_b = vec_ref[3:4, :]                                        # [1, 128]
    pred_w = vec_ref[4:4 + hidden, :]                               # [d, 128]
    out_ref[...] = (jnp.dot(h.astype(bf16), pred_w.astype(bf16),
                            preferred_element_type=f32) + pred_b)


# ---------------------------------------------------------------------------
# Jitted wrapper (glue is XLA, one pallas_call; batch_size/max_len static)
# ---------------------------------------------------------------------------
@functools.partial(jax.jit, static_argnames=("batch_size", "max_len"))
def gat_with_gru_forward(params, x_ids, edge_src, edge_dst, batch,
                         batch_size, max_len):
    n = x_ids.shape[0]
    bpad = max(8, ((batch_size + 7) // 8) * 8)   # sublane-pad the session batch

    # embedding lookup (padding_idx=0 row is zero); dropout -> identity (eval)
    feats = params["embedding"][x_ids]                                 # [N, d]

    # dense adjacency adj[dst, src] with self-loops, folded into an additive
    # softmax bias (0 where an edge exists, -1e9 elsewhere)
    # TODO(synk): duplicate (src,dst) edges collapse to a single entry; a true
    # multigraph would weight them twice in PyG's edge-list softmax.
    adj = jnp.zeros((n, n), jnp.float32)
    adj = adj.at[edge_dst, edge_src].set(1.0)
    adj = adj.at[jnp.arange(n), jnp.arange(n)].set(1.0)
    adj_bias = (adj - 1.0) * 1e9                                       # [N, N]

    # per-session lengths / positions (nodes of a session are contiguous)
    lengths = jnp.bincount(batch, length=bpad)                         # [Bp]
    offsets = jnp.concatenate([jnp.zeros((1,), lengths.dtype),
                               jnp.cumsum(lengths)[:-1]])
    pos = jnp.arange(n) - offsets[batch]

    # selection matrix for node -> (time-major) padded sequence packing and a
    # tiny per-step validity mask
    b_ids = jnp.arange(bpad)
    t_ids = jnp.arange(max_len)
    sel = ((batch[None, None, :] == b_ids[None, :, None]) &
           (pos[None, None, :] == t_ids[:, None, None]))
    sel = sel.astype(jnp.float32).reshape(max_len * bpad, n)           # [T*Bp, N]
    step_mask = (t_ids[:, None] < lengths[None, :]).astype(jnp.float32)
    step_mask = step_mask.reshape(max_len * bpad, 1)                   # [T*Bp, 1]

    kernel = functools.partial(
        _fused_forward_kernel, heads=HEADS, hidden=HIDDEN,
        seq_len=max_len, batch_size=bpad, num_layers=STEPS)

    # NOTE: for large N the [H,N,N] attention intermediates should be blocked
    # over dst-row tiles via a grid (esp. v7x 64 MiB VMEM); unnecessary here.
    scores_pad = pl.pallas_call(
        kernel,
        out_shape=jax.ShapeDtypeStruct((bpad, PRED_PAD), jnp.float32),
    )(feats, adj_bias, sel, step_mask,
      params["conv1_slab"], params["w2"], params["vec_slab"], params["gru_slab"])
    return scores_pad[:batch_size, :N_NODE]


# ---------------------------------------------------------------------------
# Parameters: raw (PyTorch-shaped) + one-time kernel-ready preparation
# ---------------------------------------------------------------------------
def init_params(key):
    ks = jax.random.split(key, 20)

    def nrm(k, shape, scale=0.1):
        return scale * jax.random.normal(k, shape, dtype=jnp.float32)

    emb = nrm(ks[0], (N_NODE + 1, HIDDEN))
    emb = emb.at[0].set(0.0)  # padding_idx=0

    return {
        "embedding": emb,
        # GATConv(hidden, hidden, heads=8): lin weight (right-mult layout),
        # att_src/att_dst [heads, out], bias [heads*out]
        "w1": nrm(ks[1], (HIDDEN, HEADS * HIDDEN)),
        "att_src1": nrm(ks[2], (HEADS, HIDDEN)),
        "att_dst1": nrm(ks[3], (HEADS, HIDDEN)),
        "bias1": nrm(ks[4], (HEADS * HIDDEN,)),
        # GATConv(8*hidden, hidden, heads=1, concat=False)
        "w2": nrm(ks[5], (HEADS * HIDDEN, HIDDEN)),
        "att_src2": nrm(ks[6], (1, HIDDEN)),
        "att_dst2": nrm(ks[7], (1, HIDDEN)),
        "bias2": nrm(ks[8], (HIDDEN,)),
        # GRU(hidden, hidden, num_layers=STEPS), gate order r, z, n
        "gru_wih": [nrm(ks[9 + l], (3 * HIDDEN, HIDDEN)) for l in range(STEPS)],
        "gru_whh": [nrm(ks[11 + l], (3 * HIDDEN, HIDDEN)) for l in range(STEPS)],
        "gru_bih": [nrm(ks[13 + l], (3 * HIDDEN,)) for l in range(STEPS)],
        "gru_bhh": [nrm(ks[15 + l], (3 * HIDDEN,)) for l in range(STEPS)],
        # Linear(hidden, n_node)
        "pred_w": nrm(ks[17], (N_NODE, HIDDEN)),
        "pred_b": nrm(ks[18], (N_NODE,)),
    }


def prepare_params(raw):
    """One-time layout prep: consolidated, lane-padded parameter slabs."""
    hh = HEADS * HIDDEN
    p = {"embedding": raw["embedding"]}

    # conv1 slab [d + 3*H, H*d]: w1 | att_dst (head-major) | att_src | bias
    conv1 = jnp.zeros((HIDDEN + 3 * HEADS, hh), jnp.float32)
    conv1 = conv1.at[:HIDDEN, :].set(raw["w1"])
    conv1 = conv1.at[HIDDEN:HIDDEN + HEADS, :HIDDEN].set(raw["att_dst1"])
    conv1 = conv1.at[HIDDEN + HEADS:HIDDEN + 2 * HEADS, :HIDDEN].set(raw["att_src1"])
    conv1 = conv1.at[HIDDEN + 2 * HEADS:HIDDEN + 3 * HEADS, :HIDDEN].set(
        raw["bias1"].reshape(HEADS, HIDDEN))
    p["conv1_slab"] = conv1

    # conv2 weight is already a single lane/sublane-friendly [H*d, d] array
    p["w2"] = raw["w2"]

    # vec slab [4 + d, 128]: att_dst2 | att_src2 | bias2 | pred_b | pred_w.T
    vec = jnp.zeros((4 + HIDDEN, PRED_PAD), jnp.float32)
    vec = vec.at[0, :HIDDEN].set(raw["att_dst2"].reshape(-1))
    vec = vec.at[1, :HIDDEN].set(raw["att_src2"].reshape(-1))
    vec = vec.at[2, :HIDDEN].set(raw["bias2"])
    vec = vec.at[3, :N_NODE].set(raw["pred_b"])
    vec = vec.at[4:4 + HIDDEN, :N_NODE].set(raw["pred_w"].T)
    p["vec_slab"] = vec

    # GRU slab [layers*(2d+2), 128]: wih.T | whh.T | (bih + [bhr,bhz,0]) | bhn
    gru = jnp.zeros((STEPS * GRU_ROWS, 128), jnp.float32)
    for l in range(STEPS):
        base = l * GRU_ROWS
        bih, bhh = raw["gru_bih"][l], raw["gru_bhh"][l]
        b_comb = bih.at[:2 * HIDDEN].add(bhh[:2 * HIDDEN])   # fold r/z hidden bias
        gru = gru.at[base:base + HIDDEN, :3 * HIDDEN].set(raw["gru_wih"][l].T)
        gru = gru.at[base + HIDDEN:base + 2 * HIDDEN, :3 * HIDDEN].set(
            raw["gru_whh"][l].T)
        gru = gru.at[base + 2 * HIDDEN, :3 * HIDDEN].set(b_comb)
        gru = gru.at[base + 2 * HIDDEN + 1, :HIDDEN].set(bhh[2 * HIDDEN:])
    p["gru_slab"] = gru
    return p


# ---------------------------------------------------------------------------
# Pure-JAX reference (same math, no Pallas) for a correctness check
# ---------------------------------------------------------------------------
def _reference_forward(raw, x_ids, edge_src, edge_dst, batch, batch_size, max_len):
    n = x_ids.shape[0]
    x = raw["embedding"][x_ids]
    adj = jnp.zeros((n, n), jnp.float32).at[edge_dst, edge_src].set(1.0)
    adj = adj.at[jnp.arange(n), jnp.arange(n)].set(1.0)

    def gat(xin, w, att_s, att_d, bias, heads, concat):
        xp = xin @ w                                    # [N, heads*out]
        xp_h = xp.reshape(n, heads, HIDDEN)
        a_s = jnp.einsum('nhd,hd->nh', xp_h, att_s)
        a_d = jnp.einsum('nhd,hd->nh', xp_h, att_d)
        e = a_d[:, None, :] + a_s[None, :, :]           # [dst, src, head]
        e = jnp.where(e > 0, e, NEG_SLOPE * e)
        e = jnp.where(adj[:, :, None] > 0, e, -1e9)
        e = e - e.max(axis=1, keepdims=True)
        p = jnp.where(adj[:, :, None] > 0, jnp.exp(e), 0.0)
        alpha = p / p.sum(axis=1, keepdims=True)
        out = jnp.einsum('ijh,jhd->ihd', alpha, xp_h)
        if concat:
            return out.reshape(n, heads * HIDDEN) + bias
        return out.mean(axis=1) + bias

    h = gat(x, raw["w1"], raw["att_src1"], raw["att_dst1"], raw["bias1"], HEADS, True)
    h = jnp.where(h > 0, h, jnp.exp(h) - 1.0)           # ELU
    h = gat(h, raw["w2"], raw["att_src2"], raw["att_dst2"], raw["bias2"], 1, False)

    lengths = jnp.bincount(batch, length=batch_size)
    offsets = jnp.concatenate([jnp.zeros((1,), lengths.dtype),
                               jnp.cumsum(lengths)[:-1]])
    pos = jnp.arange(n) - offsets[batch]
    seq = jnp.zeros((batch_size, max_len, HIDDEN), jnp.float32).at[batch, pos].set(h)

    layer_in = seq
    hh = jnp.zeros((batch_size, HIDDEN), jnp.float32)
    for l in range(STEPS):
        wih, whh = raw["gru_wih"][l], raw["gru_whh"][l]
        bih, bhh = raw["gru_bih"][l], raw["gru_bhh"][l]
        hh = jnp.zeros((batch_size, HIDDEN), jnp.float32)
        outs = []
        for t in range(max_len):
            xt = layer_in[:, t, :]
            gx = xt @ wih.T + bih
            gh = hh @ whh.T + bhh
            r = jax.nn.sigmoid(gx[:, :HIDDEN] + gh[:, :HIDDEN])
            z = jax.nn.sigmoid(gx[:, HIDDEN:2 * HIDDEN] + gh[:, HIDDEN:2 * HIDDEN])
            c = jnp.tanh(gx[:, 2 * HIDDEN:] + r * gh[:, 2 * HIDDEN:])
            h_new = (1.0 - z) * c + z * hh
            m = (t < lengths).astype(jnp.float32)[:, None]
            hh = m * h_new + (1.0 - m) * hh
            outs.append(m * h_new)
        layer_in = jnp.stack(outs, axis=1)
    return hh @ raw["pred_w"].T + raw["pred_b"]


# ---------------------------------------------------------------------------
if __name__ == "__main__":
    key = jax.random.PRNGKey(0)
    raw = init_params(key)
    params = prepare_params(raw)

    # small synthetic session graph: 2 sessions with 5 and 3 nodes (N = 8)
    x_ids = jnp.array([3, 7, 1, 9, 4, 2, 8, 5], dtype=jnp.int32)   # ids in [1, N_NODE]
    batch = jnp.array([0, 0, 0, 0, 0, 1, 1, 1], dtype=jnp.int32)
    edge_src = jnp.array([0, 1, 2, 3, 1, 2, 5, 6, 6], dtype=jnp.int32)
    edge_dst = jnp.array([1, 2, 3, 4, 0, 1, 6, 7, 5], dtype=jnp.int32)

    BATCH = 2
    MAX_LEN = 8   # static pad length (>= longest session); padded steps are masked

    # TODO(synk): training-mode dropout (features + attention coefficients) is
    # identity here (eval mode); stochastic dropout is not implemented.
    scores = gat_with_gru_forward(params, x_ids, edge_src, edge_dst, batch,
                                  batch_size=BATCH, max_len=MAX_LEN)
    scores = jax.block_until_ready(scores)

    assert scores.shape == (BATCH, N_NODE), scores.shape
    assert bool(jnp.all(jnp.isfinite(scores)))

    ref = _reference_forward(raw, x_ids, edge_src, edge_dst, batch, BATCH, MAX_LEN)
    err = float(jnp.max(jnp.abs(scores - ref)))
    # bf16 MXU operands + approx-reciprocal softmax => slightly looser tolerance
    assert err < 3e-2, f"max abs err vs reference: {err}"

    print("KERNEL_OK")
</pallas_src>

<mosaic_0001>
module attributes {stable_mosaic.version = 11 : i64} {
  func.func private @main(%arg0: i32) attributes {dimension_semantics = [#tpu.dimension_semantics<core_parallel>], iteration_bounds = array<i64: 2>, tpu.core_type = #tpu.core_type<sc_scalar_subcore>, window_params = []} {
    return
  }
}

module attributes {stable_mosaic.version = 11 : i64} {
  func.func private @main(%arg0: i32) attributes {dimension_semantics = [#tpu.dimension_semantics<core_parallel>], iteration_bounds = array<i64: 2>, tpu.core_type = #tpu.core_type<sc_scalar_subcore>, window_params = []} {
    return
  }
}

module attributes {stable_mosaic.version = 11 : i64} {
  func.func @_fused_forward_kernel(%arg0: memref<8x32xf32, #tpu.memory_space<vmem>>, %arg1: memref<8x8xf32, #tpu.memory_space<vmem>>, %arg2: memref<64x8xf32, #tpu.memory_space<vmem>>, %arg3: memref<64x1xf32, #tpu.memory_space<vmem>>, %arg4: memref<56x256xf32, #tpu.memory_space<vmem>>, %arg5: memref<256x32xf32, #tpu.memory_space<vmem>>, %arg6: memref<36x128xf32, #tpu.memory_space<vmem>>, %arg7: memref<132x128xf32, #tpu.memory_space<vmem>>, %arg8: memref<8x128xf32, #tpu.memory_space<vmem>>) attributes {dimension_semantics = [], scalar_prefetch = 0 : i64, scratch_operands = 0 : i64, tpu.core_type = #tpu.core_type<tc>} {
    %c0 = arith.constant 0 : index
    %c0_0 = arith.constant 0 : index
    %0 = vector.load %arg0[%c0, %c0_0] : memref<8x32xf32, #tpu.memory_space<vmem>>, vector<8x32xf32>
    %c0_1 = arith.constant 0 : index
    %c0_2 = arith.constant 0 : index
    %1 = vector.load %arg4[%c0_1, %c0_2] : memref<56x256xf32, #tpu.memory_space<vmem>>, vector<32x256xf32>
    %c32 = arith.constant 32 : index
    %c0_3 = arith.constant 0 : index
    %2 = vector.load %arg4[%c32, %c0_3] : memref<56x256xf32, #tpu.memory_space<vmem>>, vector<8x32xf32>
    %3 = vector.shape_cast %2 : vector<8x32xf32> to vector<8x1x32xf32>
    %c40 = arith.constant 40 : index
    %c0_4 = arith.constant 0 : index
    %4 = vector.load %arg4[%c40, %c0_4] : memref<56x256xf32, #tpu.memory_space<vmem>>, vector<8x32xf32>
    %5 = vector.shape_cast %4 : vector<8x32xf32> to vector<8x1x32xf32>
    %c48 = arith.constant 48 : index
    %c0_5 = arith.constant 0 : index
    %6 = vector.load %arg4[%c48, %c0_5] : memref<56x256xf32, #tpu.memory_space<vmem>>, vector<8x32xf32>
    %7 = vector.shape_cast %6 : vector<8x32xf32> to vector<8x1x32xf32>
    %8 = arith.truncf %0 : vector<8x32xf32> to vector<8x32xbf16>
    %9 = arith.truncf %1 : vector<32x256xf32> to vector<32x256xbf16>
    %cst = arith.constant dense<0.000000e+00> : vector<8x256xf32>
    %10 = tpu.matmul %8, %9, %cst {dimension_numbers = #tpu.dot_dimension_numbers<[1], [0], [0], [1], [0, 0, 1, 1], [], []>} : vector<8x32xbf16>, vector<32x256xbf16>, vector<8x256xf32> -> vector<8x256xf32>
    %11 = vector.extract_strided_slice %10 {offsets = [0, 0], sizes = [8, 32], strides = [1, 1]} : vector<8x256xf32> to vector<8x32xf32>
    %12 = vector.extract_strided_slice %10 {offsets = [0, 32], sizes = [8, 32], strides = [1, 1]} : vector<8x256xf32> to vector<8x32xf32>
    %13 = vector.extract_strided_slice %10 {offsets = [0, 64], sizes = [8, 32], strides = [1, 1]} : vector<8x256xf32> to vector<8x32xf32>
    %14 = vector.extract_strided_slice %10 {offsets = [0, 96], sizes = [8, 32], strides = [1, 1]} : vector<8x256xf32> to vector<8x32xf32>
    %15 = vector.extract_strided_slice %10 {offsets = [0, 128], sizes = [8, 32], strides = [1, 1]} : vector<8x256xf32> to vector<8x32xf32>
    %16 = vector.extract_strided_slice %10 {offsets = [0, 160], sizes = [8, 32], strides = [1, 1]} : vector<8x256xf32> to vector<8x32xf32>
    %17 = vector.extract_strided_slice %10 {offsets = [0, 192], sizes = [8, 32], strides = [1, 1]} : vector<8x256xf32> to vector<8x32xf32>
    %18 = vector.extract_strided_slice %10 {offsets = [0, 224], sizes = [8, 32], strides = [1, 1]} : vector<8x256xf32> to vector<8x32xf32>
    %19 = vector.shape_cast %11 : vector<8x32xf32> to vector<1x8x32xf32>
    %20 = vector.shape_cast %12 : vector<8x32xf32> to vector<1x8x32xf32>
    %21 = vector.shape_cast %13 : vector<8x32xf32> to vector<1x8x32xf32>
    %22 = vector.shape_cast %14 : vector<8x32xf32> to vector<1x8x32xf32>
    %23 = vector.shape_cast %15 : vector<8x32xf32> to vector<1x8x32xf32>
    %24 = vector.shape_cast %16 : vector<8x32xf32> to vector<1x8x32xf32>
    %25 = vector.shape_cast %17 : vector<8x32xf32> to vector<1x8x32xf32>
    %26 = vector.shape_cast %18 : vector<8x32xf32> to vector<1x8x32xf32>
    %27 = tpu.concatenate %19, %20, %21, %22, %23, %24, %25, %26 in 0 : vector<1x8x32xf32>, vector<1x8x32xf32>, vector<1x8x32xf32>, vector<1x8x32xf32>, vector<1x8x32xf32>, vector<1x8x32xf32>, vector<1x8x32xf32>, vector<1x8x32xf32> -> vector<8x8x32xf32>
    %28 = vector.broadcast %3 : vector<8x1x32xf32> to vector<8x8x32xf32>
    %29 = arith.mulf %27, %28 : vector<8x8x32xf32>
    %cst_6 = arith.constant dense<0.000000e+00> : vector<8x8xf32>
    %30 = vector.multi_reduction <add>, %29, %cst_6 [2] : vector<8x8x32xf32> to vector<8x8xf32>
    %31 = vector.shape_cast %30 : vector<8x8xf32> to vector<8x8x1xf32>
    %32 = arith.truncf %5 : vector<8x1x32xf32> to vector<8x1x32xbf16>
    %33 = arith.truncf %27 : vector<8x8x32xf32> to vector<8x8x32xbf16>
    "tpu.trace_start"() <{level = 10 : i32, message = "hod,hnd->hon"}> : () -> ()
    %cst_7 = arith.constant dense<0.000000e+00> : vector<8x1x8xf32>
    %34 = tpu.matmul %32, %33, %cst_7 {dimension_numbers = #tpu.dot_dimension_numbers<[2], [2], [1], [1], [0, 0, 0, 1, 1, 1], [0], [0]>} : vector<8x1x32xbf16>, vector<8x8x32xbf16>, vector<8x1x8xf32> -> vector<8x1x8xf32>
    "tpu.trace_stop"() : () -> ()
    %35 = vector.broadcast %31 : vector<8x8x1xf32> to vector<8x8x8xf32>
    %36 = vector.broadcast %34 : vector<8x1x8xf32> to vector<8x8x8xf32>
    %37 = arith.addf %35, %36 : vector<8x8x8xf32>
    %cst_8 = arith.constant 0.000000e+00 : f32
    %38 = vector.broadcast %cst_8 : f32 to vector<8x8x8xf32>
    %39 = arith.cmpf ogt, %37, %38 : vector<8x8x8xf32>
    %cst_9 = arith.constant 2.000000e-01 : f32
    %40 = vector.broadcast %cst_9 : f32 to vector<8x8x8xf32>
    %41 = arith.mulf %40, %37 : vector<8x8x8xf32>
    %42 = arith.select %39, %37, %41 : vector<8x8x8xi1>, vector<8x8x8xf32>
    %c0_10 = arith.constant 0 : index
    %c0_11 = arith.constant 0 : index
    %43 = vector.load %arg1[%c0_10, %c0_11] : memref<8x8xf32, #tpu.memory_space<vmem>>, vector<8x8xf32>
    %44 = vector.shape_cast %43 : vector<8x8xf32> to vector<1x8x8xf32>
    %45 = vector.broadcast %44 : vector<1x8x8xf32> to vector<8x8x8xf32>
    %46 = arith.addf %42, %45 : vector<8x8x8xf32>
    %cst_12 = arith.constant dense<0xFF800000> : vector<8x8xf32>
    %47 = vector.multi_reduction <maximumf>, %46, %cst_12 [2] : vector<8x8x8xf32> to vector<8x8xf32>
    %48 = vector.shape_cast %47 : vector<8x8xf32> to vector<8x8x1xf32>
    %49 = vector.broadcast %48 : vector<8x8x1xf32> to vector<8x8x8xf32>
    %50 = arith.subf %46, %49 : vector<8x8x8xf32>
    %51 = math.exp %50 : vector<8x8x8xf32>
    %cst_13 = arith.constant dense<0.000000e+00> : vector<8x8xf32>
    %52 = vector.multi_reduction <add>, %51, %cst_13 [2] : vector<8x8x8xf32> to vector<8x8xf32>
    %53 = vector.shape_cast %52 : vector<8x8xf32> to vector<8x8x1xf32>
    %54 = tpu.reciprocal %53 {approx = true} : vector<8x8x1xf32> -> vector<8x8x1xf32>
    %55 = vector.broadcast %54 : vector<8x8x1xf32> to vector<8x8x8xf32>
    %56 = arith.mulf %51, %55 : vector<8x8x8xf32>
    %57 = arith.truncf %56 : vector<8x8x8xf32> to vector<8x8x8xbf16>
    %58 = arith.truncf %27 : vector<8x8x32xf32> to vector<8x8x32xbf16>
    "tpu.trace_start"() <{level = 10 : i32, message = "hij,hjd->hid"}> : () -> ()
    %cst_14 = arith.constant dense<0.000000e+00> : vector<8x8x32xf32>
    %59 = tpu.matmul %57, %58, %cst_14 {dimension_numbers = #tpu.dot_dimension_numbers<[2], [1], [1], [2], [0, 0, 0, 1, 1, 2], [0], [0]>} : vector<8x8x8xbf16>, vector<8x8x32xbf16>, vector<8x8x32xf32> -> vector<8x8x32xf32>
    "tpu.trace_stop"() : () -> ()
    %60 = vector.broadcast %7 : vector<8x1x32xf32> to vector<8x8x32xf32>
    %61 = arith.addf %59, %60 : vector<8x8x32xf32>
    %cst_15 = arith.constant 0.000000e+00 : f32
    %62 = vector.broadcast %cst_15 : f32 to vector<8x8x32xf32>
    %63 = arith.cmpf ogt, %61, %62 : vector<8x8x32xf32>
    %64 = math.exp %61 : vector<8x8x32xf32>
    %cst_16 = arith.constant 1.000000e+00 : f32
    %65 = vector.broadcast %cst_16 : f32 to vector<8x8x32xf32>
    %66 = arith.subf %64, %65 : vector<8x8x32xf32>
    %67 = arith.select %63, %61, %66 : vector<8x8x32xi1>, vector<8x8x32xf32>
    %68 = vector.extract_strided_slice %67 {offsets = [0, 0, 0], sizes = [1, 8, 32], strides = [1, 1, 1]} : vector<8x8x32xf32> to vector<1x8x32xf32>
    %69 = vector.shape_cast %68 : vector<1x8x32xf32> to vector<8x32xf32>
    %70 = vector.extract_strided_slice %67 {offsets = [1, 0, 0], sizes = [1, 8, 32], strides = [1, 1, 1]} : vector<8x8x32xf32> to vector<1x8x32xf32>
    %71 = vector.shape_cast %70 : vector<1x8x32xf32> to vector<8x32xf32>
    %72 = vector.extract_strided_slice %67 {offsets = [2, 0, 0], sizes = [1, 8, 32], strides = [1, 1, 1]} : vector<8x8x32xf32> to vector<1x8x32xf32>
    %73 = vector.shape_cast %72 : vector<1x8x32xf32> to vector<8x32xf32>
    %74 = vector.extract_strided_slice %67 {offsets = [3, 0, 0], sizes = [1, 8, 32], strides = [1, 1, 1]} : vector<8x8x32xf32> to vector<1x8x32xf32>
    %75 = vector.shape_cast %74 : vector<1x8x32xf32> to vector<8x32xf32>
    %76 = vector.extract_strided_slice %67 {offsets = [4, 0, 0], sizes = [1, 8, 32], strides = [1, 1, 1]} : vector<8x8x32xf32> to vector<1x8x32xf32>
    %77 = vector.shape_cast %76 : vector<1x8x32xf32> to vector<8x32xf32>
    %78 = vector.extract_strided_slice %67 {offsets = [5, 0, 0], sizes = [1, 8, 32], strides = [1, 1, 1]} : vector<8x8x32xf32> to vector<1x8x32xf32>
    %79 = vector.shape_cast %78 : vector<1x8x32xf32> to vector<8x32xf32>
    %80 = vector.extract_strided_slice %67 {offsets = [6, 0, 0], sizes = [1, 8, 32], strides = [1, 1, 1]} : vector<8x8x32xf32> to vector<1x8x32xf32>
    %81 = vector.shape_cast %80 : vector<1x8x32xf32> to vector<8x32xf32>
    %82 = vector.extract_strided_slice %67 {offsets = [7, 0, 0], sizes = [1, 8, 32], strides = [1, 1, 1]} : vector<8x8x32xf32> to vector<1x8x32xf32>
    %83 = vector.shape_cast %82 : vector<1x8x32xf32> to vector<8x32xf32>
    %84 = tpu.concatenate %69, %71, %73, %75, %77, %79, %81, %83 in 1 : vector<8x32xf32>, vector<8x32xf32>, vector<8x32xf32>, vector<8x32xf32>, vector<8x32xf32>, vector<8x32xf32>, vector<8x32xf32>, vector<8x32xf32> -> vector<8x256xf32>
    %c0_17 = arith.constant 0 : index
    %c0_18 = arith.constant 0 : index
    %85 = vector.load %arg6[%c0_17, %c0_18] : memref<36x128xf32, #tpu.memory_space<vmem>>, vector<1x32xf32>
    %c1 = arith.constant 1 : index
    %c0_19 = arith.constant 0 : index
    %86 = vector.load %arg6[%c1, %c0_19] : memref<36x128xf32, #tpu.memory_space<vmem>>, vector<1x32xf32>
    %c2 = arith.constant 2 : index
    %c0_20 = arith.constant 0 : index
    %87 = vector.load %arg6[%c2, %c0_20] : memref<36x128xf32, #tpu.memory_space<vmem>>, vector<1x32xf32>
    %88 = arith.truncf %84 : vector<8x256xf32> to vector<8x256xbf16>
    %c0_21 = arith.constant 0 : index
    %c0_22 = arith.constant 0 : index
    %89 = vector.load %arg5[%c0_21, %c0_22] : memref<256x32xf32, #tpu.memory_space<vmem>>, vector<256x32xf32>
    %90 = arith.truncf %89 : vector<256x32xf32> to vector<256x32xbf16>
    %cst_23 = arith.constant dense<0.000000e+00> : vector<8x32xf32>
    %91 = tpu.matmul %88, %90, %cst_23 {dimension_numbers = #tpu.dot_dimension_numbers<[1], [0], [0], [1], [0, 0, 1, 1], [], []>} : vector<8x256xbf16>, vector<256x32xbf16>, vector<8x32xf32> -> vector<8x32xf32>
    %92 = vector.broadcast %85 : vector<1x32xf32> to vector<8x32xf32>
    %93 = arith.mulf %91, %92 : vector<8x32xf32>
    %cst_24 = arith.constant dense<0.000000e+00> : vector<8xf32>
    %94 = vector.multi_reduction <add>, %93, %cst_24 [1] : vector<8x32xf32> to vector<8xf32>
    %95 = vector.shape_cast %94 : vector<8xf32> to vector<8x1xf32>
    %96 = arith.truncf %86 : vector<1x32xf32> to vector<1x32xbf16>
    %97 = arith.truncf %91 : vector<8x32xf32> to vector<8x32xbf16>
    "tpu.trace_start"() <{level = 10 : i32, message = "od,nd->on"}> : () -> ()
    %cst_25 = arith.constant dense<0.000000e+00> : vector<1x8xf32>
    %98 = tpu.matmul %96, %97, %cst_25 {dimension_numbers = #tpu.dot_dimension_numbers<[1], [1], [0], [0], [0, 0, 1, 0], [], []>} : vector<1x32xbf16>, vector<8x32xbf16>, vector<1x8xf32> -> vector<1x8xf32>
    "tpu.trace_stop"() : () -> ()
    %99 = vector.broadcast %95 : vector<8x1xf32> to vector<8x8xf32>
    %100 = vector.broadcast %98 : vector<1x8xf32> to vector<8x8xf32>
    %101 = arith.addf %99, %100 : vector<8x8xf32>
    %cst_26 = arith.constant 0.000000e+00 : f32
    %102 = vector.broadcast %cst_26 : f32 to vector<8x8xf32>
    %103 = arith.cmpf ogt, %101, %102 : vector<8x8xf32>
    %cst_27 = arith.constant 2.000000e-01 : f32
    %104 = vector.broadcast %cst_27 : f32 to vector<8x8xf32>
    %105 = arith.mulf %104, %101 : vector<8x8xf32>
    %106 = arith.select %103, %101, %105 : vector<8x8xi1>, vector<8x8xf32>
    %c0_28 = arith.constant 0 : index
    %c0_29 = arith.constant 0 : index
    %107 = vector.load %arg1[%c0_28, %c0_29] : memref<8x8xf32, #tpu.memory_space<vmem>>, vector<8x8xf32>
    %108 = arith.addf %106, %107 : vector<8x8xf32>
    %cst_30 = arith.constant dense<0xFF800000> : vector<8xf32>
    %109 = vector.multi_reduction <maximumf>, %108, %cst_30 [1] : vector<8x8xf32> to vector<8xf32>
    %110 = vector.shape_cast %109 : vector<8xf32> to vector<8x1xf32>
    %111 = vector.broadcast %110 : vector<8x1xf32> to vector<8x8xf32>
    %112 = arith.subf %108, %111 : vector<8x8xf32>
    %113 = math.exp %112 : vector<8x8xf32>
    %cst_31 = arith.constant dense<0.000000e+00> : vector<8xf32>
    %114 = vector.multi_reduction <add>, %113, %cst_31 [1] : vector<8x8xf32> to vector<8xf32>
    %115 = vector.shape_cast %114 : vector<8xf32> to vector<8x1xf32>
    %116 = tpu.reciprocal %115 {approx = true} : vector<8x1xf32> -> vector<8x1xf32>
    %117 = vector.broadcast %116 : vector<8x1xf32> to vector<8x8xf32>
    %118 = arith.mulf %113, %117 : vector<8x8xf32>
    %119 = arith.truncf %118 : vector<8x8xf32> to vector<8x8xbf16>
    %120 = arith.truncf %91 : vector<8x32xf32> to vector<8x32xbf16>
    %cst_32 = arith.constant dense<0.000000e+00> : vector<8x32xf32>
    %121 = tpu.matmul %119, %120, %cst_32 {dimension_numbers = #tpu.dot_dimension_numbers<[1], [0], [0], [1], [0, 0, 1, 1], [], []>} : vector<8x8xbf16>, vector<8x32xbf16>, vector<8x32xf32> -> vector<8x32xf32>
    %122 = vector.broadcast %87 : vector<1x32xf32> to vector<8x32xf32>
    %123 = arith.addf %121, %122 : vector<8x32xf32>
    %c0_33 = arith.constant 0 : index
    %c0_34 = arith.constant 0 : index
    %124 = vector.load %arg2[%c0_33, %c0_34] : memref<64x8xf32, #tpu.memory_space<vmem>>, vector<64x8xf32>
    %125 = arith.truncf %124 : vector<64x8xf32> to vector<64x8xbf16>
    %126 = arith.truncf %123 : vector<8x32xf32> to vector<8x32xbf16>
    %cst_35 = arith.constant dense<0.000000e+00> : vector<64x32xf32>
    %127 = tpu.matmul %125, %126, %cst_35 {dimension_numbers = #tpu.dot_dimension_numbers<[1], [0], [0], [1], [0, 0, 1, 1], [], []>} : vector<64x8xbf16>, vector<8x32xbf16>, vector<64x32xf32> -> vector<64x32xf32>
    %c0_36 = arith.constant 0 : index
    %c0_37 = arith.constant 0 : index
    %128 = vector.load %arg3[%c0_36, %c0_37] : memref<64x1xf32, #tpu.memory_space<vmem>>, vector<64x1xf32>
    %c0_38 = arith.constant 0 : index
    %c0_39 = arith.constant 0 : index
    %129 = vector.load %arg7[%c0_38, %c0_39] : memref<132x128xf32, #tpu.memory_space<vmem>>, vector<32x96xf32>
    %c32_40 = arith.constant 32 : index
    %c0_41 = arith.constant 0 : index
    %130 = vector.load %arg7[%c32_40, %c0_41] : memref<132x128xf32, #tpu.memory_space<vmem>>, vector<32x96xf32>
    %c64 = arith.constant 64 : index
    %c0_42 = arith.constant 0 : index
    %131 = vector.load %arg7[%c64, %c0_42] : memref<132x128xf32, #tpu.memory_space<vmem>>, vector<1x96xf32>
    %c65 = arith.constant 65 : index
    %c0_43 = arith.constant 0 : index
    %132 = vector.load %arg7[%c65, %c0_43] : memref<132x128xf32, #tpu.memory_space<vmem>>, vector<1x32xf32>
    %133 = arith.truncf %127 : vector<64x32xf32> to vector<64x32xbf16>
    %134 = arith.truncf %129 : vector<32x96xf32> to vector<32x96xbf16>
    %cst_44 = arith.constant dense<0.000000e+00> : vector<64x96xf32>
    %135 = tpu.matmul %133, %134, %cst_44 {dimension_numbers = #tpu.dot_dimension_numbers<[1], [0], [0], [1], [0, 0, 1, 1], [], []>} : vector<64x32xbf16>, vector<32x96xbf16>, vector<64x96xf32> -> vector<64x96xf32>
    %136 = vector.broadcast %131 : vector<1x96xf32> to vector<64x96xf32>
    %137 = arith.addf %135, %136 : vector<64x96xf32>
    %138 = arith.truncf %130 : vector<32x96xf32> to vector<32x96xbf16>
    %cst_45 = arith.constant 0.000000e+00 : f32
    %139 = vector.broadcast %cst_45 : f32 to vector<8x32xf32>
    %140 = vector.extract_strided_slice %137 {offsets = [0, 0], sizes = [8, 96], strides = [1, 1]} : vector<64x96xf32> to vector<8x96xf32>
    %141 = arith.truncf %139 : vector<8x32xf32> to vector<8x32xbf16>
    %cst_46 = arith.constant dense<0.000000e+00> : vector<8x96xf32>
    %142 = tpu.matmul %141, %138, %cst_46 {dimension_numbers = #tpu.dot_dimension_numbers<[1], [0], [0], [1], [0, 0, 1, 1], [], []>} : vector<8x32xbf16>, vector<32x96xbf16>, vector<8x96xf32> -> vector<8x96xf32>
    %143 = vector.extract_strided_slice %140 {offsets = [0, 0], sizes = [8, 64], strides = [1, 1]} : vector<8x96xf32> to vector<8x64xf32>
    %144 = vector.extract_strided_slice %142 {offsets = [0, 0], sizes = [8, 64], strides = [1, 1]} : vector<8x96xf32> to vector<8x64xf32>
    %145 = arith.addf %143, %144 : vector<8x64xf32>
    %146 = arith.negf %145 : vector<8x64xf32>
    %147 = math.exp %146 : vector<8x64xf32>
    %cst_47 = arith.constant 1.000000e+00 : f32
    %148 = vector.broadcast %cst_47 : f32 to vector<8x64xf32>
    %149 = arith.addf %148, %147 : vector<8x64xf32>
    %150 = arith.divf %148, %149 : vector<8x64xf32>
    %151 = vector.extract_strided_slice %150 {offsets = [0, 0], sizes = [8, 32], strides = [1, 1]} : vector<8x64xf32> to vector<8x32xf32>
    %152 = vector.extract_strided_slice %150 {offsets = [0, 32], sizes = [8, 32], strides = [1, 1]} : vector<8x64xf32> to vector<8x32xf32>
    %153 = vector.extract_strided_slice %140 {offsets = [0, 64], sizes = [8, 32], strides = [1, 1]} : vector<8x96xf32> to vector<8x32xf32>
    %154 = vector.extract_strided_slice %142 {offsets = [0, 64], sizes = [8, 32], strides = [1, 1]} : vector<8x96xf32> to vector<8x32xf32>
    %155 = vector.broadcast %132 : vector<1x32xf32> to vector<8x32xf32>
    %156 = arith.addf %154, %155 : vector<8x32xf32>
    %157 = arith.mulf %151, %156 : vector<8x32xf32>
    %158 = arith.addf %153, %157 : vector<8x32xf32>
    %159 = math.tanh %158 : vector<8x32xf32>
    %cst_48 = arith.constant 1.000000e+00 : f32
    %160 = vector.broadcast %cst_48 : f32 to vector<8x32xf32>
    %161 = arith.subf %160, %152 : vector<8x32xf32>
    %162 = arith.mulf %161, %159 : vector<8x32xf32>
    %163 = arith.mulf %152, %139 : vector<8x32xf32>
    %164 = arith.addf %162, %163 : vector<8x32xf32>
    %165 = vector.extract_strided_slice %128 {offsets = [0, 0], sizes = [8, 1], strides = [1, 1]} : vector<64x1xf32> to vector<8x1xf32>
    %166 = vector.broadcast %165 : vector<8x1xf32> to vector<8x32xf32>
    %167 = arith.mulf %166, %164 : vector<8x32xf32>
    %cst_49 = arith.constant 1.000000e+00 : f32
    %168 = vector.broadcast %cst_49 : f32 to vector<8x1xf32>
    %169 = arith.subf %168, %165 : vector<8x1xf32>
    %170 = vector.broadcast %169 : vector<8x1xf32> to vector<8x32xf32>
    %171 = arith.mulf %170, %139 : vector<8x32xf32>
    %172 = arith.addf %167, %171 : vector<8x32xf32>
    %173 = vector.broadcast %165 : vector<8x1xf32> to vector<8x32xf32>
    %174 = arith.mulf %173, %164 : vector<8x32xf32>
    %175 = vector.extract_strided_slice %137 {offsets = [8, 0], sizes = [8, 96], strides = [1, 1]} : vector<64x96xf32> to vector<8x96xf32>
    %176 = arith.truncf %172 : vector<8x32xf32> to vector<8x32xbf16>
    %cst_50 = arith.constant dense<0.000000e+00> : vector<8x96xf32>
    %177 = tpu.matmul %176, %138, %cst_50 {dimension_numbers = #tpu.dot_dimension_numbers<[1], [0], [0], [1], [0, 0, 1, 1], [], []>} : vector<8x32xbf16>, vector<32x96xbf16>, vector<8x96xf32> -> vector<8x96xf32>
    %178 = vector.extract_strided_slice %175 {offsets = [0, 0], sizes = [8, 64], strides = [1, 1]} : vector<8x96xf32> to vector<8x64xf32>
    %179 = vector.extract_strided_slice %177 {offsets = [0, 0], sizes = [8, 64], strides = [1, 1]} : vector<8x96xf32> to vector<8x64xf32>
    %180 = arith.addf %178, %179 : vector<8x64xf32>
    %181 = arith.negf %180 : vector<8x64xf32>
    %182 = math.exp %181 : vector<8x64xf32>
    %cst_51 = arith.constant 1.000000e+00 : f32
    %183 = vector.broadcast %cst_51 : f32 to vector<8x64xf32>
    %184 = arith.addf %183, %182 : vector<8x64xf32>
    %185 = arith.divf %183, %184 : vector<8x64xf32>
    %186 = vector.extract_strided_slice %185 {offsets = [0, 0], sizes = [8, 32], strides = [1, 1]} : vector<8x64xf32> to vector<8x32xf32>
    %187 = vector.extract_strided_slice %185 {offsets = [0, 32], sizes = [8, 32], strides = [1, 1]} : vector<8x64xf32> to vector<8x32xf32>
    %188 = vector.extract_strided_slice %175 {offsets = [0, 64], sizes = [8, 32], strides = [1, 1]} : vector<8x96xf32> to vector<8x32xf32>
    %189 = vector.extract_strided_slice %177 {offsets = [0, 64], sizes = [8, 32], strides = [1, 1]} : vector<8x96xf32> to vector<8x32xf32>
    %190 = vector.broadcast %132 : vector<1x32xf32> to vector<8x32xf32>
    %191 = arith.addf %189, %190 : vector<8x32xf32>
    %192 = arith.mulf %186, %191 : vector<8x32xf32>
    %193 = arith.addf %188, %192 : vector<8x32xf32>
    %194 = math.tanh %193 : vector<8x32xf32>
    %cst_52 = arith.constant 1.000000e+00 : f32
    %195 = vector.broadcast %cst_52 : f32 to vector<8x32xf32>
    %196 = arith.subf %195, %187 : vector<8x32xf32>
    %197 = arith.mulf %196, %194 : vector<8x32xf32>
    %198 = arith.mulf %187, %172 : vector<8x32xf32>
    %199 = arith.addf %197, %198 : vector<8x32xf32>
    %200 = vector.extract_strided_slice %128 {offsets = [8, 0], sizes = [8, 1], strides = [1, 1]} : vector<64x1xf32> to vector<8x1xf32>
    %201 = vector.broadcast %200 : vector<8x1xf32> to vector<8x32xf32>
    %202 = arith.mulf %201, %199 : vector<8x32xf32>
    %cst_53 = arith.constant 1.000000e+00 : f32
    %203 = vector.broadcast %cst_53 : f32 to vector<8x1xf32>
    %204 = arith.subf %203, %200 : vector<8x1xf32>
    %205 = vector.broadcast %204 : vector<8x1xf32> to vector<8x32xf32>
    %206 = arith.mulf %205, %172 : vector<8x32xf32>
    %207 = arith.addf %202, %206 : vector<8x32xf32>
    %208 = vector.broadcast %200 : vector<8x1xf32> to vector<8x32xf32>
    %209 = arith.mulf %208, %199 : vector<8x32xf32>
    %210 = vector.extract_strided_slice %137 {offsets = [16, 0], sizes = [8, 96], strides = [1, 1]} : vector<64x96xf32> to vector<8x96xf32>
    %211 = arith.truncf %207 : vector<8x32xf32> to vector<8x32xbf16>
    %cst_54 = arith.constant dense<0.000000e+00> : vector<8x96xf32>
    %212 = tpu.matmul %211, %138, %cst_54 {dimension_numbers = #tpu.dot_dimension_numbers<[1], [0], [0], [1], [0, 0, 1, 1], [], []>} : vector<8x32xbf16>, vector<32x96xbf16>, vector<8x96xf32> -> vector<8x96xf32>
    %213 = vector.extract_strided_slice %210 {offsets = [0, 0], sizes = [8, 64], strides = [1, 1]} : vector<8x96xf32> to vector<8x64xf32>
    %214 = vector.extract_strided_slice %212 {offsets = [0, 0], sizes = [8, 64], strides = [1, 1]} : vector<8x96xf32> to vector<8x64xf32>
    %215 = arith.addf %213, %214 : vector<8x64xf32>
    %216 = arith.negf %215 : vector<8x64xf32>
    %217 = math.exp %216 : vector<8x64xf32>
    %cst_55 = arith.constant 1.000000e+00 : f32
    %218 = vector.broadcast %cst_55 : f32 to vector<8x64xf32>
    %219 = arith.addf %218, %217 : vector<8x64xf32>
    %220 = arith.divf %218, %219 : vector<8x64xf32>
    %221 = vector.extract_strided_slice %220 {offsets = [0, 0], sizes = [8, 32], strides = [1, 1]} : vector<8x64xf32> to vector<8x32xf32>
    %222 = vector.extract_strided_slice %220 {offsets = [0, 32], sizes = [8, 32], strides = [1, 1]} : vector<8x64xf32> to vector<8x32xf32>
    %223 = vector.extract_strided_slice %210 {offsets = [0, 64], sizes = [8, 32], strides = [1, 1]} : vector<8x96xf32> to vector<8x32xf32>
    %224 = vector.extract_strided_slice %212 {offsets = [0, 64], sizes = [8, 32], strides = [1, 1]} : vector<8x96xf32> to vector<8x32xf32>
    %225 = vector.broadcast %132 : vector<1x32xf32> to vector<8x32xf32>
    %226 = arith.addf %224, %225 : vector<8x32xf32>
    %227 = arith.mulf %221, %226 : vector<8x32xf32>
    %228 = arith.addf %223, %227 : vector<8x32xf32>
    %229 = math.tanh %228 : vector<8x32xf32>
    %cst_56 = arith.constant 1.000000e+00 : f32
    %230 = vector.broadcast %cst_56 : f32 to vector<8x32xf32>
    %231 = arith.subf %230, %222 : vector<8x32xf32>
    %232 = arith.mulf %231, %229 : vector<8x32xf32>
    %233 = arith.mulf %222, %207 : vector<8x32xf32>
    %234 = arith.addf %232, %233 : vector<8x32xf32>
    %235 = vector.extract_strided_slice %128 {offsets = [16, 0], sizes = [8, 1], strides = [1, 1]} : vector<64x1xf32> to vector<8x1xf32>
    %236 = vector.broadcast %235 : vector<8x1xf32> to vector<8x32xf32>
    %237 = arith.mulf %236, %234 : vector<8x32xf32>
    %cst_57 = arith.constant 1.000000e+00 : f32
    %238 = vector.broadcast %cst_57 : f32 to vector<8x1xf32>
    %239 = arith.subf %238, %235 : vector<8x1xf32>
    %240 = vector.broadcast %239 : vector<8x1xf32> to vector<8x32xf32>
    %241 = arith.mulf %240, %207 : vector<8x32xf32>
    %242 = arith.addf %237, %241 : vector<8x32xf32>
    %243 = vector.broadcast %235 : vector<8x1xf32> to vector<8x32xf32>
    %244 = arith.mulf %243, %234 : vector<8x32xf32>
    %245 = vector.extract_strided_slice %137 {offsets = [24, 0], sizes = [8, 96], strides = [1, 1]} : vector<64x96xf32> to vector<8x96xf32>
    %246 = arith.truncf %242 : vector<8x32xf32> to vector<8x32xbf16>
    %cst_58 = arith.constant dense<0.000000e+00> : vector<8x96xf32>
    %247 = tpu.matmul %246, %138, %cst_58 {dimension_numbers = #tpu.dot_dimension_numbers<[1], [0], [0], [1], [0, 0, 1, 1], [], []>} : vector<8x32xbf16>, vector<32x96xbf16>, vector<8x96xf32> -> vector<8x96xf32>
    %248 = vector.extract_strided_slice %245 {offsets = [0, 0], sizes = [8, 64], strides = [1, 1]} : vector<8x96xf32> to vector<8x64xf32>
    %249 = vector.extract_strided_slice %247 {offsets = [0, 0], sizes = [8, 64], strides = [1, 1]} : vector<8x96xf32> to vector<8x64xf32>
    %250 = arith.addf %248, %249 : vector<8x64xf32>
    %251 = arith.negf %250 : vector<8x64xf32>
    %252 = math.exp %251 : vector<8x64xf32>
    %cst_59 = arith.constant 1.000000e+00 : f32
    %253 = vector.broadcast %cst_59 : f32 to vector<8x64xf32>
    %254 = arith.addf %253, %252 : vector<8x64xf32>
    %255 = arith.divf %253, %254 : vector<8x64xf32>
    %256 = vector.extract_strided_slice %255 {offsets = [0, 0], sizes = [8, 32], strides = [1, 1]} : vector<8x64xf32> to vector<8x32xf32>
    %257 = vector.extract_strided_slice %255 {offsets = [0, 32], sizes = [8, 32], strides = [1, 1]} : vector<8x64xf32> to vector<8x32xf32>
    %258 = vector.extract_strided_slice %245 {offsets = [0, 64], sizes = [8, 32], strides = [1, 1]} : vector<8x96xf32> to vector<8x32xf32>
    %259 = vector.extract_strided_slice %247 {offsets = [0, 64], sizes = [8, 32], strides = [1, 1]} : vector<8x96xf32> to vector<8x32xf32>
    %260 = vector.broadcast %132 : vector<1x32xf32> to vector<8x32xf32>
    %261 = arith.addf %259, %260 : vector<8x32xf32>
    %262 = arith.mulf %256, %261 : vector<8x32xf32>
    %263 = arith.addf %258, %262 : vector<8x32xf32>
    %264 = math.tanh %263 : vector<8x32xf32>
    %cst_60 = arith.constant 1.000000e+00 : f32
    %265 = vector.broadcast %cst_60 : f32 to vector<8x32xf32>
    %266 = arith.subf %265, %257 : vector<8x32xf32>
    %267 = arith.mulf %266, %264 : vector<8x32xf32>
    %268 = arith.mulf %257, %242 : vector<8x32xf32>
    %269 = arith.addf %267, %268 : vector<8x32xf32>
    %270 = vector.extract_strided_slice %128 {offsets = [24, 0], sizes = [8, 1], strides = [1, 1]} : vector<64x1xf32> to vector<8x1xf32>
    %271 = vector.broadcast %270 : vector<8x1xf32> to vector<8x32xf32>
    %272 = arith.mulf %271, %269 : vector<8x32xf32>
    %cst_61 = arith.constant 1.000000e+00 : f32
    %273 = vector.broadcast %cst_61 : f32 to vector<8x1xf32>
    %274 = arith.subf %273, %270 : vector<8x1xf32>
    %275 = vector.broadcast %274 : vector<8x1xf32> to vector<8x32xf32>
    %276 = arith.mulf %275, %242 : vector<8x32xf32>
    %277 = arith.addf %272, %276 : vector<8x32xf32>
    %278 = vector.broadcast %270 : vector<8x1xf32> to vector<8x32xf32>
    %279 = arith.mulf %278, %269 : vector<8x32xf32>
    %280 = vector.extract_strided_slice %137 {offsets = [32, 0], sizes = [8, 96], strides = [1, 1]} : vector<64x96xf32> to vector<8x96xf32>
    %281 = arith.truncf %277 : vector<8x32xf32> to vector<8x32xbf16>
    %cst_62 = arith.constant dense<0.000000e+00> : vector<8x96xf32>
    %282 = tpu.matmul %281, %138, %cst_62 {dimension_numbers = #tpu.dot_dimension_numbers<[1], [0], [0], [1], [0, 0, 1, 1], [], []>} : vector<8x32xbf16>, vector<32x96xbf16>, vector<8x96xf32> -> vector<8x96xf32>
    %283 = vector.extract_strided_slice %280 {offsets = [0, 0], sizes = [8, 64], strides = [1, 1]} : vector<8x96xf32> to vector<8x64xf32>
    %284 = vector.extract_strided_slice %282 {offsets = [0, 0], sizes = [8, 64], strides = [1, 1]} : vector<8x96xf32> to vector<8x64xf32>
    %285 = arith.addf %283, %284 : vector<8x64xf32>
    %286 = arith.negf %285 : vector<8x64xf32>
    %287 = math.exp %286 : vector<8x64xf32>
    %cst_63 = arith.constant 1.000000e+00 : f32
    %288 = vector.broadcast %cst_63 : f32 to vector<8x64xf32>
    %289 = arith.addf %288, %287 : vector<8x64xf32>
    %290 = arith.divf %288, %289 : vector<8x64xf32>
    %291 = vector.extract_strided_slice %290 {offsets = [0, 0], sizes = [8, 32], strides = [1, 1]} : vector<8x64xf32> to vector<8x32xf32>
    %292 = vector.extract_strided_slice %290 {offsets = [0, 32], sizes = [8, 32], strides = [1, 1]} : vector<8x64xf32> to vector<8x32xf32>
    %293 = vector.extract_strided_slice %280 {offsets = [0, 64], sizes = [8, 32], strides = [1, 1]} : vector<8x96xf32> to vector<8x32xf32>
    %294 = vector.extract_strided_slice %282 {offsets = [0, 64], sizes = [8, 32], strides = [1, 1]} : vector<8x96xf32> to vector<8x32xf32>
    %295 = vector.broadcast %132 : vector<1x32xf32> to vector<8x32xf32>
    %296 = arith.addf %294, %295 : vector<8x32xf32>
    %297 = arith.mulf %291, %296 : vector<8x32xf32>
    %298 = arith.addf %293, %297 : vector<8x32xf32>
    %299 = math.tanh %298 : vector<8x32xf32>
    %cst_64 = arith.constant 1.000000e+00 : f32
    %300 = vector.broadcast %cst_64 : f32 to vector<8x32xf32>
    %301 = arith.subf %300, %292 : vector<8x32xf32>
    %302 = arith.mulf %301, %299 : vector<8x32xf32>
    %303 = arith.mulf %292, %277 : vector<8x32xf32>
    %304 = arith.addf %302, %303 : vector<8x32xf32>
    %305 = vector.extract_strided_slice %128 {offsets = [32, 0], sizes = [8, 1], strides = [1, 1]} : vector<64x1xf32> to vector<8x1xf32>
    %306 = vector.broadcast %305 : vector<8x1xf32> to vector<8x32xf32>
    %307 = arith.mulf %306, %304 : vector<8x32xf32>
    %cst_65 = arith.constant 1.000000e+00 : f32
    %308 = vector.broadcast %cst_65 : f32 to vector<8x1xf32>
    %309 = arith.subf %308, %305 : vector<8x1xf32>
    %310 = vector.broadcast %309 : vector<8x1xf32> to vector<8x32xf32>
    %311 = arith.mulf %310, %277 : vector<8x32xf32>
    %312 = arith.addf %307, %311 : vector<8x32xf32>
    %313 = vector.broadcast %305 : vector<8x1xf32> to vector<8x32xf32>
    %314 = arith.mulf %313, %304 : vector<8x32xf32>
    %315 = vector.extract_strided_slice %137 {offsets = [40, 0], sizes = [8, 96], strides = [1, 1]} : vector<64x96xf32> to vector<8x96xf32>
    %316 = arith.truncf %312 : vector<8x32xf32> to vector<8x32xbf16>
    %cst_66 = arith.constant dense<0.000000e+00> : vector<8x96xf32>
    %317 = tpu.matmul %316, %138, %cst_66 {dimension_numbers = #tpu.dot_dimension_numbers<[1], [0], [0], [1], [0, 0, 1, 1], [], []>} : vector<8x32xbf16>, vector<32x96xbf16>, vector<8x96xf32> -> vector<8x96xf32>
    %318 = vector.extract_strided_slice %315 {offsets = [0, 0], sizes = [8, 64], strides = [1, 1]} : vector<8x96xf32> to vector<8x64xf32>
    %319 = vector.extract_strided_slice %317 {offsets = [0, 0], sizes = [8, 64], strides = [1, 1]} : vector<8x96xf32> to vector<8x64xf32>
    %320 = arith.addf %318, %319 : vector<8x64xf32>
    %321 = arith.negf %320 : vector<8x64xf32>
    %322 = math.exp %321 : vector<8x64xf32>
    %cst_67 = arith.constant 1.000000e+00 : f32
    %323 = vector.broadcast %cst_67 : f32 to vector<8x64xf32>
    %324 = arith.addf %323, %322 : vector<8x64xf32>
    %325 = arith.divf %323, %324 : vector<8x64xf32>
    %326 = vector.extract_strided_slice %325 {offsets = [0, 0], sizes = [8, 32], strides = [1, 1]} : vector<8x64xf32> to vector<8x32xf32>
    %327 = vector.extract_strided_slice %325 {offsets = [0, 32], sizes = [8, 32], strides = [1, 1]} : vector<8x64xf32> to vector<8x32xf32>
    %328 = vector.extract_strided_slice %315 {offsets = [0, 64], sizes = [8, 32], strides = [1, 1]} : vector<8x96xf32> to vector<8x32xf32>
    %329 = vector.extract_strided_slice %317 {offsets = [0, 64], sizes = [8, 32], strides = [1, 1]} : vector<8x96xf32> to vector<8x32xf32>
    %330 = vector.broadcast %132 : vector<1x32xf32> to vector<8x32xf32>
    %331 = arith.addf %329, %330 : vector<8x32xf32>
    %332 = arith.mulf %326, %331 : vector<8x32xf32>
    %333 = arith.addf %328, %332 : vector<8x32xf32>
    %334 = math.tanh %333 : vector<8x32xf32>
    %cst_68 = arith.constant 1.000000e+00 : f32
    %335 = vector.broadcast %cst_68 : f32 to vector<8x32xf32>
    %336 = arith.subf %335, %327 : vector<8x32xf32>
    %337 = arith.mulf %336, %334 : vector<8x32xf32>
    %338 = arith.mulf %327, %312 : vector<8x32xf32>
    %339 = arith.addf %337, %338 : vector<8x32xf32>
    %340 = vector.extract_strided_slice %128 {offsets = [40, 0], sizes = [8, 1], strides = [1, 1]} : vector<64x1xf32> to vector<8x1xf32>
    %341 = vector.broadcast %340 : vector<8x1xf32> to vector<8x32xf32>
    %342 = arith.mulf %341, %339 : vector<8x32xf32>
    %cst_69 = arith.constant 1.000000e+00 : f32
    %343 = vector.broadcast %cst_69 : f32 to vector<8x1xf32>
    %344 = arith.subf %343, %340 : vector<8x1xf32>
    %345 = vector.broadcast %344 : vector<8x1xf32> to vector<8x32xf32>
    %346 = arith.mulf %345, %312 : vector<8x32xf32>
    %347 = arith.addf %342, %346 : vector<8x32xf32>
    %348 = vector.broadcast %340 : vector<8x1xf32> to vector<8x32xf32>
    %349 = arith.mulf %348, %339 : vector<8x32xf32>
    %350 = vector.extract_strided_slice %137 {offsets = [48, 0], sizes = [8, 96], strides = [1, 1]} : vector<64x96xf32> to vector<8x96xf32>
    %351 = arith.truncf %347 : vector<8x32xf32> to vector<8x32xbf16>
    %cst_70 = arith.constant dense<0.000000e+00> : vector<8x96xf32>
    %352 = tpu.matmul %351, %138, %cst_70 {dimension_numbers = #tpu.dot_dimension_numbers<[1], [0], [0], [1], [0, 0, 1, 1], [], []>} : vector<8x32xbf16>, vector<32x96xbf16>, vector<8x96xf32> -> vector<8x96xf32>
    %353 = vector.extract_strided_slice %350 {offsets = [0, 0], sizes = [8, 64], strides = [1, 1]} : vector<8x96xf32> to vector<8x64xf32>
    %354 = vector.extract_strided_slice %352 {offsets = [0, 0], sizes = [8, 64], strides = [1, 1]} : vector<8x96xf32> to vector<8x64xf32>
    %355 = arith.addf %353, %354 : vector<8x64xf32>
    %356 = arith.negf %355 : vector<8x64xf32>
    %357 = math.exp %356 : vector<8x64xf32>
    %cst_71 = arith.constant 1.000000e+00 : f32
    %358 = vector.broadcast %cst_71 : f32 to vector<8x64xf32>
    %359 = arith.addf %358, %357 : vector<8x64xf32>
    %360 = arith.divf %358, %359 : vector<8x64xf32>
    %361 = vector.extract_strided_slice %360 {offsets = [0, 0], sizes = [8, 32], strides = [1, 1]} : vector<8x64xf32> to vector<8x32xf32>
    %362 = vector.extract_strided_slice %360 {offsets = [0, 32], sizes = [8, 32], strides = [1, 1]} : vector<8x64xf32> to vector<8x32xf32>
    %363 = vector.extract_strided_slice %350 {offsets = [0, 64], sizes = [8, 32], strides = [1, 1]} : vector<8x96xf32> to vector<8x32xf32>
    %364 = vector.extract_strided_slice %352 {offsets = [0, 64], sizes = [8, 32], strides = [1, 1]} : vector<8x96xf32> to vector<8x32xf32>
    %365 = vector.broadcast %132 : vector<1x32xf32> to vector<8x32xf32>
    %366 = arith.addf %364, %365 : vector<8x32xf32>
    %367 = arith.mulf %361, %366 : vector<8x32xf32>
    %368 = arith.addf %363, %367 : vector<8x32xf32>
    %369 = math.tanh %368 : vector<8x32xf32>
    %cst_72 = arith.constant 1.000000e+00 : f32
    %370 = vector.broadcast %cst_72 : f32 to vector<8x32xf32>
    %371 = arith.subf %370, %362 : vector<8x32xf32>
    %372 = arith.mulf %371, %369 : vector<8x32xf32>
    %373 = arith.mulf %362, %347 : vector<8x32xf32>
    %374 = arith.addf %372, %373 : vector<8x32xf32>
    %375 = vector.extract_strided_slice %128 {offsets = [48, 0], sizes = [8, 1], strides = [1, 1]} : vector<64x1xf32> to vector<8x1xf32>
    %376 = vector.broadcast %375 : vector<8x1xf32> to vector<8x32xf32>
    %377 = arith.mulf %376, %374 : vector<8x32xf32>
    %cst_73 = arith.constant 1.000000e+00 : f32
    %378 = vector.broadcast %cst_73 : f32 to vector<8x1xf32>
    %379 = arith.subf %378, %375 : vector<8x1xf32>
    %380 = vector.broadcast %379 : vector<8x1xf32> to vector<8x32xf32>
    %381 = arith.mulf %380, %347 : vector<8x32xf32>
    %382 = arith.addf %377, %381 : vector<8x32xf32>
    %383 = vector.broadcast %375 : vector<8x1xf32> to vector<8x32xf32>
    %384 = arith.mulf %383, %374 : vector<8x32xf32>
    %385 = vector.extract_strided_slice %137 {offsets = [56, 0], sizes = [8, 96], strides = [1, 1]} : vector<64x96xf32> to vector<8x96xf32>
    %386 = arith.truncf %382 : vector<8x32xf32> to vector<8x32xbf16>
    %cst_74 = arith.constant dense<0.000000e+00> : vector<8x96xf32>
    %387 = tpu.matmul %386, %138, %cst_74 {dimension_numbers = #tpu.dot_dimension_numbers<[1], [0], [0], [1], [0, 0, 1, 1], [], []>} : vector<8x32xbf16>, vector<32x96xbf16>, vector<8x96xf32> -> vector<8x96xf32>
    %388 = vector.extract_strided_slice %385 {offsets = [0, 0], sizes = [8, 64], strides = [1, 1]} : vector<8x96xf32> to vector<8x64xf32>
    %389 = vector.extract_strided_slice %387 {offsets = [0, 0], sizes = [8, 64], strides = [1, 1]} : vector<8x96xf32> to vector<8x64xf32>
    %390 = arith.addf %388, %389 : vector<8x64xf32>
    %391 = arith.negf %390 : vector<8x64xf32>
    %392 = math.exp %391 : vector<8x64xf32>
    %cst_75 = arith.constant 1.000000e+00 : f32
    %393 = vector.broadcast %cst_75 : f32 to vector<8x64xf32>
    %394 = arith.addf %393, %392 : vector<8x64xf32>
    %395 = arith.divf %393, %394 : vector<8x64xf32>
    %396 = vector.extract_strided_slice %395 {offsets = [0, 0], sizes = [8, 32], strides = [1, 1]} : vector<8x64xf32> to vector<8x32xf32>
    %397 = vector.extract_strided_slice %395 {offsets = [0, 32], sizes = [8, 32], strides = [1, 1]} : vector<8x64xf32> to vector<8x32xf32>
    %398 = vector.extract_strided_slice %385 {offsets = [0, 64], sizes = [8, 32], strides = [1, 1]} : vector<8x96xf32> to vector<8x32xf32>
    %399 = vector.extract_strided_slice %387 {offsets = [0, 64], sizes = [8, 32], strides = [1, 1]} : vector<8x96xf32> to vector<8x32xf32>
    %400 = vector.broadcast %132 : vector<1x32xf32> to vector<8x32xf32>
    %401 = arith.addf %399, %400 : vector<8x32xf32>
    %402 = arith.mulf %396, %401 : vector<8x32xf32>
    %403 = arith.addf %398, %402 : vector<8x32xf32>
    %404 = math.tanh %403 : vector<8x32xf32>
    %cst_76 = arith.constant 1.000000e+00 : f32
    %405 = vector.broadcast %cst_76 : f32 to vector<8x32xf32>
    %406 = arith.subf %405, %397 : vector<8x32xf32>
    %407 = arith.mulf %406, %404 : vector<8x32xf32>
    %408 = arith.mulf %397, %382 : vector<8x32xf32>
    %409 = arith.addf %407, %408 : vector<8x32xf32>
    %410 = vector.extract_strided_slice %128 {offsets = [56, 0], sizes = [8, 1], strides = [1, 1]} : vector<64x1xf32> to vector<8x1xf32>
    %411 = vector.broadcast %410 : vector<8x1xf32> to vector<8x32xf32>
    %412 = arith.mulf %411, %409 : vector<8x32xf32>
    %413 = tpu.concatenate %174, %209, %244, %279, %314, %349, %384, %412 in 0 : vector<8x32xf32>, vector<8x32xf32>, vector<8x32xf32>, vector<8x32xf32>, vector<8x32xf32>, vector<8x32xf32>, vector<8x32xf32>, vector<8x32xf32> -> vector<64x32xf32>
    %c66 = arith.constant 66 : index
    %c0_77 = arith.constant 0 : index
    %414 = vector.load %arg7[%c66, %c0_77] : memref<132x128xf32, #tpu.memory_space<vmem>>, vector<32x96xf32>
    %c98 = arith.constant 98 : index
    %c0_78 = arith.constant 0 : index
    %415 = vector.load %arg7[%c98, %c0_78] : memref<132x128xf32, #tpu.memory_space<vmem>>, vector<32x96xf32>
    %c130 = arith.constant 130 : index
    %c0_79 = arith.constant 0 : index
    %416 = vector.load %arg7[%c130, %c0_79] : memref<132x128xf32, #tpu.memory_space<vmem>>, vector<1x96xf32>
    %c131 = arith.constant 131 : index
    %c0_80 = arith.constant 0 : index
    %417 = vector.load %arg7[%c131, %c0_80] : memref<132x128xf32, #tpu.memory_space<vmem>>, vector<1x32xf32>
    %418 = arith.truncf %413 : vector<64x32xf32> to vector<64x32xbf16>
    %419 = arith.truncf %414 : vector<32x96xf32> to vector<32x96xbf16>
    %cst_81 = arith.constant dense<0.000000e+00> : vector<64x96xf32>
    %420 = tpu.matmul %418, %419, %cst_81 {dimension_numbers = #tpu.dot_dimension_numbers<[1], [0], [0], [1], [0, 0, 1, 1], [], []>} : vector<64x32xbf16>, vector<32x96xbf16>, vector<64x96xf32> -> vector<64x96xf32>
    %421 = vector.broadcast %416 : vector<1x96xf32> to vector<64x96xf32>
    %422 = arith.addf %420, %421 : vector<64x96xf32>
    %423 = arith.truncf %415 : vector<32x96xf32> to vector<32x96xbf16>
    %cst_82 = arith.constant 0.000000e+00 : f32
    %424 = vector.broadcast %cst_82 : f32 to vector<8x32xf32>
    %425 = vector.extract_strided_slice %422 {offsets = [0, 0], sizes = [8, 96], strides = [1, 1]} : vector<64x96xf32> to vector<8x96xf32>
    %426 = arith.truncf %424 : vector<8x32xf32> to vector<8x32xbf16>
    %cst_83 = arith.constant dense<0.000000e+00> : vector<8x96xf32>
    %427 = tpu.matmul %426, %423, %cst_83 {dimension_numbers = #tpu.dot_dimension_numbers<[1], [0], [0], [1], [0, 0, 1, 1], [], []>} : vector<8x32xbf16>, vector<32x96xbf16>, vector<8x96xf32> -> vector<8x96xf32>
    %428 = vector.extract_strided_slice %425 {offsets = [0, 0], sizes = [8, 64], strides = [1, 1]} : vector<8x96xf32> to vector<8x64xf32>
    %429 = vector.extract_strided_slice %427 {offsets = [0, 0], sizes = [8, 64], strides = [1, 1]} : vector<8x96xf32> to vector<8x64xf32>
    %430 = arith.addf %428, %429 : vector<8x64xf32>
    %431 = arith.negf %430 : vector<8x64xf32>
    %432 = math.exp %431 : vector<8x64xf32>
    %cst_84 = arith.constant 1.000000e+00 : f32
    %433 = vector.broadcast %cst_84 : f32 to vector<8x64xf32>
    %434 = arith.addf %433, %432 : vector<8x64xf32>
    %435 = arith.divf %433, %434 : vector<8x64xf32>
    %436 = vector.extract_strided_slice %435 {offsets = [0, 0], sizes = [8, 32], strides = [1, 1]} : vector<8x64xf32> to vector<8x32xf32>
    %437 = vector.extract_strided_slice %435 {offsets = [0, 32], sizes = [8, 32], strides = [1, 1]} : vector<8x64xf32> to vector<8x32xf32>
    %438 = vector.extract_strided_slice %425 {offsets = [0, 64], sizes = [8, 32], strides = [1, 1]} : vector<8x96xf32> to vector<8x32xf32>
    %439 = vector.extract_strided_slice %427 {offsets = [0, 64], sizes = [8, 32], strides = [1, 1]} : vector<8x96xf32> to vector<8x32xf32>
    %440 = vector.broadcast %417 : vector<1x32xf32> to vector<8x32xf32>
    %441 = arith.addf %439, %440 : vector<8x32xf32>
    %442 = arith.mulf %436, %441 : vector<8x32xf32>
    %443 = arith.addf %438, %442 : vector<8x32xf32>
    %444 = math.tanh %443 : vector<8x32xf32>
    %cst_85 = arith.constant 1.000000e+00 : f32
    %445 = vector.broadcast %cst_85 : f32 to vector<8x32xf32>
    %446 = arith.subf %445, %437 : vector<8x32xf32>
    %447 = arith.mulf %446, %444 : vector<8x32xf32>
    %448 = arith.mulf %437, %424 : vector<8x32xf32>
    %449 = arith.addf %447, %448 : vector<8x32xf32>
    %450 = vector.extract_strided_slice %128 {offsets = [0, 0], sizes = [8, 1], strides = [1, 1]} : vector<64x1xf32> to vector<8x1xf32>
    %451 = vector.broadcast %450 : vector<8x1xf32> to vector<8x32xf32>
    %452 = arith.mulf %451, %449 : vector<8x32xf32>
    %cst_86 = arith.constant 1.000000e+00 : f32
    %453 = vector.broadcast %cst_86 : f32 to vector<8x1xf32>
    %454 = arith.subf %453, %450 : vector<8x1xf32>
    %455 = vector.broadcast %454 : vector<8x1xf32> to vector<8x32xf32>
    %456 = arith.mulf %455, %424 : vector<8x32xf32>
    %457 = arith.addf %452, %456 : vector<8x32xf32>
    %458 = vector.extract_strided_slice %422 {offsets = [8, 0], sizes = [8, 96], strides = [1, 1]} : vector<64x96xf32> to vector<8x96xf32>
    %459 = arith.truncf %457 : vector<8x32xf32> to vector<8x32xbf16>
    %cst_87 = arith.constant dense<0.000000e+00> : vector<8x96xf32>
    %460 = tpu.matmul %459, %423, %cst_87 {dimension_numbers = #tpu.dot_dimension_numbers<[1], [0], [0], [1], [0, 0, 1, 1], [], []>} : vector<8x32xbf16>, vector<32x96xbf16>, vector<8x96xf32> -> vector<8x96xf32>
    %461 = vector.extract_strided_slice %458 {offsets = [0, 0], sizes = [8, 64], strides = [1, 1]} : vector<8x96xf32> to vector<8x64xf32>
    %462 = vector.extract_strided_slice %460 {offsets = [0, 0], sizes = [8, 64], strides = [1, 1]} : vector<8x96xf32> to vector<8x64xf32>
    %463 = arith.addf %461, %462 : vector<8x64xf32>
    %464 = arith.negf %463 : vector<8x64xf32>
    %465 = math.exp %464 : vector<8x64xf32>
    %cst_88 = arith.constant 1.000000e+00 : f32
    %466 = vector.broadcast %cst_88 : f32 to vector<8x64xf32>
    %467 = arith.addf %466, %465 : vector<8x64xf32>
    %468 = arith.divf %466, %467 : vector<8x64xf32>
    %469 = vector.extract_strided_slice %468 {offsets = [0, 0], sizes = [8, 32], strides = [1, 1]} : vector<8x64xf32> to vector<8x32xf32>
    %470 = vector.extract_strided_slice %468 {offsets = [0, 32], sizes = [8, 32], strides = [1, 1]} : vector<8x64xf32> to vector<8x32xf32>
    %471 = vector.extract_strided_slice %458 {offsets = [0, 64], sizes = [8, 32], strides = [1, 1]} : vector<8x96xf32> to vector<8x32xf32>
    %472 = vector.extract_strided_slice %460 {offsets = [0, 64], sizes = [8, 32], strides = [1, 1]} : vector<8x96xf32> to vector<8x32xf32>
    %473 = vector.broadcast %417 : vector<1x32xf32> to vector<8x32xf32>
    %474 = arith.addf %472, %473 : vector<8x32xf32>
    %475 = arith.mulf %469, %474 : vector<8x32xf32>
    %476 = arith.addf %471, %475 : vector<8x32xf32>
    %477 = math.tanh %476 : vector<8x32xf32>
    %cst_89 = arith.constant 1.000000e+00 : f32
    %478 = vector.broadcast %cst_89 : f32 to vector<8x32xf32>
    %479 = arith.subf %478, %470 : vector<8x32xf32>
    %480 = arith.mulf %479, %477 : vector<8x32xf32>
    %481 = arith.mulf %470, %457 : vector<8x32xf32>
    %482 = arith.addf %480, %481 : vector<8x32xf32>
    %483 = vector.extract_strided_slice %128 {offsets = [8, 0], sizes = [8, 1], strides = [1, 1]} : vector<64x1xf32> to vector<8x1xf32>
    %484 = vector.broadcast %483 : vector<8x1xf32> to vector<8x32xf32>
    %485 = arith.mulf %484, %482 : vector<8x32xf32>
    %cst_90 = arith.constant 1.000000e+00 : f32
    %486 = vector.broadcast %cst_90 : f32 to vector<8x1xf32>
    %487 = arith.subf %486, %483 : vector<8x1xf32>
    %488 = vector.broadcast %487 : vector<8x1xf32> to vector<8x32xf32>
    %489 = arith.mulf %488, %457 : vector<8x32xf32>
    %490 = arith.addf %485, %489 : vector<8x32xf32>
    %491 = vector.extract_strided_slice %422 {offsets = [16, 0], sizes = [8, 96], strides = [1, 1]} : vector<64x96xf32> to vector<8x96xf32>
    %492 = arith.truncf %490 : vector<8x32xf32> to vector<8x32xbf16>
    %cst_91 = arith.constant dense<0.000000e+00> : vector<8x96xf32>
    %493 = tpu.matmul %492, %423, %cst_91 {dimension_numbers = #tpu.dot_dimension_numbers<[1], [0], [0], [1], [0, 0, 1, 1], [], []>} : vector<8x32xbf16>, vector<32x96xbf16>, vector<8x96xf32> -> vector<8x96xf32>
    %494 = vector.extract_strided_slice %491 {offsets = [0, 0], sizes = [8, 64], strides = [1, 1]} : vector<8x96xf32> to vector<8x64xf32>
    %495 = vector.extract_strided_slice %493 {offsets = [0, 0], sizes = [8, 64], strides = [1, 1]} : vector<8x96xf32> to vector<8x64xf32>
    %496 = arith.addf %494, %495 : vector<8x64xf32>
    %497 = arith.negf %496 : vector<8x64xf32>
    %498 = math.exp %497 : vector<8x64xf32>
    %cst_92 = arith.constant 1.000000e+00 : f32
    %499 = vector.broadcast %cst_92 : f32 to vector<8x64xf32>
    %500 = arith.addf %499, %498 : vector<8x64xf32>
    %501 = arith.divf %499, %500 : vector<8x64xf32>
    %502 = vector.extract_strided_slice %501 {offsets = [0, 0], sizes = [8, 32], strides = [1, 1]} : vector<8x64xf32> to vector<8x32xf32>
    %503 = vector.extract_strided_slice %501 {offsets = [0, 32], sizes = [8, 32], strides = [1, 1]} : vector<8x64xf32> to vector<8x32xf32>
    %504 = vector.extract_strided_slice %491 {offsets = [0, 64], sizes = [8, 32], strides = [1, 1]} : vector<8x96xf32> to vector<8x32xf32>
    %505 = vector.extract_strided_slice %493 {offsets = [0, 64], sizes = [8, 32], strides = [1, 1]} : vector<8x96xf32> to vector<8x32xf32>
    %506 = vector.broadcast %417 : vector<1x32xf32> to vector<8x32xf32>
    %507 = arith.addf %505, %506 : vector<8x32xf32>
    %508 = arith.mulf %502, %507 : vector<8x32xf32>
    %509 = arith.addf %504, %508 : vector<8x32xf32>
    %510 = math.tanh %509 : vector<8x32xf32>
    %cst_93 = arith.constant 1.000000e+00 : f32
    %511 = vector.broadcast %cst_93 : f32 to vector<8x32xf32>
    %512 = arith.subf %511, %503 : vector<8x32xf32>
    %513 = arith.mulf %512, %510 : vector<8x32xf32>
    %514 = arith.mulf %503, %490 : vector<8x32xf32>
    %515 = arith.addf %513, %514 : vector<8x32xf32>
    %516 = vector.extract_strided_slice %128 {offsets = [16, 0], sizes = [8, 1], strides = [1, 1]} : vector<64x1xf32> to vector<8x1xf32>
    %517 = vector.broadcast %516 : vector<8x1xf32> to vector<8x32xf32>
    %518 = arith.mulf %517, %515 : vector<8x32xf32>
    %cst_94 = arith.constant 1.000000e+00 : f32
    %519 = vector.broadcast %cst_94 : f32 to vector<8x1xf32>
    %520 = arith.subf %519, %516 : vector<8x1xf32>
    %521 = vector.broadcast %520 : vector<8x1xf32> to vector<8x32xf32>
    %522 = arith.mulf %521, %490 : vector<8x32xf32>
    %523 = arith.addf %518, %522 : vector<8x32xf32>
    %524 = vector.extract_strided_slice %422 {offsets = [24, 0], sizes = [8, 96], strides = [1, 1]} : vector<64x96xf32> to vector<8x96xf32>
    %525 = arith.truncf %523 : vector<8x32xf32> to vector<8x32xbf16>
    %cst_95 = arith.constant dense<0.000000e+00> : vector<8x96xf32>
    %526 = tpu.matmul %525, %423, %cst_95 {dimension_numbers = #tpu.dot_dimension_numbers<[1], [0], [0], [1], [0, 0, 1, 1], [], []>} : vector<8x32xbf16>, vector<32x96xbf16>, vector<8x96xf32> -> vector<8x96xf32>
    %527 = vector.extract_strided_slice %524 {offsets = [0, 0], sizes = [8, 64], strides = [1, 1]} : vector<8x96xf32> to vector<8x64xf32>
    %528 = vector.extract_strided_slice %526 {offsets = [0, 0], sizes = [8, 64], strides = [1, 1]} : vector<8x96xf32> to vector<8x64xf32>
    %529 = arith.addf %527, %528 : vector<8x64xf32>
    %530 = arith.negf %529 : vector<8x64xf32>
    %531 = math.exp %530 : vector<8x64xf32>
    %cst_96 = arith.constant 1.000000e+00 : f32
    %532 = vector.broadcast %cst_96 : f32 to vector<8x64xf32>
    %533 = arith.addf %532, %531 : vector<8x64xf32>
    %534 = arith.divf %532, %533 : vector<8x64xf32>
    %535 = vector.extract_strided_slice %534 {offsets = [0, 0], sizes = [8, 32], strides = [1, 1]} : vector<8x64xf32> to vector<8x32xf32>
    %536 = vector.extract_strided_slice %534 {offsets = [0, 32], sizes = [8, 32], strides = [1, 1]} : vector<8x64xf32> to vector<8x32xf32>
    %537 = vector.extract_strided_slice %524 {offsets = [0, 64], sizes = [8, 32], strides = [1, 1]} : vector<8x96xf32> to vector<8x32xf32>
    %538 = vector.extract_strided_slice %526 {offsets = [0, 64], sizes = [8, 32], strides = [1, 1]} : vector<8x96xf32> to vector<8x32xf32>
    %539 = vector.broadcast %417 : vector<1x32xf32> to vector<8x32xf32>
    %540 = arith.addf %538, %539 : vector<8x32xf32>
    %541 = arith.mulf %535, %540 : vector<8x32xf32>
    %542 = arith.addf %537, %541 : vector<8x32xf32>
    %543 = math.tanh %542 : vector<8x32xf32>
    %cst_97 = arith.constant 1.000000e+00 : f32
    %544 = vector.broadcast %cst_97 : f32 to vector<8x32xf32>
    %545 = arith.subf %544, %536 : vector<8x32xf32>
    %546 = arith.mulf %545, %543 : vector<8x32xf32>
    %547 = arith.mulf %536, %523 : vector<8x32xf32>
    %548 = arith.addf %546, %547 : vector<8x32xf32>
    %549 = vector.extract_strided_slice %128 {offsets = [24, 0], sizes = [8, 1], strides = [1, 1]} : vector<64x1xf32> to vector<8x1xf32>
    %550 = vector.broadcast %549 : vector<8x1xf32> to vector<8x32xf32>
    %551 = arith.mulf %550, %548 : vector<8x32xf32>
    %cst_98 = arith.constant 1.000000e+00 : f32
    %552 = vector.broadcast %cst_98 : f32 to vector<8x1xf32>
    %553 = arith.subf %552, %549 : vector<8x1xf32>
    %554 = vector.broadcast %553 : vector<8x1xf32> to vector<8x32xf32>
    %555 = arith.mulf %554, %523 : vector<8x32xf32>
    %556 = arith.addf %551, %555 : vector<8x32xf32>
    %557 = vector.extract_strided_slice %422 {offsets = [32, 0], sizes = [8, 96], strides = [1, 1]} : vector<64x96xf32> to vector<8x96xf32>
    %558 = arith.truncf %556 : vector<8x32xf32> to vector<8x32xbf16>
    %cst_99 = arith.constant dense<0.000000e+00> : vector<8x96xf32>
    %559 = tpu.matmul %558, %423, %cst_99 {dimension_numbers = #tpu.dot_dimension_numbers<[1], [0], [0], [1], [0, 0, 1, 1], [], []>} : vector<8x32xbf16>, vector<32x96xbf16>, vector<8x96xf32> -> vector<8x96xf32>
    %560 = vector.extract_strided_slice %557 {offsets = [0, 0], sizes = [8, 64], strides = [1, 1]} : vector<8x96xf32> to vector<8x64xf32>
    %561 = vector.extract_strided_slice %559 {offsets = [0, 0], sizes = [8, 64], strides = [1, 1]} : vector<8x96xf32> to vector<8x64xf32>
    %562 = arith.addf %560, %561 : vector<8x64xf32>
    %563 = arith.negf %562 : vector<8x64xf32>
    %564 = math.exp %563 : vector<8x64xf32>
    %cst_100 = arith.constant 1.000000e+00 : f32
    %565 = vector.broadcast %cst_100 : f32 to vector<8x64xf32>
    %566 = arith.addf %565, %564 : vector<8x64xf32>
    %567 = arith.divf %565, %566 : vector<8x64xf32>
    %568 = vector.extract_strided_slice %567 {offsets = [0, 0], sizes = [8, 32], strides = [1, 1]} : vector<8x64xf32> to vector<8x32xf32>
    %569 = vector.extract_strided_slice %567 {offsets = [0, 32], sizes = [8, 32], strides = [1, 1]} : vector<8x64xf32> to vector<8x32xf32>
    %570 = vector.extract_strided_slice %557 {offsets = [0, 64], sizes = [8, 32], strides = [1, 1]} : vector<8x96xf32> to vector<8x32xf32>
    %571 = vector.extract_strided_slice %559 {offsets = [0, 64], sizes = [8, 32], strides = [1, 1]} : vector<8x96xf32> to vector<8x32xf32>
    %572 = vector.broadcast %417 : vector<1x32xf32> to vector<8x32xf32>
    %573 = arith.addf %571, %572 : vector<8x32xf32>
    %574 = arith.mulf %568, %573 : vector<8x32xf32>
    %575 = arith.addf %570, %574 : vector<8x32xf32>
    %576 = math.tanh %575 : vector<8x32xf32>
    %cst_101 = arith.constant 1.000000e+00 : f32
    %577 = vector.broadcast %cst_101 : f32 to vector<8x32xf32>
    %578 = arith.subf %577, %569 : vector<8x32xf32>
    %579 = arith.mulf %578, %576 : vector<8x32xf32>
    %580 = arith.mulf %569, %556 : vector<8x32xf32>
    %581 = arith.addf %579, %580 : vector<8x32xf32>
    %582 = vector.extract_strided_slice %128 {offsets = [32, 0], sizes = [8, 1], strides = [1, 1]} : vector<64x1xf32> to vector<8x1xf32>
    %583 = vector.broadcast %582 : vector<8x1xf32> to vector<8x32xf32>
    %584 = arith.mulf %583, %581 : vector<8x32xf32>
    %cst_102 = arith.constant 1.000000e+00 : f32
    %585 = vector.broadcast %cst_102 : f32 to vector<8x1xf32>
    %586 = arith.subf %585, %582 : vector<8x1xf32>
    %587 = vector.broadcast %586 : vector<8x1xf32> to vector<8x32xf32>
    %588 = arith.mulf %587, %556 : vector<8x32xf32>
    %589 = arith.addf %584, %588 : vector<8x32xf32>
    %590 = vector.extract_strided_slice %422 {offsets = [40, 0], sizes = [8, 96], strides = [1, 1]} : vector<64x96xf32> to vector<8x96xf32>
    %591 = arith.truncf %589 : vector<8x32xf32> to vector<8x32xbf16>
    %cst_103 = arith.constant dense<0.000000e+00> : vector<8x96xf32>
    %592 = tpu.matmul %591, %423, %cst_103 {dimension_numbers = #tpu.dot_dimension_numbers<[1], [0], [0], [1], [0, 0, 1, 1], [], []>} : vector<8x32xbf16>, vector<32x96xbf16>, vector<8x96xf32> -> vector<8x96xf32>
    %593 = vector.extract_strided_slice %590 {offsets = [0, 0], sizes = [8, 64], strides = [1, 1]} : vector<8x96xf32> to vector<8x64xf32>
    %594 = vector.extract_strided_slice %592 {offsets = [0, 0], sizes = [8, 64], strides = [1, 1]} : vector<8x96xf32> to vector<8x64xf32>
    %595 = arith.addf %593, %594 : vector<8x64xf32>
    %596 = arith.negf %595 : vector<8x64xf32>
    %597 = math.exp %596 : vector<8x64xf32>
    %cst_104 = arith.constant 1.000000e+00 : f32
    %598 = vector.broadcast %cst_104 : f32 to vector<8x64xf32>
    %599 = arith.addf %598, %597 : vector<8x64xf32>
    %600 = arith.divf %598, %599 : vector<8x64xf32>
    %601 = vector.extract_strided_slice %600 {offsets = [0, 0], sizes = [8, 32], strides = [1, 1]} : vector<8x64xf32> to vector<8x32xf32>
    %602 = vector.extract_strided_slice %600 {offsets = [0, 32], sizes = [8, 32], strides = [1, 1]} : vector<8x64xf32> to vector<8x32xf32>
    %603 = vector.extract_strided_slice %590 {offsets = [0, 64], sizes = [8, 32], strides = [1, 1]} : vector<8x96xf32> to vector<8x32xf32>
    %604 = vector.extract_strided_slice %592 {offsets = [0, 64], sizes = [8, 32], strides = [1, 1]} : vector<8x96xf32> to vector<8x32xf32>
    %605 = vector.broadcast %417 : vector<1x32xf32> to vector<8x32xf32>
    %606 = arith.addf %604, %605 : vector<8x32xf32>
    %607 = arith.mulf %601, %606 : vector<8x32xf32>
    %608 = arith.addf %603, %607 : vector<8x32xf32>
    %609 = math.tanh %608 : vector<8x32xf32>
    %cst_105 = arith.constant 1.000000e+00 : f32
    %610 = vector.broadcast %cst_105 : f32 to vector<8x32xf32>
    %611 = arith.subf %610, %602 : vector<8x32xf32>
    %612 = arith.mulf %611, %609 : vector<8x32xf32>
    %613 = arith.mulf %602, %589 : vector<8x32xf32>
    %614 = arith.addf %612, %613 : vector<8x32xf32>
    %615 = vector.extract_strided_slice %128 {offsets = [40, 0], sizes = [8, 1], strides = [1, 1]} : vector<64x1xf32> to vector<8x1xf32>
    %616 = vector.broadcast %615 : vector<8x1xf32> to vector<8x32xf32>
    %617 = arith.mulf %616, %614 : vector<8x32xf32>
    %cst_106 = arith.constant 1.000000e+00 : f32
    %618 = vector.broadcast %cst_106 : f32 to vector<8x1xf32>
    %619 = arith.subf %618, %615 : vector<8x1xf32>
    %620 = vector.broadcast %619 : vector<8x1xf32> to vector<8x32xf32>
    %621 = arith.mulf %620, %589 : vector<8x32xf32>
    %622 = arith.addf %617, %621 : vector<8x32xf32>
    %623 = vector.extract_strided_slice %422 {offsets = [48, 0], sizes = [8, 96], strides = [1, 1]} : vector<64x96xf32> to vector<8x96xf32>
    %624 = arith.truncf %622 : vector<8x32xf32> to vector<8x32xbf16>
    %cst_107 = arith.constant dense<0.000000e+00> : vector<8x96xf32>
    %625 = tpu.matmul %624, %423, %cst_107 {dimension_numbers = #tpu.dot_dimension_numbers<[1], [0], [0], [1], [0, 0, 1, 1], [], []>} : vector<8x32xbf16>, vector<32x96xbf16>, vector<8x96xf32> -> vector<8x96xf32>
    %626 = vector.extract_strided_slice %623 {offsets = [0, 0], sizes = [8, 64], strides = [1, 1]} : vector<8x96xf32> to vector<8x64xf32>
    %627 = vector.extract_strided_slice %625 {offsets = [0, 0], sizes = [8, 64], strides = [1, 1]} : vector<8x96xf32> to vector<8x64xf32>
    %628 = arith.addf %626, %627 : vector<8x64xf32>
    %629 = arith.negf %628 : vector<8x64xf32>
    %630 = math.exp %629 : vector<8x64xf32>
    %cst_108 = arith.constant 1.000000e+00 : f32
    %631 = vector.broadcast %cst_108 : f32 to vector<8x64xf32>
    %632 = arith.addf %631, %630 : vector<8x64xf32>
    %633 = arith.divf %631, %632 : vector<8x64xf32>
    %634 = vector.extract_strided_slice %633 {offsets = [0, 0], sizes = [8, 32], strides = [1, 1]} : vector<8x64xf32> to vector<8x32xf32>
    %635 = vector.extract_strided_slice %633 {offsets = [0, 32], sizes = [8, 32], strides = [1, 1]} : vector<8x64xf32> to vector<8x32xf32>
    %636 = vector.extract_strided_slice %623 {offsets = [0, 64], sizes = [8, 32], strides = [1, 1]} : vector<8x96xf32> to vector<8x32xf32>
    %637 = vector.extract_strided_slice %625 {offsets = [0, 64], sizes = [8, 32], strides = [1, 1]} : vector<8x96xf32> to vector<8x32xf32>
    %638 = vector.broadcast %417 : vector<1x32xf32> to vector<8x32xf32>
    %639 = arith.addf %637, %638 : vector<8x32xf32>
    %640 = arith.mulf %634, %639 : vector<8x32xf32>
    %641 = arith.addf %636, %640 : vector<8x32xf32>
    %642 = math.tanh %641 : vector<8x32xf32>
    %cst_109 = arith.constant 1.000000e+00 : f32
    %643 = vector.broadcast %cst_109 : f32 to vector<8x32xf32>
    %644 = arith.subf %643, %635 : vector<8x32xf32>
    %645 = arith.mulf %644, %642 : vector<8x32xf32>
    %646 = arith.mulf %635, %622 : vector<8x32xf32>
    %647 = arith.addf %645, %646 : vector<8x32xf32>
    %648 = vector.extract_strided_slice %128 {offsets = [48, 0], sizes = [8, 1], strides = [1, 1]} : vector<64x1xf32> to vector<8x1xf32>
    %649 = vector.broadcast %648 : vector<8x1xf32> to vector<8x32xf32>
    %650 = arith.mulf %649, %647 : vector<8x32xf32>
    %cst_110 = arith.constant 1.000000e+00 : f32
    %651 = vector.broadcast %cst_110 : f32 to vector<8x1xf32>
    %652 = arith.subf %651, %648 : vector<8x1xf32>
    %653 = vector.broadcast %652 : vector<8x1xf32> to vector<8x32xf32>
    %654 = arith.mulf %653, %622 : vector<8x32xf32>
    %655 = arith.addf %650, %654 : vector<8x32xf32>
    %656 = vector.extract_strided_slice %422 {offsets = [56, 0], sizes = [8, 96], strides = [1, 1]} : vector<64x96xf32> to vector<8x96xf32>
    %657 = arith.truncf %655 : vector<8x32xf32> to vector<8x32xbf16>
    %cst_111 = arith.constant dense<0.000000e+00> : vector<8x96xf32>
    %658 = tpu.matmul %657, %423, %cst_111 {dimension_numbers = #tpu.dot_dimension_numbers<[1], [0], [0], [1], [0, 0, 1, 1], [], []>} : vector<8x32xbf16>, vector<32x96xbf16>, vector<8x96xf32> -> vector<8x96xf32>
    %659 = vector.extract_strided_slice %656 {offsets = [0, 0], sizes = [8, 64], strides = [1, 1]} : vector<8x96xf32> to vector<8x64xf32>
    %660 = vector.extract_strided_slice %658 {offsets = [0, 0], sizes = [8, 64], strides = [1, 1]} : vector<8x96xf32> to vector<8x64xf32>
    %661 = arith.addf %659, %660 : vector<8x64xf32>
    %662 = arith.negf %661 : vector<8x64xf32>
    %663 = math.exp %662 : vector<8x64xf32>
    %cst_112 = arith.constant 1.000000e+00 : f32
    %664 = vector.broadcast %cst_112 : f32 to vector<8x64xf32>
    %665 = arith.addf %664, %663 : vector<8x64xf32>
    %666 = arith.divf %664, %665 : vector<8x64xf32>
    %667 = vector.extract_strided_slice %666 {offsets = [0, 0], sizes = [8, 32], strides = [1, 1]} : vector<8x64xf32> to vector<8x32xf32>
    %668 = vector.extract_strided_slice %666 {offsets = [0, 32], sizes = [8, 32], strides = [1, 1]} : vector<8x64xf32> to vector<8x32xf32>
    %669 = vector.extract_strided_slice %656 {offsets = [0, 64], sizes = [8, 32], strides = [1, 1]} : vector<8x96xf32> to vector<8x32xf32>
    %670 = vector.extract_strided_slice %658 {offsets = [0, 64], sizes = [8, 32], strides = [1, 1]} : vector<8x96xf32> to vector<8x32xf32>
    %671 = vector.broadcast %417 : vector<1x32xf32> to vector<8x32xf32>
    %672 = arith.addf %670, %671 : vector<8x32xf32>
    %673 = arith.mulf %667, %672 : vector<8x32xf32>
    %674 = arith.addf %669, %673 : vector<8x32xf32>
    %675 = math.tanh %674 : vector<8x32xf32>
    %cst_113 = arith.constant 1.000000e+00 : f32
    %676 = vector.broadcast %cst_113 : f32 to vector<8x32xf32>
    %677 = arith.subf %676, %668 : vector<8x32xf32>
    %678 = arith.mulf %677, %675 : vector<8x32xf32>
    %679 = arith.mulf %668, %655 : vector<8x32xf32>
    %680 = arith.addf %678, %679 : vector<8x32xf32>
    %681 = vector.extract_strided_slice %128 {offsets = [56, 0], sizes = [8, 1], strides = [1, 1]} : vector<64x1xf32> to vector<8x1xf32>
    %682 = vector.broadcast %681 : vector<8x1xf32> to vector<8x32xf32>
    %683 = arith.mulf %682, %680 : vector<8x32xf32>
    %cst_114 = arith.constant 1.000000e+00 : f32
    %684 = vector.broadcast %cst_114 : f32 to vector<8x1xf32>
    %685 = arith.subf %684, %681 : vector<8x1xf32>
    %686 = vector.broadcast %685 : vector<8x1xf32> to vector<8x32xf32>
    %687 = arith.mulf %686, %655 : vector<8x32xf32>
    %688 = arith.addf %683, %687 : vector<8x32xf32>
    %c3 = arith.constant 3 : index
    %c0_115 = arith.constant 0 : index
    %689 = vector.load %arg6[%c3, %c0_115] : memref<36x128xf32, #tpu.memory_space<vmem>>, vector<1x128xf32>
    %c4 = arith.constant 4 : index
    %c0_116 = arith.constant 0 : index
    %690 = vector.load %arg6[%c4, %c0_116] : memref<36x128xf32, #tpu.memory_space<vmem>>, vector<32x128xf32>
    %691 = arith.truncf %688 : vector<8x32xf32> to vector<8x32xbf16>
    %692 = arith.truncf %690 : vector<32x128xf32> to vector<32x128xbf16>
    %cst_117 = arith.constant dense<0.000000e+00> : vector<8x128xf32>
    %693 = tpu.matmul %691, %692, %cst_117 {dimension_numbers = #tpu.dot_dimension_numbers<[1], [0], [0], [1], [0, 0, 1, 1], [], []>} : vector<8x32xbf16>, vector<32x128xbf16>, vector<8x128xf32> -> vector<8x128xf32>
    %694 = vector.broadcast %689 : vector<1x128xf32> to vector<8x128xf32>
    %695 = arith.addf %693, %694 : vector<8x128xf32>
    %c0_118 = arith.constant 0 : index
    %c0_119 = arith.constant 0 : index
    %696 = vector.load %arg8[%c0_118, %c0_119] : memref<8x128xf32, #tpu.memory_space<vmem>>, vector<8x128xf32>
    tpu.vector_store %arg8[%c0_118, %c0_119], %695 {strides = array<i32>} : memref<8x128xf32, #tpu.memory_space<vmem>>, vector<8x128xf32>,
    return
  }
}

</mosaic_0001>

<llo_original>
// kernel: gat_with_gru_forward.1
$region0: #{gat_with_gru_forward.1}
  #allocation0 [shape = 'u32[]', space=smem, size = 0x4, offset = 0x4, fixed_abs, tag = 'smem constant byte address 0x4 - core index']
  #allocation1 [shape = 'u32[144,128]{1,0:T(1,128)}', space=vmem, size = 0x12000, scoped, tag = 'internal scratch']
  %s0 = inlined_call_operand.vmem [shape: f32[8,32], index: 0, kind: input, shape index: {}]
  %s1 = inlined_call_operand.vmem [shape: f32[8,8], index: 1, kind: input, shape index: {}]
  %s2 = inlined_call_operand.vmem [shape: f32[64,8], index: 2, kind: input, shape index: {}]
  %s3 = inlined_call_operand.vmem [shape: f32[64,1], index: 3, kind: input, shape index: {}]
  %s4 = inlined_call_operand.vmem [shape: f32[56,256], index: 4, kind: input, shape index: {}]
  %s5 = inlined_call_operand.vmem [shape: f32[256,32], index: 5, kind: input, shape index: {}]
  %s6 = inlined_call_operand.vmem [shape: f32[36,128], index: 6, kind: input, shape index: {}]
  %s7 = inlined_call_operand.vmem [shape: f32[132,128], index: 7, kind: input, shape index: {}]
  %s8 = inlined_call_operand.vmem [shape: f32[8,128], index: 8, kind: output, shape index: {}]
  %s9 = sld [smem:[#allocation0]]
  $region42: #{gat_with_gru_forward.1} parent=0
    _
  %s11 = ssub.s32 1, %s9
  %s12 = scalar_select 0, %s11, %s9
  // Predicated region
  $region2: #{gat_with_gru_forward.1} parent=0 // pred_check
    _
  $region3: #{gat_with_gru_forward.1} parent=0 // pred_check_branch
    %14 = sbr.rel (0) target = $region5
  $region4: #{gat_with_gru_forward.1} parent=0 // pred_region
    _
  $region5: #{gat_with_gru_forward.1} parent=0 // pred_fallthru
    _
  // Predicated region
  $region6: #{gat_with_gru_forward.1} parent=0 // pred_check
    _
  $region7: #{gat_with_gru_forward.1} parent=0 // pred_check_branch
    %16 = sbr.rel (0) target = $region9
  $region8: #{gat_with_gru_forward.1} parent=0 // pred_region
    _
  $region9: #{gat_with_gru_forward.1} parent=0 // pred_fallthru
    _
  // Predicated region
  $region10: #{gat_with_gru_forward.1} parent=0 // pred_check
    _
  $region11: #{gat_with_gru_forward.1} parent=0 // pred_check_branch
    %18 = sbr.rel (0) target = $region13
  $region12: #{gat_with_gru_forward.1} parent=0 // pred_region
    _
  $region13: #{gat_with_gru_forward.1} parent=0 // pred_fallthru
    _
  // Predicated region
  $region14: #{gat_with_gru_forward.1} parent=0 // pred_check
    _
  $region15: #{gat_with_gru_forward.1} parent=0 // pred_check_branch
    %20 = sbr.rel (0) target = $region17
  $region16: #{gat_with_gru_forward.1} parent=0 // pred_region
    _
  $region17: #{gat_with_gru_forward.1} parent=0 // pred_fallthru
    _
  // Predicated region
  $region18: #{gat_with_gru_forward.1} parent=0 // pred_check
    _
  $region19: #{gat_with_gru_forward.1} parent=0 // pred_check_branch
    %22 = sbr.rel (0) target = $region21
  $region20: #{gat_with_gru_forward.1} parent=0 // pred_region
    _
  $region21: #{gat_with_gru_forward.1} parent=0 // pred_fallthru
    _
  // Predicated region
  $region22: #{gat_with_gru_forward.1} parent=0 // pred_check
    _
  $region23: #{gat_with_gru_forward.1} parent=0 // pred_check_branch
    %24 = sbr.rel (0) target = $region25
  $region24: #{gat_with_gru_forward.1} parent=0 // pred_region
    _
  $region25: #{gat_with_gru_forward.1} parent=0 // pred_fallthru
    _
  // Predicated region
  $region26: #{gat_with_gru_forward.1} parent=0 // pred_check
    _
  $region27: #{gat_with_gru_forward.1} parent=0 // pred_check_branch
    %26 = sbr.rel (0) target = $region29
  $region28: #{gat_with_gru_forward.1} parent=0 // pred_region
    _
  $region29: #{gat_with_gru_forward.1} parent=0 // pred_fallthru
    _
  // Predicated region
  $region30: #{gat_with_gru_forward.1} parent=0 // pred_check
    _
  $region31: #{gat_with_gru_forward.1} parent=0 // pred_check_branch
    %28 = sbr.rel (0) target = $region33
  $region32: #{gat_with_gru_forward.1} parent=0 // pred_region
    _
  $region33: #{gat_with_gru_forward.1} parent=0 // pred_fallthru
    _
  %v30 = vld [vmem:[%s0] sm:$0xff]
  %v31 = vld [vmem:[%s4] sm:$0xff]
  %v32 = vld [vmem:[%s4 + $0x8] sm:$0xff]
  %v33 = vld [vmem:[%s4 + $0x10] sm:$0xff]
  %v34 = vld [vmem:[%s4 + $0x18] sm:$0xff]
  %v35 = vld [vmem:[%s4 + $0x20] sm:$0xff]
  %v36 = vld [vmem:[%s4 + $0x28] sm:$0xff]
  %v37 = vld [vmem:[%s4 + $0x30] sm:$0xff]
  %v38 = vld [vmem:[%s4 + $0x38] sm:$0xff]
  %v39 = vld [vmem:[%s4 + $0x40] sm:$0xff]
  %v41 = vcombine.high %v39, %v39
  %v43 = vunpack.c.l.s4 1966171168
  %v44 = vunpack.c.0.s8 %v43
  %v45 = vlaneseq
  %v46 = vshrl.u32 %v45, 7
  %v47 = vsub.s32 %v44, %v46
  %v48 = vrot.slane %v39, %v47
  %v50 = vunpack.c.l.s4 1966171168
  %v51 = vunpack.c.0.s8 %v50
  %v52 = vlaneseq
  %v53 = vshrl.u32 %v52, 7
  %v54 = vsub.s32 %v51, %v53
  %v55 = vrot.slane %v41, %v54
  %v56 = vcombine.high %v48, %v48
  %v57 = vcombine.high %v55, %v55
  %v59 = vunpack.c.l.s4 1966171168
  %v60 = vunpack.c.0.s8 %v59
  %v61 = vlaneseq
  %v62 = vshrl.u32 %v61, 7
  %v63 = vsub.s32 %v60, %v62
  %v64 = vrot.slane %v48, %v63
  %v66 = vunpack.c.l.s4 1966171168
  %v67 = vunpack.c.0.s8 %v66
  %v68 = vlaneseq
  %v69 = vshrl.u32 %v68, 7
  %v70 = vsub.s32 %v67, %v69
  %v71 = vrot.slane %v55, %v70
  %v73 = vunpack.c.l.s4 1966171168
  %v74 = vunpack.c.0.s8 %v73
  %v75 = vlaneseq
  %v76 = vshrl.u32 %v75, 7
  %v77 = vsub.s32 %v74, %v76
  %v78 = vrot.slane %v56, %v77
  %v80 = vunpack.c.l.s4 1966171168
  %v81 = vunpack.c.0.s8 %v80
  %v82 = vlaneseq
  %v83 = vshrl.u32 %v82, 7
  %v84 = vsub.s32 %v81, %v83
  %v85 = vrot.slane %v57, %v84
  %v86 = vcombine.high %v64, %v64
  %v87 = vcombine.high %v71, %v71
  %v88 = vcombine.high %v78, %v78
  %v89 = vcombine.high %v85, %v85
  %v90 = vld [vmem:[%s4 + $0x50] sm:$0xff]
  %v92 = vcombine.high %v90, %v90
  %v94 = vunpack.c.l.s4 1966171168
  %v95 = vunpack.c.0.s8 %v94
  %v96 = vlaneseq
  %v97 = vshrl.u32 %v96, 7
  %v98 = vsub.s32 %v95, %v97
  %v99 = vrot.slane %v90, %v98
  %v101 = vunpack.c.l.s4 1966171168
  %v102 = vunpack.c.0.s8 %v101
  %v103 = vlaneseq
  %v104 = vshrl.u32 %v103, 7
  %v105 = vsub.s32 %v102, %v104
  %v106 = vrot.slane %v92, %v105
  %v107 = vcombine.high %v99, %v99
  %v108 = vcombine.high %v106, %v106
  %v110 = vunpack.c.l.s4 1966171168
  %v111 = vunpack.c.0.s8 %v110
  %v112 = vlaneseq
  %v113 = vshrl.u32 %v112, 7
  %v114 = vsub.s32 %v111, %v113
  %v115 = vrot.slane %v99, %v114
  %v117 = vunpack.c.l.s4 1966171168
  %v118 = vunpack.c.0.s8 %v117
  %v119 = vlaneseq
  %v120 = vshrl.u32 %v119, 7
  %v121 = vsub.s32 %v118, %v120
  %v122 = vrot.slane %v106, %v121
  %v124 = vunpack.c.l.s4 1966171168
  %v125 = vunpack.c.0.s8 %v124
  %v126 = vlaneseq
  %v127 = vshrl.u32 %v126, 7
  %v128 = vsub.s32 %v125, %v127
  %v129 = vrot.slane %v107, %v128
  %v131 = vunpack.c.l.s4 1966171168
  %v132 = vunpack.c.0.s8 %v131
  %v133 = vlaneseq
  %v134 = vshrl.u32 %v133, 7
  %v135 = vsub.s32 %v132, %v134
  %v136 = vrot.slane %v108, %v135
  %v137 = vcombine.high %v115, %v115
  %v138 = vcombine.high %v122, %v122
  %v139 = vcombine.high %v129, %v129
  %v140 = vcombine.high %v136, %v136
  %v149 = vld [vmem:[%s4 + $0x60] sm:$0xff]
  %v151 = vcombine.high %v149, %v149
  %v153 = vunpack.c.l.s4 1966171168
  %v154 = vunpack.c.0.s8 %v153
  %v155 = vlaneseq
  %v156 = vshrl.u32 %v155, 7
  %v157 = vsub.s32 %v154, %v156
  %v158 = vrot.slane %v149, %v157
  %v160 = vunpack.c.l.s4 1966171168
  %v161 = vunpack.c.0.s8 %v160
  %v162 = vlaneseq
  %v163 = vshrl.u32 %v162, 7
  %v164 = vsub.s32 %v161, %v163
  %v165 = vrot.slane %v151, %v164
  %v166 = vcombine.high %v158, %v158
  %v167 = vcombine.high %v165, %v165
  %v169 = vunpack.c.l.s4 1966171168
  %v170 = vunpack.c.0.s8 %v169
  %v171 = vlaneseq
  %v172 = vshrl.u32 %v171, 7
  %v173 = vsub.s32 %v170, %v172
  %v174 = vrot.slane %v158, %v173
  %v176 = vunpack.c.l.s4 1966171168
  %v177 = vunpack.c.0.s8 %v176
  %v178 = vlaneseq
  %v179 = vshrl.u32 %v178, 7
  %v180 = vsub.s32 %v177, %v179
  %v181 = vrot.slane %v165, %v180
  %v183 = vunpack.c.l.s4 1966171168
  %v184 = vunpack.c.0.s8 %v183
  %v185 = vlaneseq
  %v186 = vshrl.u32 %v185, 7
  %v187 = vsub.s32 %v184, %v186
  %v188 = vrot.slane %v166, %v187
  %v190 = vunpack.c.l.s4 1966171168
  %v191 = vunpack.c.0.s8 %v190
  %v192 = vlaneseq
  %v193 = vshrl.u32 %v192, 7
  %v194 = vsub.s32 %v191, %v193
  %v195 = vrot.slane %v167, %v194
  %v196 = vcombine.high %v174, %v174
  %v197 = vcombine.high %v181, %v181
  %v198 = vcombine.high %v188, %v188
  %v199 = vcombine.high %v195, %v195
  %v200 = vpack.c.bf16 %v30, %v30
  %v201 = vpack.c.bf16 %v33, %v31
  %v202 = vpack.c.bf16 %v34, %v32
  %v203 = vpack.c.bf16 %v37, %v35
  %v204 = vpack.c.bf16 %v38, %v36
  %vm205 = vcmask 261120
  %v207 = vsel %vm205, %v200, 0
  %209 = vmatprep.subr.bf16.mxu0 0
  %210 = vmatpush1.bf16.msra.mxu0 0
  %211 = vmatprep.subr.bf16.mxu0 0
  %212 = vmatpush1.bf16.msra.mxu0 0
  %213 = vmatprep.subr.bf16.mxu0 0
  %214 = vmatpush1.bf16.msra.mxu0 0
  %215 = vmatprep.subr.bf16.mxu0 0
  %216 = vmatpush1.bf16.msra.mxu0 0
  %217 = vmatprep.subr.bf16.mxu0 0
  %218 = vmatpush1.bf16.msra.mxu0 0
  %219 = vmatprep.subr.bf16.mxu0 0
  %220 = vmatpush1.bf16.msra.mxu0 0
  %221 = vmatprep.subr.bf16.mxu0 %v204
  %222 = vmatpush1.bf16.msra.mxu0 %v203
  %223 = vmatprep.subr.bf16.mxu0 %v202
  %224 = vmatpush1.bf16.msra.mxu0 %v201
  %225 = vmatprep.subr.bf16.mxu0 0
  %226 = vmatpush2.bf16.msra.mxu0 0
  %227 = vmatprep.subr.bf16.mxu0 0
  %228 = vmatpush2.bf16.msra.mxu0 0
  %229 = vmatprep.subr.bf16.mxu0 0
  %230 = vmatpush2.bf16.msra.mxu0 0
  %231 = vmatprep.subr.bf16.mxu0 0
  %232 = vmatpush2.bf16.msra.mxu0 0
  %233 = vmatprep.subr.bf16.mxu0 0
  %234 = vmatpush2.bf16.msra.mxu0 0
  %235 = vmatprep.subr.bf16.mxu0 0
  %236 = vmatpush2.bf16.msra.mxu0 0
  %237 = vmatprep.subr.bf16.mxu0 0
  %238 = vmatpush2.bf16.msra.mxu0 0
  %239 = vmatprep.subr.bf16.mxu0 0
  %240 = vmatpush2.bf16.msra.mxu0 0
  %241 = vmatprep.mubr.bf16.mxu0 0
  %242 = vmatmul.mubr.bf16.gmra.mxu0 %v207
  %v243 = vpop.f32.mrf.mxu0
  %v244 = vadd.f32 0.0, %v243
  %v245 = vpop.f32.mrf.mxu0
  %v246 = vadd.f32 0.0, %v245
  %v247 = vpop.f32.mrf.mxu0
  %v248 = vpop.f32.mrf.mxu0
  %249 = vdwg.mxu0
  %251 = vrot.lane.b32.xlu0 %v244, 96
  %v252 = vpop.permute.xlu0 %251
  %254 = vrot.lane.b32.xlu0 %v244, 64
  %v255 = vpop.permute.xlu0 %254
  %257 = vrot.lane.b32.xlu0 %v244, 32
  %v258 = vpop.permute.xlu0 %257
  %261 = vrot.lane.b32.xlu0 %v246, 96
  %v262 = vpop.permute.xlu0 %261
  %264 = vrot.lane.b32.xlu0 %v246, 64
  %v265 = vpop.permute.xlu0 %264
  %267 = vrot.lane.b32.xlu0 %v246, 32
  %v268 = vpop.permute.xlu0 %267
  %v270 = vlaneseq
  %v271 = vshrl.u32 %v270, 7
  %v272 = vsub.s32 0, %v271
  %v273 = vrot.slane %v64, %v272
  %v274 = vlaneseq
  %v275 = vshrl.u32 %v274, 7
  %v276 = vsub.s32 0, %v275
  %v277 = vrot.slane %v78, %v276
  %v278 = vlaneseq
  %v279 = vshrl.u32 %v278, 7
  %v280 = vsub.s32 0, %v279
  %v281 = vrot.slane %v86, %v280
  %v282 = vlaneseq
  %v283 = vshrl.u32 %v282, 7
  %v284 = vsub.s32 0, %v283
  %v285 = vrot.slane %v88, %v284
  %v286 = vlaneseq
  %v287 = vshrl.u32 %v286, 7
  %v288 = vsub.s32 0, %v287
  %v289 = vrot.slane %v71, %v288
  %v290 = vlaneseq
  %v291 = vshrl.u32 %v290, 7
  %v292 = vsub.s32 0, %v291
  %v293 = vrot.slane %v85, %v292
  %v294 = vlaneseq
  %v295 = vshrl.u32 %v294, 7
  %v296 = vsub.s32 0, %v295
  %v297 = vrot.slane %v87, %v296
  %v298 = vlaneseq
  %v299 = vshrl.u32 %v298, 7
  %v300 = vsub.s32 0, %v299
  %v301 = vrot.slane %v89, %v300
  %v310 = vmul.f32 %v244, %v273
  %v311 = vmul.f32 %v252, %v277
  %v312 = vmul.f32 %v255, %v281
  %v313 = vmul.f32 %v258, %v285
  %v314 = vmul.f32 %v246, %v289
  %v315 = vmul.f32 %v262, %v293
  %v316 = vmul.f32 %v265, %v297
  %v317 = vmul.f32 %v268, %v301
  %v318 = vsel %vm205, %v310, 0.0
  %319 = vadd.xlane.f32.xlu0 %v318
  %v320 = vpop.xlane.xlu0 %319
  %v321 = vsel %vm205, %v311, 0.0
  %322 = vadd.xlane.f32.xlu0 %v321
  %v323 = vpop.xlane.xlu0 %322
  %v324 = vsel %vm205, %v312, 0.0
  %325 = vadd.xlane.f32.xlu0 %v324
  %v326 = vpop.xlane.xlu0 %325
  %v327 = vsel %vm205, %v313, 0.0
  %328 = vadd.xlane.f32.xlu0 %v327
  %v329 = vpop.xlane.xlu0 %328
  %v330 = vsel %vm205, %v314, 0.0
  %331 = vadd.xlane.f32.xlu0 %v330
  %v332 = vpop.xlane.xlu0 %331
  %v333 = vsel %vm205, %v315, 0.0
  %334 = vadd.xlane.f32.xlu0 %v333
  %v335 = vpop.xlane.xlu0 %334
  %v336 = vsel %vm205, %v316, 0.0
  %337 = vadd.xlane.f32.xlu0 %v336
  %v338 = vpop.xlane.xlu0 %337
  %v339 = vsel %vm205, %v317, 0.0
  %340 = vadd.xlane.f32.xlu0 %v339
  %v341 = vpop.xlane.xlu0 %340
  %v342 = vpack.c.bf16 %v115, %v115
  %v343 = vpack.c.bf16 %v129, %v129
  %v344 = vpack.c.bf16 %v137, %v137
  %v345 = vpack.c.bf16 %v139, %v139
  %v346 = vpack.c.bf16 %v122, %v122
  %v347 = vpack.c.bf16 %v136, %v136
  %v348 = vpack.c.bf16 %v138, %v138
  %v349 = vpack.c.bf16 %v140, %v140
  %v350 = vpack.c.bf16 %v244, %v244
  %v351 = vpack.c.bf16 %v252, %v252
  %v352 = vpack.c.bf16 %v255, %v255
  %v353 = vpack.c.bf16 %v258, %v258
  %v354 = vpack.c.bf16 %v246, %v246
  %v355 = vpack.c.bf16 %v262, %v262
  %v356 = vpack.c.bf16 %v265, %v265
  %v357 = vpack.c.bf16 %v268, %v268
  %v359 = vsel %vm205, %v342, 0
  %v362 = vsel %vm205, %v350, 0
  %364 = vmatprep.subr.bf16.mxu0 0
  %365 = vmatpush1.bf16.xpose.msra.mxu0 0
  %366 = vmatprep.subr.bf16.mxu0 0
  %367 = vmatpush1.bf16.xpose.msra.mxu0 0
  %368 = vmatprep.subr.bf16.mxu0 0
  %369 = vmatpush1.bf16.xpose.msra.mxu0 0
  %370 = vmatprep.subr.bf16.mxu0 0
  %371 = vmatpush1.bf16.xpose.msra.mxu0 0
  %372 = vmatprep.subr.bf16.mxu0 0
  %373 = vmatpush1.bf16.xpose.msra.mxu0 0
  %374 = vmatprep.subr.bf16.mxu0 0
  %375 = vmatpush1.bf16.xpose.msra.mxu0 0
  %376 = vmatprep.subr.bf16.mxu0 0
  %377 = vmatpush1.bf16.xpose.msra.mxu0 0
  %378 = vmatprep.subr.bf16.mxu0 0
  %379 = vmatpush1.bf16.xpose.msra.mxu0 %v362
  %380 = vmatprep.subr.bf16.mxu0 0
  %381 = vmatpush2.bf16.xpose.msra.mxu0 0
  %382 = vmatprep.subr.bf16.mxu0 0
  %383 = vmatpush2.bf16.xpose.msra.mxu0 0
  %384 = vmatprep.subr.bf16.mxu0 0
  %385 = vmatpush2.bf16.xpose.msra.mxu0 0
  %386 = vmatprep.subr.bf16.mxu0 0
  %387 = vmatpush2.bf16.xpose.msra.mxu0 0
  %388 = vmatprep.subr.bf16.mxu0 0
  %389 = vmatpush2.bf16.xpose.msra.mxu0 0
  %390 = vmatprep.subr.bf16.mxu0 0
  %391 = vmatpush2.bf16.xpose.msra.mxu0 0
  %392 = vmatprep.subr.bf16.mxu0 0
  %393 = vmatpush2.bf16.xpose.msra.mxu0 0
  %394 = vmatprep.subr.bf16.mxu0 0
  %395 = vmatpush2.bf16.xpose.msra.mxu0 0
  %396 = vmatprep.mubr.bf16.mxu0 0
  %397 = vmatmul.mubr.bf16.gmra.mxu0 %v359
  %v398 = vpop.f32.mrf.mxu0
  %v399 = vadd.f32 0.0, %v398
  %v400 = vpop.f32.mrf.mxu0
  %v401 = vpop.f32.mrf.mxu0
  %v402 = vpop.f32.mrf.mxu0
  %403 = vdwg.mxu0
  %v405 = vsel %vm205, %v343, 0
  %v408 = vsel %vm205, %v351, 0
  %410 = vmatprep.subr.bf16.mxu0 0
  %411 = vmatpush1.bf16.xpose.msra.mxu0 0
  %412 = vmatprep.subr.bf16.mxu0 0
  %413 = vmatpush1.bf16.xpose.msra.mxu0 0
  %414 = vmatprep.subr.bf16.mxu0 0
  %415 = vmatpush1.bf16.xpose.msra.mxu0 0
  %416 = vmatprep.subr.bf16.mxu0 0
  %417 = vmatpush1.bf16.xpose.msra.mxu0 0
  %418 = vmatprep.subr.bf16.mxu0 0
  %419 = vmatpush1.bf16.xpose.msra.mxu0 0
  %420 = vmatprep.subr.bf16.mxu0 0
  %421 = vmatpush1.bf16.xpose.msra.mxu0 0
  %422 = vmatprep.subr.bf16.mxu0 0
  %423 = vmatpush1.bf16.xpose.msra.mxu0 0
  %424 = vmatprep.subr.bf16.mxu0 0
  %425 = vmatpush1.bf16.xpose.msra.mxu0 %v408
  %426 = vmatprep.subr.bf16.mxu0 0
  %427 = vmatpush2.bf16.xpose.msra.mxu0 0
  %428 = vmatprep.subr.bf16.mxu0 0
  %429 = vmatpush2.bf16.xpose.msra.mxu0 0
  %430 = vmatprep.subr.bf16.mxu0 0
  %431 = vmatpush2.bf16.xpose.msra.mxu0 0
  %432 = vmatprep.subr.bf16.mxu0 0
  %433 = vmatpush2.bf16.xpose.msra.mxu0 0
  %434 = vmatprep.subr.bf16.mxu0 0
  %435 = vmatpush2.bf16.xpose.msra.mxu0 0
  %436 = vmatprep.subr.bf16.mxu0 0
  %437 = vmatpush2.bf16.xpose.msra.mxu0 0
  %438 = vmatprep.subr.bf16.mxu0 0
  %439 = vmatpush2.bf16.xpose.msra.mxu0 0
  %440 = vmatprep.subr.bf16.mxu0 0
  %441 = vmatpush2.bf16.xpose.msra.mxu0 0
  %442 = vmatprep.mubr.bf16.mxu0 0
  %443 = vmatmul.mubr.bf16.gmra.mxu0 %v405
  %v444 = vpop.f32.mrf.mxu0
  %v445 = vadd.f32 0.0, %v444
  %v446 = vpop.f32.mrf.mxu0
  %v447 = vpop.f32.mrf.mxu0
  %v448 = vpop.f32.mrf.mxu0
  %449 = vdwg.mxu0
  %v451 = vsel %vm205, %v344, 0
  %v454 = vsel %vm205, %v352, 0
  %456 = vmatprep.subr.bf16.mxu0 0
  %457 = vmatpush1.bf16.xpose.msra.mxu0 0
  %458 = vmatprep.subr.bf16.mxu0 0
  %459 = vmatpush1.bf16.xpose.msra.mxu0 0
  %460 = vmatprep.subr.bf16.mxu0 0
  %461 = vmatpush1.bf16.xpose.msra.mxu0 0
  %462 = vmatprep.subr.bf16.mxu0 0
  %463 = vmatpush1.bf16.xpose.msra.mxu0 0
  %464 = vmatprep.subr.bf16.mxu0 0
  %465 = vmatpush1.bf16.xpose.msra.mxu0 0
  %466 = vmatprep.subr.bf16.mxu0 0
  %467 = vmatpush1.bf16.xpose.msra.mxu0 0
  %468 = vmatprep.subr.bf16.mxu0 0
  %469 = vmatpush1.bf16.xpose.msra.mxu0 0
  %470 = vmatprep.subr.bf16.mxu0 0
  %471 = vmatpush1.bf16.xpose.msra.mxu0 %v454
  %472 = vmatprep.subr.bf16.mxu0 0
  %473 = vmatpush2.bf16.xpose.msra.mxu0 0
  %474 = vmatprep.subr.bf16.mxu0 0
  %475 = vmatpush2.bf16.xpose.msra.mxu0 0
  %476 = vmatprep.subr.bf16.mxu0 0
  %477 = vmatpush2.bf16.xpose.msra.mxu0 0
  %478 = vmatprep.subr.bf16.mxu0 0
  %479 = vmatpush2.bf16.xpose.msra.mxu0 0
  %480 = vmatprep.subr.bf16.mxu0 0
  %481 = vmatpush2.bf16.xpose.msra.mxu0 0
  %482 = vmatprep.subr.bf16.mxu0 0
  %483 = vmatpush2.bf16.xpose.msra.mxu0 0
  %484 = vmatprep.subr.bf16.mxu0 0
  %485 = vmatpush2.bf16.xpose.msra.mxu0 0
  %486 = vmatprep.subr.bf16.mxu0 0
  %487 = vmatpush2.bf16.xpose.msra.mxu0 0
  %488 = vmatprep.mubr.bf16.mxu0 0
  %489 = vmatmul.mubr.bf16.gmra.mxu0 %v451
  %v490 = vpop.f32.mrf.mxu0
  %v491 = vadd.f32 0.0, %v490
  %v492 = vpop.f32.mrf.mxu0
  %v493 = vpop.f32.mrf.mxu0
  %v494 = vpop.f32.mrf.mxu0
  %495 = vdwg.mxu0
  %v497 = vsel %vm205, %v345, 0
  %v500 = vsel %vm205, %v353, 0
  %502 = vmatprep.subr.bf16.mxu0 0
  %503 = vmatpush1.bf16.xpose.msra.mxu0 0
  %504 = vmatprep.subr.bf16.mxu0 0
  %505 = vmatpush1.bf16.xpose.msra.mxu0 0
  %506 = vmatprep.subr.bf16.mxu0 0
  %507 = vmatpush1.bf16.xpose.msra.mxu0 0
  %508 = vmatprep.subr.bf16.mxu0 0
  %509 = vmatpush1.bf16.xpose.msra.mxu0 0
  %510 = vmatprep.subr.bf16.mxu0 0
  %511 = vmatpush1.bf16.xpose.msra.mxu0 0
  %512 = vmatprep.subr.bf16.mxu0 0
  %513 = vmatpush1.bf16.xpose.msra.mxu0 0
  %514 = vmatprep.subr.bf16.mxu0 0
  %515 = vmatpush1.bf16.xpose.msra.mxu0 0
  %516 = vmatprep.subr.bf16.mxu0 0
  %517 = vmatpush1.bf16.xpose.msra.mxu0 %v500
  %518 = vmatprep.subr.bf16.mxu0 0
  %519 = vmatpush2.bf16.xpose.msra.mxu0 0
  %520 = vmatprep.subr.bf16.mxu0 0
  %521 = vmatpush2.bf16.xpose.msra.mxu0 0
  %522 = vmatprep.subr.bf16.mxu0 0
  %523 = vmatpush2.bf16.xpose.msra.mxu0 0
  %524 = vmatprep.subr.bf16.mxu0 0
  %525 = vmatpush2.bf16.xpose.msra.mxu0 0
  %526 = vmatprep.subr.bf16.mxu0 0
  %527 = vmatpush2.bf16.xpose.msra.mxu0 0
  %528 = vmatprep.subr.bf16.mxu0 0
  %529 = vmatpush2.bf16.xpose.msra.mxu0 0
  %530 = vmatprep.subr.bf16.mxu0 0
  %531 = vmatpush2.bf16.xpose.msra.mxu0 0
  %532 = vmatprep.subr.bf16.mxu0 0
  %533 = vmatpush2.bf16.xpose.msra.mxu0 0
  %534 = vmatprep.mubr.bf16.mxu0 0
  %535 = vmatmul.mubr.bf16.gmra.mxu0 %v497
  %v536 = vpop.f32.mrf.mxu0
  %v537 = vadd.f32 0.0, %v536
  %v538 = vpop.f32.mrf.mxu0
  %v539 = vpop.f32.mrf.mxu0
  %v540 = vpop.f32.mrf.mxu0
  %541 = vdwg.mxu0
  %v543 = vsel %vm205, %v346, 0
  %v546 = vsel %vm205, %v354, 0
  %548 = vmatprep.subr.bf16.mxu0 0
  %549 = vmatpush1.bf16.xpose.msra.mxu0 0
  %550 = vmatprep.subr.bf16.mxu0 0
  %551 = vmatpush1.bf16.xpose.msra.mxu0 0
  %552 = vmatprep.subr.bf16.mxu0 0
  %553 = vmatpush1.bf16.xpose.msra.mxu0 0
  %554 = vmatprep.subr.bf16.mxu0 0
  %555 = vmatpush1.bf16.xpose.msra.mxu0 0
  %556 = vmatprep.subr.bf16.mxu0 0
  %557 = vmatpush1.bf16.xpose.msra.mxu0 0
  %558 = vmatprep.subr.bf16.mxu0 0
  %559 = vmatpush1.bf16.xpose.msra.mxu0 0
  %560 = vmatprep.subr.bf16.mxu0 0
  %561 = vmatpush1.bf16.xpose.msra.mxu0 0
  %562 = vmatprep.subr.bf16.mxu0 0
  %563 = vmatpush1.bf16.xpose.msra.mxu0 %v546
  %564 = vmatprep.subr.bf16.mxu0 0
  %565 = vmatpush2.bf16.xpose.msra.mxu0 0
  %566 = vmatprep.subr.bf16.mxu0 0
  %567 = vmatpush2.bf16.xpose.msra.mxu0 0
  %568 = vmatprep.subr.bf16.mxu0 0
  %569 = vmatpush2.bf16.xpose.msra.mxu0 0
  %570 = vmatprep.subr.bf16.mxu0 0
  %571 = vmatpush2.bf16.xpose.msra.mxu0 0
  %572 = vmatprep.subr.bf16.mxu0 0
  %573 = vmatpush2.bf16.xpose.msra.mxu0 0
  %574 = vmatprep.subr.bf16.mxu0 0
  %575 = vmatpush2.bf16.xpose.msra.mxu0 0
  %576 = vmatprep.subr.bf16.mxu0 0
  %577 = vmatpush2.bf16.xpose.msra.mxu0 0
  %578 = vmatprep.subr.bf16.mxu0 0
  %579 = vmatpush2.bf16.xpose.msra.mxu0 0
  %580 = vmatprep.mubr.bf16.mxu0 0
  %581 = vmatmul.mubr.bf16.gmra.mxu0 %v543
  %v582 = vpop.f32.mrf.mxu0
  %v583 = vadd.f32 0.0, %v582
  %v584 = vpop.f32.mrf.mxu0
  %v585 = vpop.f32.mrf.mxu0
  %v586 = vpop.f32.mrf.mxu0
  %587 = vdwg.mxu0
  %v589 = vsel %vm205, %v347, 0
  %v592 = vsel %vm205, %v355, 0
  %594 = vmatprep.subr.bf16.mxu0 0
  %595 = vmatpush1.bf16.xpose.msra.mxu0 0
  %596 = vmatprep.subr.bf16.mxu0 0
  %597 = vmatpush1.bf16.xpose.msra.mxu0 0
  %598 = vmatprep.subr.bf16.mxu0 0
  %599 = vmatpush1.bf16.xpose.msra.mxu0 0
  %600 = vmatprep.subr.bf16.mxu0 0
  %601 = vmatpush1.bf16.xpose.msra.mxu0 0
  %602 = vmatprep.subr.bf16.mxu0 0
  %603 = vmatpush1.bf16.xpose.msra.mxu0 0
  %604 = vmatprep.subr.bf16.mxu0 0
  %605 = vmatpush1.bf16.xpose.msra.mxu0 0
  %606 = vmatprep.subr.bf16.mxu0 0
  %607 = vmatpush1.bf16.xpose.msra.mxu0 0
  %608 = vmatprep.subr.bf16.mxu0 0
  %609 = vmatpush1.bf16.xpose.msra.mxu0 %v592
  %610 = vmatprep.subr.bf16.mxu0 0
  %611 = vmatpush2.bf16.xpose.msra.mxu0 0
  %612 = vmatprep.subr.bf16.mxu0 0
  %613 = vmatpush2.bf16.xpose.msra.mxu0 0
  %614 = vmatprep.subr.bf16.mxu0 0
  %615 = vmatpush2.bf16.xpose.msra.mxu0 0
  %616 = vmatprep.subr.bf16.mxu0 0
  %617 = vmatpush2.bf16.xpose.msra.mxu0 0
  %618 = vmatprep.subr.bf16.mxu0 0
  %619 = vmatpush2.bf16.xpose.msra.mxu0 0
  %620 = vmatprep.subr.bf16.mxu0 0
  %621 = vmatpush2.bf16.xpose.msra.mxu0 0
  %622 = vmatprep.subr.bf16.mxu0 0
  %623 = vmatpush2.bf16.xpose.msra.mxu0 0
  %624 = vmatprep.subr.bf16.mxu0 0
  %625 = vmatpush2.bf16.xpose.msra.mxu0 0
  %626 = vmatprep.mubr.bf16.mxu0 0
  %627 = vmatmul.mubr.bf16.gmra.mxu0 %v589
  %v628 = vpop.f32.mrf.mxu0
  %v629 = vadd.f32 0.0, %v628
  %v630 = vpop.f32.mrf.mxu0
  %v631 = vpop.f32.mrf.mxu0
  %v632 = vpop.f32.mrf.mxu0
  %633 = vdwg.mxu0
  %v635 = vsel %vm205, %v348, 0
  %v638 = vsel %vm205, %v356, 0
  %640 = vmatprep.subr.bf16.mxu0 0
  %641 = vmatpush1.bf16.xpose.msra.mxu0 0
  %642 = vmatprep.subr.bf16.mxu0 0
  %643 = vmatpush1.bf16.xpose.msra.mxu0 0
  %644 = vmatprep.subr.bf16.mxu0 0
  %645 = vmatpush1.bf16.xpose.msra.mxu0 0
  %646 = vmatprep.subr.bf16.mxu0 0
  %647 = vmatpush1.bf16.xpose.msra.mxu0 0
  %648 = vmatprep.subr.bf16.mxu0 0
  %649 = vmatpush1.bf16.xpose.msra.mxu0 0
  %650 = vmatprep.subr.bf16.mxu0 0
  %651 = vmatpush1.bf16.xpose.msra.mxu0 0
  %652 = vmatprep.subr.bf16.mxu0 0
  %653 = vmatpush1.bf16.xpose.msra.mxu0 0
  %654 = vmatprep.subr.bf16.mxu0 0
  %655 = vmatpush1.bf16.xpose.msra.mxu0 %v638
  %656 = vmatprep.subr.bf16.mxu0 0
  %657 = vmatpush2.bf16.xpose.msra.mxu0 0
  %658 = vmatprep.subr.bf16.mxu0 0
  %659 = vmatpush2.bf16.xpose.msra.mxu0 0
  %660 = vmatprep.subr.bf16.mxu0 0
  %661 = vmatpush2.bf16.xpose.msra.mxu0 0
  %662 = vmatprep.subr.bf16.mxu0 0
  %663 = vmatpush2.bf16.xpose.msra.mxu0 0
  %664 = vmatprep.subr.bf16.mxu0 0
  %665 = vmatpush2.bf16.xpose.msra.mxu0 0
  %666 = vmatprep.subr.bf16.mxu0 0
  %667 = vmatpush2.bf16.xpose.msra.mxu0 0
  %668 = vmatprep.subr.bf16.mxu0 0
  %669 = vmatpush2.bf16.xpose.msra.mxu0 0
  %670 = vmatprep.subr.bf16.mxu0 0
  %671 = vmatpush2.bf16.xpose.msra.mxu0 0
  %672 = vmatprep.mubr.bf16.mxu0 0
  %673 = vmatmul.mubr.bf16.gmra.mxu0 %v635
  %v674 = vpop.f32.mrf.mxu0
  %v675 = vadd.f32 0.0, %v674
  %v676 = vpop.f32.mrf.mxu0
  %v677 = vpop.f32.mrf.mxu0
  %v678 = vpop.f32.mrf.mxu0
  %679 = vdwg.mxu0
  %v681 = vsel %vm205, %v349, 0
  %v684 = vsel %vm205, %v357, 0
  %686 = vmatprep.subr.bf16.mxu0 0
  %687 = vmatpush1.bf16.xpose.msra.mxu0 0
  %688 = vmatprep.subr.bf16.mxu0 0
  %689 = vmatpush1.bf16.xpose.msra.mxu0 0
  %690 = vmatprep.subr.bf16.mxu0 0
  %691 = vmatpush1.bf16.xpose.msra.mxu0 0
  %692 = vmatprep.subr.bf16.mxu0 0
  %693 = vmatpush1.bf16.xpose.msra.mxu0 0
  %694 = vmatprep.subr.bf16.mxu0 0
  %695 = vmatpush1.bf16.xpose.msra.mxu0 0
  %696 = vmatprep.subr.bf16.mxu0 0
  %697 = vmatpush1.bf16.xpose.msra.mxu0 0
  %698 = vmatprep.subr.bf16.mxu0 0
  %699 = vmatpush1.bf16.xpose.msra.mxu0 0
  %700 = vmatprep.subr.bf16.mxu0 0
  %701 = vmatpush1.bf16.xpose.msra.mxu0 %v684
  %702 = vmatprep.subr.bf16.mxu0 0
  %703 = vmatpush2.bf16.xpose.msra.mxu0 0
  %704 = vmatprep.subr.bf16.mxu0 0
  %705 = vmatpush2.bf16.xpose.msra.mxu0 0
  %706 = vmatprep.subr.bf16.mxu0 0
  %707 = vmatpush2.bf16.xpose.msra.mxu0 0
  %708 = vmatprep.subr.bf16.mxu0 0
  %709 = vmatpush2.bf16.xpose.msra.mxu0 0
  %710 = vmatprep.subr.bf16.mxu0 0
  %711 = vmatpush2.bf16.xpose.msra.mxu0 0
  %712 = vmatprep.subr.bf16.mxu0 0
  %713 = vmatpush2.bf16.xpose.msra.mxu0 0
  %714 = vmatprep.subr.bf16.mxu0 0
  %715 = vmatpush2.bf16.xpose.msra.mxu0 0
  %716 = vmatprep.subr.bf16.mxu0 0
  %717 = vmatpush2.bf16.xpose.msra.mxu0 0
  %718 = vmatprep.mubr.bf16.mxu0 0
  %719 = vmatmul.mubr.bf16.gmra.mxu0 %v681
  %v720 = vpop.f32.mrf.mxu0
  %v721 = vadd.f32 0.0, %v720
  %v722 = vpop.f32.mrf.mxu0
  %v723 = vpop.f32.mrf.mxu0
  %v724 = vpop.f32.mrf.mxu0
  %725 = vdwg.mxu0
  %v726 = vlaneseq
  %v727 = vshrl.u32 %v726, 7
  %v728 = vsub.s32 0, %v727
  %v729 = vrot.slane %v399, %v728
  %v730 = vlaneseq
  %v731 = vshrl.u32 %v730, 7
  %v732 = vsub.s32 0, %v731
  %v733 = vrot.slane %v445, %v732
  %v734 = vlaneseq
  %v735 = vshrl.u32 %v734, 7
  %v736 = vsub.s32 0, %v735
  %v737 = vrot.slane %v491, %v736
  %v738 = vlaneseq
  %v739 = vshrl.u32 %v738, 7
  %v740 = vsub.s32 0, %v739
  %v741 = vrot.slane %v537, %v740
  %v742 = vlaneseq
  %v743 = vshrl.u32 %v742, 7
  %v744 = vsub.s32 0, %v743
  %v745 = vrot.slane %v583, %v744
  %v746 = vlaneseq
  %v747 = vshrl.u32 %v746, 7
  %v748 = vsub.s32 0, %v747
  %v749 = vrot.slane %v629, %v748
  %v750 = vlaneseq
  %v751 = vshrl.u32 %v750, 7
  %v752 = vsub.s32 0, %v751
  %v753 = vrot.slane %v675, %v752
  %v754 = vlaneseq
  %v755 = vshrl.u32 %v754, 7
  %v756 = vsub.s32 0, %v755
  %v757 = vrot.slane %v721, %v756
  %v758 = vadd.f32 %v320, %v729
  %v759 = vadd.f32 %v323, %v733
  %v760 = vadd.f32 %v326, %v737
  %v761 = vadd.f32 %v329, %v741
  %v762 = vadd.f32 %v332, %v745
  %v763 = vadd.f32 %v335, %v749
  %v764 = vadd.f32 %v338, %v753
  %v765 = vadd.f32 %v341, %v757
  %vm766 = vcmp.gt.f32.partialorder %v758, 0.0
  %vm767 = vcmp.gt.f32.partialorder %v759, 0.0
  %vm768 = vcmp.gt.f32.partialorder %v760, 0.0
  %vm769 = vcmp.gt.f32.partialorder %v761, 0.0
  %vm770 = vcmp.gt.f32.partialorder %v762, 0.0
  %vm771 = vcmp.gt.f32.partialorder %v763, 0.0
  %vm772 = vcmp.gt.f32.partialorder %v764, 0.0
  %vm773 = vcmp.gt.f32.partialorder %v765, 0.0
  %v774 = vmul.f32 %v758, 0.2
  %v775 = vmul.f32 %v759, 0.2
  %v776 = vmul.f32 %v760, 0.2
  %v777 = vmul.f32 %v761, 0.2
  %v778 = vmul.f32 %v762, 0.2
  %v779 = vmul.f32 %v763, 0.2
  %v780 = vmul.f32 %v764, 0.2
  %v781 = vmul.f32 %v765, 0.2
  %v782 = vsel %vm766, %v758, %v774
  %v783 = vsel %vm767, %v759, %v775
  %v784 = vsel %vm768, %v760, %v776
  %v785 = vsel %vm769, %v761, %v777
  %v786 = vsel %vm770, %v762, %v778
  %v787 = vsel %vm771, %v763, %v779
  %v788 = vsel %vm772, %v764, %v780
  %v789 = vsel %vm773, %v765, %v781
  %v790 = vld [vmem:[%s1] sm:$0xff]
  %v791 = vadd.f32 %v782, %v790
  %v792 = vadd.f32 %v783, %v790
  %v793 = vadd.f32 %v784, %v790
  %v794 = vadd.f32 %v785, %v790
  %v795 = vadd.f32 %v786, %v790
  %v796 = vadd.f32 %v787, %v790
  %v797 = vadd.f32 %v788, %v790
  %v798 = vadd.f32 %v789, %v790
  %vm799 = vcmask 64512
  %v800 = vsel %vm799, %v791, -inf
  %801 = vmax.xlane.f32.xlu0 %v800
  %v802 = vpop.xlane.xlu0 %801
  %v803 = vsel %vm799, %v792, -inf
  %804 = vmax.xlane.f32.xlu0 %v803
  %v805 = vpop.xlane.xlu0 %804
  %v806 = vsel %vm799, %v793, -inf
  %807 = vmax.xlane.f32.xlu0 %v806
  %v808 = vpop.xlane.xlu0 %807
  %v809 = vsel %vm799, %v794, -inf
  %810 = vmax.xlane.f32.xlu0 %v809
  %v811 = vpop.xlane.xlu0 %810
  %v812 = vsel %vm799, %v795, -inf
  %813 = vmax.xlane.f32.xlu0 %v812
  %v814 = vpop.xlane.xlu0 %813
  %v815 = vsel %vm799, %v796, -inf
  %816 = vmax.xlane.f32.xlu0 %v815
  %v817 = vpop.xlane.xlu0 %816
  %v818 = vsel %vm799, %v797, -inf
  %819 = vmax.xlane.f32.xlu0 %v818
  %v820 = vpop.xlane.xlu0 %819
  %v821 = vsel %vm799, %v798, -inf
  %822 = vmax.xlane.f32.xlu0 %v821
  %v823 = vpop.xlane.xlu0 %822
  %v824 = vsub.f32 %v791, %v802
  %v825 = vsub.f32 %v792, %v805
  %v826 = vsub.f32 %v793, %v808
  %v827 = vsub.f32 %v794, %v811
  %v828 = vsub.f32 %v795, %v814
  %v829 = vsub.f32 %v796, %v817
  %v830 = vsub.f32 %v797, %v820
  %v831 = vsub.f32 %v798, %v823
  %v832 = vmul.f32 %v824, 1.442695
  %v833 = vpow.pop %v832
  %v834 = vmul.f32 %v825, 1.442695
  %v835 = vpow.pop %v834
  %v836 = vmul.f32 %v826, 1.442695
  %v837 = vpow.pop %v836
  %v838 = vmul.f32 %v827, 1.442695
  %v839 = vpow.pop %v838
  %v840 = vmul.f32 %v828, 1.442695
  %v841 = vpow.pop %v840
  %v842 = vmul.f32 %v829, 1.442695
  %v843 = vpow.pop %v842
  %v844 = vmul.f32 %v830, 1.442695
  %v845 = vpow.pop %v844
  %v846 = vmul.f32 %v831, 1.442695
  %v847 = vpow.pop %v846
  %v848 = vsel %vm799, %v833, 0.0
  %849 = vadd.xlane.f32.xlu0 %v848
  %v850 = vpop.xlane.xlu0 %849
  %v851 = vsel %vm799, %v835, 0.0
  %852 = vadd.xlane.f32.xlu0 %v851
  %v853 = vpop.xlane.xlu0 %852
  %v854 = vsel %vm799, %v837, 0.0
  %855 = vadd.xlane.f32.xlu0 %v854
  %v856 = vpop.xlane.xlu0 %855
  %v857 = vsel %vm799, %v839, 0.0
  %858 = vadd.xlane.f32.xlu0 %v857
  %v859 = vpop.xlane.xlu0 %858
  %v860 = vsel %vm799, %v841, 0.0
  %861 = vadd.xlane.f32.xlu0 %v860
  %v862 = vpop.xlane.xlu0 %861
  %v863 = vsel %vm799, %v843, 0.0
  %864 = vadd.xlane.f32.xlu0 %v863
  %v865 = vpop.xlane.xlu0 %864
  %v866 = vsel %vm799, %v845, 0.0
  %867 = vadd.xlane.f32.xlu0 %v866
  %v868 = vpop.xlane.xlu0 %867
  %v869 = vsel %vm799, %v847, 0.0
  %870 = vadd.xlane.f32.xlu0 %v869
  %v871 = vpop.xlane.xlu0 %870
  %v872 = vrcp.pop %v850
  %v873 = vrcp.pop %v853
  %v874 = vrcp.pop %v856
  %v875 = vrcp.pop %v859
  %v876 = vrcp.pop %v862
  %v877 = vrcp.pop %v865
  %v878 = vrcp.pop %v868
  %v879 = vrcp.pop %v871
  %v880 = vmul.f32 %v833, %v872
  %v881 = vmul.f32 %v835, %v873
  %v882 = vmul.f32 %v837, %v874
  %v883 = vmul.f32 %v839, %v875
  %v884 = vmul.f32 %v841, %v876
  %v885 = vmul.f32 %v843, %v877
  %v886 = vmul.f32 %v845, %v878
  %v887 = vmul.f32 %v847, %v879
  %v888 = vpack.c.bf16 %v880, %v880
  %v889 = vpack.c.bf16 %v881, %v881
  %v890 = vpack.c.bf16 %v882, %v882
  %v891 = vpack.c.bf16 %v883, %v883
  %v892 = vpack.c.bf16 %v884, %v884
  %v893 = vpack.c.bf16 %v885, %v885
  %v894 = vpack.c.bf16 %v886, %v886
  %v895 = vpack.c.bf16 %v887, %v887
  %v896 = vlaneseq
  %v897 = vshrl.u32 %v896, 7
  %v898 = vsub.s32 0, %v897
  %v899 = vrot.slane %v174, %v898
  %v900 = vlaneseq
  %v901 = vshrl.u32 %v900, 7
  %v902 = vsub.s32 0, %v901
  %v903 = vrot.slane %v188, %v902
  %v904 = vlaneseq
  %v905 = vshrl.u32 %v904, 7
  %v906 = vsub.s32 0, %v905
  %v907 = vrot.slane %v196, %v906
  %v908 = vlaneseq
  %v909 = vshrl.u32 %v908, 7
  %v910 = vsub.s32 0, %v909
  %v911 = vrot.slane %v198, %v910
  %v912 = vlaneseq
  %v913 = vshrl.u32 %v912, 7
  %v914 = vsub.s32 0, %v913
  %v915 = vrot.slane %v181, %v914
  %v916 = vlaneseq
  %v917 = vshrl.u32 %v916, 7
  %v918 = vsub.s32 0, %v917
  %v919 = vrot.slane %v195, %v918
  %v920 = vlaneseq
  %v921 = vshrl.u32 %v920, 7
  %v922 = vsub.s32 0, %v921
  %v923 = vrot.slane %v197, %v922
  %v924 = vlaneseq
  %v925 = vshrl.u32 %v924, 7
  %v926 = vsub.s32 0, %v925
  %v927 = vrot.slane %v199, %v926
  %v937 = vsel %vm799, %v888, 0
  %vm939 = vcmask 1043456
  %v940 = vsel %vm939, %v350, 0
  %942 = vmatprep.subr.bf16.mxu0 0
  %943 = vmatpush1.bf16.msra.mxu0 0
  %944 = vmatprep.subr.bf16.mxu0 0
  %945 = vmatpush1.bf16.msra.mxu0 0
  %946 = vmatprep.subr.bf16.mxu0 0
  %947 = vmatpush1.bf16.msra.mxu0 0
  %948 = vmatprep.subr.bf16.mxu0 0
  %949 = vmatpush1.bf16.msra.mxu0 0
  %950 = vmatprep.subr.bf16.mxu0 0
  %951 = vmatpush1.bf16.msra.mxu0 0
  %952 = vmatprep.subr.bf16.mxu0 0
  %953 = vmatpush1.bf16.msra.mxu0 0
  %954 = vmatprep.subr.bf16.mxu0 0
  %955 = vmatpush1.bf16.msra.mxu0 0
  %956 = vmatprep.subr.bf16.mxu0 0
  %957 = vmatpush1.bf16.msra.mxu0 %v940
  %958 = vmatprep.subr.bf16.mxu0 0
  %959 = vmatpush2.bf16.msra.mxu0 0
  %960 = vmatprep.subr.bf16.mxu0 0
  %961 = vmatpush2.bf16.msra.mxu0 0
  %962 = vmatprep.subr.bf16.mxu0 0
  %963 = vmatpush2.bf16.msra.mxu0 0
  %964 = vmatprep.subr.bf16.mxu0 0
  %965 = vmatpush2.bf16.msra.mxu0 0
  %966 = vmatprep.subr.bf16.mxu0 0
  %967 = vmatpush2.bf16.msra.mxu0 0
  %968 = vmatprep.subr.bf16.mxu0 0
  %969 = vmatpush2.bf16.msra.mxu0 0
  %970 = vmatprep.subr.bf16.mxu0 0
  %971 = vmatpush2.bf16.msra.mxu0 0
  %972 = vmatprep.subr.bf16.mxu0 0
  %973 = vmatpush2.bf16.msra.mxu0 0
  %974 = vmatprep.mubr.bf16.mxu0 0
  %975 = vmatmul.mubr.bf16.gmra.mxu0 %v937
  %v976 = vpop.f32.mrf.mxu0
  %v977 = vadd.f32 %v899, %v976
  %v978 = vpop.f32.mrf.mxu0
  %v979 = vpop.f32.mrf.mxu0
  %v980 = vpop.f32.mrf.mxu0
  %981 = vdwg.mxu0
  %v983 = vsel %vm799, %v889, 0
  %v985 = vsel %vm939, %v351, 0
  %987 = vmatprep.subr.bf16.mxu0 0
  %988 = vmatpush1.bf16.msra.mxu0 0
  %989 = vmatprep.subr.bf16.mxu0 0
  %990 = vmatpush1.bf16.msra.mxu0 0
  %991 = vmatprep.subr.bf16.mxu0 0
  %992 = vmatpush1.bf16.msra.mxu0 0
  %993 = vmatprep.subr.bf16.mxu0 0
  %994 = vmatpush1.bf16.msra.mxu0 0
  %995 = vmatprep.subr.bf16.mxu0 0
  %996 = vmatpush1.bf16.msra.mxu0 0
  %997 = vmatprep.subr.bf16.mxu0 0
  %998 = vmatpush1.bf16.msra.mxu0 0
  %999 = vmatprep.subr.bf16.mxu0 0
  %1000 = vmatpush1.bf16.msra.mxu0 0
  %1001 = vmatprep.subr.bf16.mxu0 0
  %1002 = vmatpush1.bf16.msra.mxu0 %v985
  %1003 = vmatprep.subr.bf16.mxu0 0
  %1004 = vmatpush2.bf16.msra.mxu0 0
  %1005 = vmatprep.subr.bf16.mxu0 0
  %1006 = vmatpush2.bf16.msra.mxu0 0
  %1007 = vmatprep.subr.bf16.mxu0 0
  %1008 = vmatpush2.bf16.msra.mxu0 0
  %1009 = vmatprep.subr.bf16.mxu0 0
  %1010 = vmatpush2.bf16.msra.mxu0 0
  %1011 = vmatprep.subr.bf16.mxu0 0
  %1012 = vmatpush2.bf16.msra.mxu0 0
  %1013 = vmatprep.subr.bf16.mxu0 0
  %1014 = vmatpush2.bf16.msra.mxu0 0
  %1015 = vmatprep.subr.bf16.mxu0 0
  %1016 = vmatpush2.bf16.msra.mxu0 0
  %1017 = vmatprep.subr.bf16.mxu0 0
  %1018 = vmatpush2.bf16.msra.mxu0 0
  %1019 = vmatprep.mubr.bf16.mxu0 0
  %1020 = vmatmul.mubr.bf16.gmra.mxu0 %v983
  %v1021 = vpop.f32.mrf.mxu0
  %v1022 = vadd.f32 %v903, %v1021
  %v1023 = vpop.f32.mrf.mxu0
  %v1024 = vpop.f32.mrf.mxu0
  %v1025 = vpop.f32.mrf.mxu0
  %1026 = vdwg.mxu0
  %v1028 = vsel %vm799, %v890, 0
  %v1030 = vsel %vm939, %v352, 0
  %1032 = vmatprep.subr.bf16.mxu0 0
  %1033 = vmatpush1.bf16.msra.mxu0 0
  %1034 = vmatprep.subr.bf16.mxu0 0
  %1035 = vmatpush1.bf16.msra.mxu0 0
  %1036 = vmatprep.subr.bf16.mxu0 0
  %1037 = vmatpush1.bf16.msra.mxu0 0
  %1038 = vmatprep.subr.bf16.mxu0 0
  %1039 = vmatpush1.bf16.msra.mxu0 0
  %1040 = vmatprep.subr.bf16.mxu0 0
  %1041 = vmatpush1.bf16.msra.mxu0 0
  %1042 = vmatprep.subr.bf16.mxu0 0
  %1043 = vmatpush1.bf16.msra.mxu0 0
  %1044 = vmatprep.subr.bf16.mxu0 0
  %1045 = vmatpush1.bf16.msra.mxu0 0
  %1046 = vmatprep.subr.bf16.mxu0 0
  %1047 = vmatpush1.bf16.msra.mxu0 %v1030
  %1048 = vmatprep.subr.bf16.mxu0 0
  %1049 = vmatpush2.bf16.msra.mxu0 0
  %1050 = vmatprep.subr.bf16.mxu0 0
  %1051 = vmatpush2.bf16.msra.mxu0 0
  %1052 = vmatprep.subr.bf16.mxu0 0
  %1053 = vmatpush2.bf16.msra.mxu0 0
  %1054 = vmatprep.subr.bf16.mxu0 0
  %1055 = vmatpush2.bf16.msra.mxu0 0
  %1056 = vmatprep.subr.bf16.mxu0 0
  %1057 = vmatpush2.bf16.msra.mxu0 0
  %1058 = vmatprep.subr.bf16.mxu0 0
  %1059 = vmatpush2.bf16.msra.mxu0 0
  %1060 = vmatprep.subr.bf16.mxu0 0
  %1061 = vmatpush2.bf16.msra.mxu0 0
  %1062 = vmatprep.subr.bf16.mxu0 0
  %1063 = vmatpush2.bf16.msra.mxu0 0
  %1064 = vmatprep.mubr.bf16.mxu0 0
  %1065 = vmatmul.mubr.bf16.gmra.mxu0 %v1028
  %v1066 = vpop.f32.mrf.mxu0
  %v1067 = vadd.f32 %v907, %v1066
  %v1068 = vpop.f32.mrf.mxu0
  %v1069 = vpop.f32.mrf.mxu0
  %v1070 = vpop.f32.mrf.mxu0
  %1071 = vdwg.mxu0
  %v1073 = vsel %vm799, %v891, 0
  %v1075 = vsel %vm939, %v353, 0
  %1077 = vmatprep.subr.bf16.mxu0 0
  %1078 = vmatpush1.bf16.msra.mxu0 0
  %1079 = vmatprep.subr.bf16.mxu0 0
  %1080 = vmatpush1.bf16.msra.mxu0 0
  %1081 = vmatprep.subr.bf16.mxu0 0
  %1082 = vmatpush1.bf16.msra.mxu0 0
  %1083 = vmatprep.subr.bf16.mxu0 0
  %1084 = vmatpush1.bf16.msra.mxu0 0
  %1085 = vmatprep.subr.bf16.mxu0 0
  %1086 = vmatpush1.bf16.msra.mxu0 0
  %1087 = vmatprep.subr.bf16.mxu0 0
  %1088 = vmatpush1.bf16.msra.mxu0 0
  %1089 = vmatprep.subr.bf16.mxu0 0
  %1090 = vmatpush1.bf16.msra.mxu0 0
  %1091 = vmatprep.subr.bf16.mxu0 0
  %1092 = vmatpush1.bf16.msra.mxu0 %v1075
  %1093 = vmatprep.subr.bf16.mxu0 0
  %1094 = vmatpush2.bf16.msra.mxu0 0
  %1095 = vmatprep.subr.bf16.mxu0 0
  %1096 = vmatpush2.bf16.msra.mxu0 0
  %1097 = vmatprep.subr.bf16.mxu0 0
  %1098 = vmatpush2.bf16.msra.mxu0 0
  %1099 = vmatprep.subr.bf16.mxu0 0
  %1100 = vmatpush2.bf16.msra.mxu0 0
  %1101 = vmatprep.subr.bf16.mxu0 0
  %1102 = vmatpush2.bf16.msra.mxu0 0
  %1103 = vmatprep.subr.bf16.mxu0 0
  %1104 = vmatpush2.bf16.msra.mxu0 0
  %1105 = vmatprep.subr.bf16.mxu0 0
  %1106 = vmatpush2.bf16.msra.mxu0 0
  %1107 = vmatprep.subr.bf16.mxu0 0
  %1108 = vmatpush2.bf16.msra.mxu0 0
  %1109 = vmatprep.mubr.bf16.mxu0 0
  %1110 = vmatmul.mubr.bf16.gmra.mxu0 %v1073
  %v1111 = vpop.f32.mrf.mxu0
  %v1112 = vadd.f32 %v911, %v1111
  %v1113 = vpop.f32.mrf.mxu0
  %v1114 = vpop.f32.mrf.mxu0
  %v1115 = vpop.f32.mrf.mxu0
  %1116 = vdwg.mxu0
  %v1118 = vsel %vm799, %v892, 0
  %v1120 = vsel %vm939, %v354, 0
  %1122 = vmatprep.subr.bf16.mxu0 0
  %1123 = vmatpush1.bf16.msra.mxu0 0
  %1124 = vmatprep.subr.bf16.mxu0 0
  %1125 = vmatpush1.bf16.msra.mxu0 0
  %1126 = vmatprep.subr.bf16.mxu0 0
  %1127 = vmatpush1.bf16.msra.mxu0 0
  %1128 = vmatprep.subr.bf16.mxu0 0
  %1129 = vmatpush1.bf16.msra.mxu0 0
  %1130 = vmatprep.subr.bf16.mxu0 0
  %1131 = vmatpush1.bf16.msra.mxu0 0
  %1132 = vmatprep.subr.bf16.mxu0 0
  %1133 = vmatpush1.bf16.msra.mxu0 0
  %1134 = vmatprep.subr.bf16.mxu0 0
  %1135 = vmatpush1.bf16.msra.mxu0 0
  %1136 = vmatprep.subr.bf16.mxu0 0
  %1137 = vmatpush1.bf16.msra.mxu0 %v1120
  %1138 = vmatprep.subr.bf16.mxu0 0
  %1139 = vmatpush2.bf16.msra.mxu0 0
  %1140 = vmatprep.subr.bf16.mxu0 0
  %1141 = vmatpush2.bf16.msra.mxu0 0
  %1142 = vmatprep.subr.bf16.mxu0 0
  %1143 = vmatpush2.bf16.msra.mxu0 0
  %1144 = vmatprep.subr.bf16.mxu0 0
  %1145 = vmatpush2.bf16.msra.mxu0 0
  %1146 = vmatprep.subr.bf16.mxu0 0
  %1147 = vmatpush2.bf16.msra.mxu0 0
  %1148 = vmatprep.subr.bf16.mxu0 0
  %1149 = vmatpush2.bf16.msra.mxu0 0
  %1150 = vmatprep.subr.bf16.mxu0 0
  %1151 = vmatpush2.bf16.msra.mxu0 0
  %1152 = vmatprep.subr.bf16.mxu0 0
  %1153 = vmatpush2.bf16.msra.mxu0 0
  %1154 = vmatprep.mubr.bf16.mxu0 0
  %1155 = vmatmul.mubr.bf16.gmra.mxu0 %v1118
  %v1156 = vpop.f32.mrf.mxu0
  %v1157 = vadd.f32 %v915, %v1156
  %v1158 = vpop.f32.mrf.mxu0
  %v1159 = vpop.f32.mrf.mxu0
  %v1160 = vpop.f32.mrf.mxu0
  %1161 = vdwg.mxu0
  %v1163 = vsel %vm799, %v893, 0
  %v1165 = vsel %vm939, %v355, 0
  %1167 = vmatprep.subr.bf16.mxu0 0
  %1168 = vmatpush1.bf16.msra.mxu0 0
  %1169 = vmatprep.subr.bf16.mxu0 0
  %1170 = vmatpush1.bf16.msra.mxu0 0
  %1171 = vmatprep.subr.bf16.mxu0 0
  %1172 = vmatpush1.bf16.msra.mxu0 0
  %1173 = vmatprep.subr.bf16.mxu0 0
  %1174 = vmatpush1.bf16.msra.mxu0 0
  %1175 = vmatprep.subr.bf16.mxu0 0
  %1176 = vmatpush1.bf16.msra.mxu0 0
  %1177 = vmatprep.subr.bf16.mxu0 0
  %1178 = vmatpush1.bf16.msra.mxu0 0
  %1179 = vmatprep.subr.bf16.mxu0 0
  %1180 = vmatpush1.bf16.msra.mxu0 0
  %1181 = vmatprep.subr.bf16.mxu0 0
  %1182 = vmatpush1.bf16.msra.mxu0 %v1165
  %1183 = vmatprep.subr.bf16.mxu0 0
  %1184 = vmatpush2.bf16.msra.mxu0 0
  %1185 = vmatprep.subr.bf16.mxu0 0
  %1186 = vmatpush2.bf16.msra.mxu0 0
  %1187 = vmatprep.subr.bf16.mxu0 0
  %1188 = vmatpush2.bf16.msra.mxu0 0
  %1189 = vmatprep.subr.bf16.mxu0 0
  %1190 = vmatpush2.bf16.msra.mxu0 0
  %1191 = vmatprep.subr.bf16.mxu0 0
  %1192 = vmatpush2.bf16.msra.mxu0 0
  %1193 = vmatprep.subr.bf16.mxu0 0
  %1194 = vmatpush2.bf16.msra.mxu0 0
  %1195 = vmatprep.subr.bf16.mxu0 0
  %1196 = vmatpush2.bf16.msra.mxu0 0
  %1197 = vmatprep.subr.bf16.mxu0 0
  %1198 = vmatpush2.bf16.msra.mxu0 0
  %1199 = vmatprep.mubr.bf16.mxu0 0
  %1200 = vmatmul.mubr.bf16.gmra.mxu0 %v1163
  %v1201 = vpop.f32.mrf.mxu0
  %v1202 = vadd.f32 %v919, %v1201
  %v1203 = vpop.f32.mrf.mxu0
  %v1204 = vpop.f32.mrf.mxu0
  %v1205 = vpop.f32.mrf.mxu0
  %1206 = vdwg.mxu0
  %v1208 = vsel %vm799, %v894, 0
  %v1210 = vsel %vm939, %v356, 0
  %1212 = vmatprep.subr.bf16.mxu0 0
  %1213 = vmatpush1.bf16.msra.mxu0 0
  %1214 = vmatprep.subr.bf16.mxu0 0
  %1215 = vmatpush1.bf16.msra.mxu0 0
  %1216 = vmatprep.subr.bf16.mxu0 0
  %1217 = vmatpush1.bf16.msra.mxu0 0
  %1218 = vmatprep.subr.bf16.mxu0 0
  %1219 = vmatpush1.bf16.msra.mxu0 0
  %1220 = vmatprep.subr.bf16.mxu0 0
  %1221 = vmatpush1.bf16.msra.mxu0 0
  %1222 = vmatprep.subr.bf16.mxu0 0
  %1223 = vmatpush1.bf16.msra.mxu0 0
  %1224 = vmatprep.subr.bf16.mxu0 0
  %1225 = vmatpush1.bf16.msra.mxu0 0
  %1226 = vmatprep.subr.bf16.mxu0 0
  %1227 = vmatpush1.bf16.msra.mxu0 %v1210
  %1228 = vmatprep.subr.bf16.mxu0 0
  %1229 = vmatpush2.bf16.msra.mxu0 0
  %1230 = vmatprep.subr.bf16.mxu0 0
  %1231 = vmatpush2.bf16.msra.mxu0 0
  %1232 = vmatprep.subr.bf16.mxu0 0
  %1233 = vmatpush2.bf16.msra.mxu0 0
  %1234 = vmatprep.subr.bf16.mxu0 0
  %1235 = vmatpush2.bf16.msra.mxu0 0
  %1236 = vmatprep.subr.bf16.mxu0 0
  %1237 = vmatpush2.bf16.msra.mxu0 0
  %1238 = vmatprep.subr.bf16.mxu0 0
  %1239 = vmatpush2.bf16.msra.mxu0 0
  %1240 = vmatprep.subr.bf16.mxu0 0
  %1241 = vmatpush2.bf16.msra.mxu0 0
  %1242 = vmatprep.subr.bf16.mxu0 0
  %1243 = vmatpush2.bf16.msra.mxu0 0
  %1244 = vmatprep.mubr.bf16.mxu0 0
  %1245 = vmatmul.mubr.bf16.gmra.mxu0 %v1208
  %v1246 = vpop.f32.mrf.mxu0
  %v1247 = vadd.f32 %v923, %v1246
  %v1248 = vpop.f32.mrf.mxu0
  %v1249 = vpop.f32.mrf.mxu0
  %v1250 = vpop.f32.mrf.mxu0
  %1251 = vdwg.mxu0
  %v1253 = vsel %vm799, %v895, 0
  %v1255 = vsel %vm939, %v357, 0
  %1257 = vmatprep.subr.bf16.mxu0 0
  %1258 = vmatpush1.bf16.msra.mxu0 0
  %1259 = vmatprep.subr.bf16.mxu0 0
  %1260 = vmatpush1.bf16.msra.mxu0 0
  %1261 = vmatprep.subr.bf16.mxu0 0
  %1262 = vmatpush1.bf16.msra.mxu0 0
  %1263 = vmatprep.subr.bf16.mxu0 0
  %1264 = vmatpush1.bf16.msra.mxu0 0
  %1265 = vmatprep.subr.bf16.mxu0 0
  %1266 = vmatpush1.bf16.msra.mxu0 0
  %1267 = vmatprep.subr.bf16.mxu0 0
  %1268 = vmatpush1.bf16.msra.mxu0 0
  %1269 = vmatprep.subr.bf16.mxu0 0
  %1270 = vmatpush1.bf16.msra.mxu0 0
  %1271 = vmatprep.subr.bf16.mxu0 0
  %1272 = vmatpush1.bf16.msra.mxu0 %v1255
  %1273 = vmatprep.subr.bf16.mxu0 0
  %1274 = vmatpush2.bf16.msra.mxu0 0
  %1275 = vmatprep.subr.bf16.mxu0 0
  %1276 = vmatpush2.bf16.msra.mxu0 0
  %1277 = vmatprep.subr.bf16.mxu0 0
  %1278 = vmatpush2.bf16.msra.mxu0 0
  %1279 = vmatprep.subr.bf16.mxu0 0
  %1280 = vmatpush2.bf16.msra.mxu0 0
  %1281 = vmatprep.subr.bf16.mxu0 0
  %1282 = vmatpush2.bf16.msra.mxu0 0
  %1283 = vmatprep.subr.bf16.mxu0 0
  %1284 = vmatpush2.bf16.msra.mxu0 0
  %1285 = vmatprep.subr.bf16.mxu0 0
  %1286 = vmatpush2.bf16.msra.mxu0 0
  %1287 = vmatprep.subr.bf16.mxu0 0
  %1288 = vmatpush2.bf16.msra.mxu0 0
  %1289 = vmatprep.mubr.bf16.mxu0 0
  %1290 = vmatmul.mubr.bf16.gmra.mxu0 %v1253
  %v1291 = vpop.f32.mrf.mxu0
  %v1292 = vadd.f32 %v927, %v1291
  %v1293 = vpop.f32.mrf.mxu0
  %v1294 = vpop.f32.mrf.mxu0
  %v1295 = vpop.f32.mrf.mxu0
  %1296 = vdwg.mxu0
  %vm1297 = vcmp.gt.f32.partialorder %v977, 0.0
  %vm1298 = vcmp.gt.f32.partialorder %v1022, 0.0
  %vm1299 = vcmp.gt.f32.partialorder %v1067, 0.0
  %vm1300 = vcmp.gt.f32.partialorder %v1112, 0.0
  %vm1301 = vcmp.gt.f32.partialorder %v1157, 0.0
  %vm1302 = vcmp.gt.f32.partialorder %v1202, 0.0
  %vm1303 = vcmp.gt.f32.partialorder %v1247, 0.0
  %vm1304 = vcmp.gt.f32.partialorder %v1292, 0.0
  %v1305 = vmul.f32 %v977, 1.442695
  %v1306 = vpow.pop %v1305
  %v1307 = vmul.f32 %v1022, 1.442695
  %v1308 = vpow.pop %v1307
  %v1309 = vmul.f32 %v1067, 1.442695
  %v1310 = vpow.pop %v1309
  %v1311 = vmul.f32 %v1112, 1.442695
  %v1312 = vpow.pop %v1311
  %v1313 = vmul.f32 %v1157, 1.442695
  %v1314 = vpow.pop %v1313
  %v1315 = vmul.f32 %v1202, 1.442695
  %v1316 = vpow.pop %v1315
  %v1317 = vmul.f32 %v1247, 1.442695
  %v1318 = vpow.pop %v1317
  %v1319 = vmul.f32 %v1292, 1.442695
  %v1320 = vpow.pop %v1319
  %v1321 = vsub.f32 %v1306, 1.0
  %v1322 = vsub.f32 %v1308, 1.0
  %v1323 = vsub.f32 %v1310, 1.0
  %v1324 = vsub.f32 %v1312, 1.0
  %v1325 = vsub.f32 %v1314, 1.0
  %v1326 = vsub.f32 %v1316, 1.0
  %v1327 = vsub.f32 %v1318, 1.0
  %v1328 = vsub.f32 %v1320, 1.0
  %v1329 = vsel %vm1297, %v977, %v1321
  %v1330 = vsel %vm1298, %v1022, %v1322
  %v1331 = vsel %vm1299, %v1067, %v1323
  %v1332 = vsel %vm1300, %v1112, %v1324
  %v1333 = vsel %vm1301, %v1157, %v1325
  %v1334 = vsel %vm1302, %v1202, %v1326
  %v1335 = vsel %vm1303, %v1247, %v1327
  %v1336 = vsel %vm1304, %v1292, %v1328
  %1338 = vrot.lane.b32.xlu0 %v1330, 32
  %v1339 = vpop.permute.xlu0 %1338
  %1342 = vrot.lane.b32.xlu0 %v1331, 64
  %v1343 = vpop.permute.xlu0 %1342
  %1346 = vrot.lane.b32.xlu0 %v1332, 96
  %v1347 = vpop.permute.xlu0 %1346
  %1350 = vrot.lane.b32.xlu0 %v1334, 32
  %v1351 = vpop.permute.xlu0 %1350
  %1354 = vrot.lane.b32.xlu0 %v1335, 64
  %v1355 = vpop.permute.xlu0 %1354
  %1358 = vrot.lane.b32.xlu0 %v1336, 96
  %v1359 = vpop.permute.xlu0 %1358
  %v1361 = vsel %vm205, %v1329, %v1339
  %vm1362 = vcmask 523264
  %v1363 = vsel %vm1362, %v1361, %v1343
  %vm1364 = vcmask 785408
  %v1365 = vsel %vm1364, %v1363, %v1347
  %v1366 = vsel %vm205, %v1333, %v1351
  %v1367 = vsel %vm1362, %v1366, %v1355
  %v1368 = vsel %vm1364, %v1367, %v1359
  %v1369 = vld [vmem:[%s6] sm:$0x1]
  %v1370 = vld [vmem:[%s6 + $0x1] sm:$0x1]
  %v1371 = vld [vmem:[%s6 + $0x2] sm:$0x1]
  %v1372 = vpack.c.bf16 %v1365, %v1365
  %v1373 = vpack.c.bf16 %v1368, %v1368
  %v1374 = vld [vmem:[%s5] sm:$0xff]
  %v1375 = vld [vmem:[%s5 + $0x8] sm:$0xff]
  %v1376 = vld [vmem:[%s5 + $0x10] sm:$0xff]
  %v1377 = vld [vmem:[%s5 + $0x18] sm:$0xff]
  %v1378 = vld [vmem:[%s5 + $0x20] sm:$0xff]
  %v1379 = vld [vmem:[%s5 + $0x28] sm:$0xff]
  %v1380 = vld [vmem:[%s5 + $0x30] sm:$0xff]
  %v1381 = vld [vmem:[%s5 + $0x38] sm:$0xff]
  %v1382 = vld [vmem:[%s5 + $0x40] sm:$0xff]
  %v1383 = vld [vmem:[%s5 + $0x48] sm:$0xff]
  %v1384 = vld [vmem:[%s5 + $0x50] sm:$0xff]
  %v1385 = vld [vmem:[%s5 + $0x58] sm:$0xff]
  %v1386 = vld [vmem:[%s5 + $0x60] sm:$0xff]
  %v1387 = vld [vmem:[%s5 + $0x68] sm:$0xff]
  %v1388 = vld [vmem:[%s5 + $0x70] sm:$0xff]
  %v1389 = vld [vmem:[%s5 + $0x78] sm:$0xff]
  %v1390 = vld [vmem:[%s5 + $0x80] sm:$0xff]
  %v1391 = vld [vmem:[%s5 + $0x88] sm:$0xff]
  %v1392 = vld [vmem:[%s5 + $0x90] sm:$0xff]
  %v1393 = vld [vmem:[%s5 + $0x98] sm:$0xff]
  %v1394 = vld [vmem:[%s5 + $0xa0] sm:$0xff]
  %v1395 = vld [vmem:[%s5 + $0xa8] sm:$0xff]
  %v1396 = vld [vmem:[%s5 + $0xb0] sm:$0xff]
  %v1397 = vld [vmem:[%s5 + $0xb8] sm:$0xff]
  %v1398 = vld [vmem:[%s5 + $0xc0] sm:$0xff]
  %v1399 = vld [vmem:[%s5 + $0xc8] sm:$0xff]
  %v1400 = vld [vmem:[%s5 + $0xd0] sm:$0xff]
  %v1401 = vld [vmem:[%s5 + $0xd8] sm:$0xff]
  %v1402 = vld [vmem:[%s5 + $0xe0] sm:$0xff]
  %v1403 = vld [vmem:[%s5 + $0xe8] sm:$0xff]
  %v1404 = vld [vmem:[%s5 + $0xf0] sm:$0xff]
  %v1405 = vld [vmem:[%s5 + $0xf8] sm:$0xff]
  %v1406 = vpack.c.bf16 %v1375, %v1374
  %v1407 = vpack.c.bf16 %v1377, %v1376
  %v1408 = vpack.c.bf16 %v1379, %v1378
  %v1409 = vpack.c.bf16 %v1381, %v1380
  %v1410 = vpack.c.bf16 %v1383, %v1382
  %v1411 = vpack.c.bf16 %v1385, %v1384
  %v1412 = vpack.c.bf16 %v1387, %v1386
  %v1413 = vpack.c.bf16 %v1389, %v1388
  %v1414 = vpack.c.bf16 %v1391, %v1390
  %v1415 = vpack.c.bf16 %v1393, %v1392
  %v1416 = vpack.c.bf16 %v1395, %v1394
  %v1417 = vpack.c.bf16 %v1397, %v1396
  %v1418 = vpack.c.bf16 %v1399, %v1398
  %v1419 = vpack.c.bf16 %v1401, %v1400
  %v1420 = vpack.c.bf16 %v1403, %v1402
  %v1421 = vpack.c.bf16 %v1405, %v1404
  %1422 = vmatprep.subr.bf16.mxu0 0
  %1423 = vmatpush1.bf16.msra.mxu0 %v1413
  %1424 = vmatprep.subr.bf16.mxu0 0
  %1425 = vmatpush1.bf16.msra.mxu0 %v1412
  %1426 = vmatprep.subr.bf16.mxu0 0
  %1427 = vmatpush1.bf16.msra.mxu0 %v1411
  %1428 = vmatprep.subr.bf16.mxu0 0
  %1429 = vmatpush1.bf16.msra.mxu0 %v1410
  %1430 = vmatprep.subr.bf16.mxu0 0
  %1431 = vmatpush1.bf16.msra.mxu0 %v1409
  %1432 = vmatprep.subr.bf16.mxu0 0
  %1433 = vmatpush1.bf16.msra.mxu0 %v1408
  %1434 = vmatprep.subr.bf16.mxu0 0
  %1435 = vmatpush1.bf16.msra.mxu0 %v1407
  %1436 = vmatprep.subr.bf16.mxu0 0
  %1437 = vmatpush1.bf16.msra.mxu0 %v1406
  %1438 = vmatprep.subr.bf16.mxu0 0
  %1439 = vmatpush2.bf16.msra.mxu0 %v1421
  %1440 = vmatprep.subr.bf16.mxu0 0
  %1441 = vmatpush2.bf16.msra.mxu0 %v1420
  %1442 = vmatprep.subr.bf16.mxu0 0
  %1443 = vmatpush2.bf16.msra.mxu0 %v1419
  %1444 = vmatprep.subr.bf16.mxu0 0
  %1445 = vmatpush2.bf16.msra.mxu0 %v1418
  %1446 = vmatprep.subr.bf16.mxu0 0
  %1447 = vmatpush2.bf16.msra.mxu0 %v1417
  %1448 = vmatprep.subr.bf16.mxu0 0
  %1449 = vmatpush2.bf16.msra.mxu0 %v1416
  %1450 = vmatprep.subr.bf16.mxu0 0
  %1451 = vmatpush2.bf16.msra.mxu0 %v1415
  %1452 = vmatprep.subr.bf16.mxu0 0
  %1453 = vmatpush2.bf16.msra.mxu0 %v1414
  %1454 = vmatprep.mubr.bf16.mxu0 %v1373
  %1455 = vmatmul.mubr.bf16.gmra.mxu0 %v1372
  %v1456 = vpop.f32.mrf.mxu0
  %v1457 = vadd.f32 0.0, %v1456
  %v1458 = vpop.f32.mrf.mxu0
  %v1459 = vpop.f32.mrf.mxu0
  %v1460 = vpop.f32.mrf.mxu0
  %1461 = vdwg.mxu0
  %v1462 = vlaneseq
  %v1463 = vshrl.u32 %v1462, 7
  %v1464 = vsub.s32 0, %v1463
  %v1465 = vrot.slane %v1369, %v1464
  %v1466 = vmul.f32 %v1457, %v1465
  %v1467 = vsel %vm205, %v1466, 0.0
  %1468 = vadd.xlane.f32.xlu0 %v1467
  %v1469 = vpop.xlane.xlu0 %1468
  %v1470 = vpack.c.bf16 %v1370, %v1370
  %v1471 = vpack.c.bf16 %v1457, %v1457
  %v1473 = vsel %vm205, %v1470, 0
  %v1476 = vsel %vm205, %v1471, 0
  %1478 = vmatprep.subr.bf16.mxu0 0
  %1479 = vmatpush1.bf16.xpose.msra.mxu0 0
  %1480 = vmatprep.subr.bf16.mxu0 0
  %1481 = vmatpush1.bf16.xpose.msra.mxu0 0
  %1482 = vmatprep.subr.bf16.mxu0 0
  %1483 = vmatpush1.bf16.xpose.msra.mxu0 0
  %1484 = vmatprep.subr.bf16.mxu0 0
  %1485 = vmatpush1.bf16.xpose.msra.mxu0 0
  %1486 = vmatprep.subr.bf16.mxu0 0
  %1487 = vmatpush1.bf16.xpose.msra.mxu0 0
  %1488 = vmatprep.subr.bf16.mxu0 0
  %1489 = vmatpush1.bf16.xpose.msra.mxu0 0
  %1490 = vmatprep.subr.bf16.mxu0 0
  %1491 = vmatpush1.bf16.xpose.msra.mxu0 0
  %1492 = vmatprep.subr.bf16.mxu0 0
  %1493 = vmatpush1.bf16.xpose.msra.mxu0 %v1476
  %1494 = vmatprep.subr.bf16.mxu0 0
  %1495 = vmatpush2.bf16.xpose.msra.mxu0 0
  %1496 = vmatprep.subr.bf16.mxu0 0
  %1497 = vmatpush2.bf16.xpose.msra.mxu0 0
  %1498 = vmatprep.subr.bf16.mxu0 0
  %1499 = vmatpush2.bf16.xpose.msra.mxu0 0
  %1500 = vmatprep.subr.bf16.mxu0 0
  %1501 = vmatpush2.bf16.xpose.msra.mxu0 0
  %1502 = vmatprep.subr.bf16.mxu0 0
  %1503 = vmatpush2.bf16.xpose.msra.mxu0 0
  %1504 = vmatprep.subr.bf16.mxu0 0
  %1505 = vmatpush2.bf16.xpose.msra.mxu0 0
  %1506 = vmatprep.subr.bf16.mxu0 0
  %1507 = vmatpush2.bf16.xpose.msra.mxu0 0
  %1508 = vmatprep.subr.bf16.mxu0 0
  %1509 = vmatpush2.bf16.xpose.msra.mxu0 0
  %1510 = vmatprep.mubr.bf16.mxu0 0
  %1511 = vmatmul.mubr.bf16.gmra.mxu0 %v1473
  %v1512 = vpop.f32.mrf.mxu0
  %v1513 = vadd.f32 0.0, %v1512
  %v1514 = vpop.f32.mrf.mxu0
  %v1515 = vpop.f32.mrf.mxu0
  %v1516 = vpop.f32.mrf.mxu0
  %1517 = vdwg.mxu0
  %v1518 = vlaneseq
  %v1519 = vshrl.u32 %v1518, 7
  %v1520 = vsub.s32 0, %v1519
  %v1521 = vrot.slane %v1513, %v1520
  %v1522 = vadd.f32 %v1469, %v1521
  %vm1523 = vcmp.gt.f32.partialorder %v1522, 0.0
  %v1524 = vmul.f32 %v1522, 0.2
  %v1525 = vsel %vm1523, %v1522, %v1524
  %v1526 = vld [vmem:[%s1] sm:$0xff]
  %v1527 = vadd.f32 %v1525, %v1526
  %v1528 = vsel %vm799, %v1527, -inf
  %1529 = vmax.xlane.f32.xlu0 %v1528
  %v1530 = vpop.xlane.xlu0 %1529
  %v1531 = vsub.f32 %v1527, %v1530
  %v1532 = vmul.f32 %v1531, 1.442695
  %v1533 = vpow.pop %v1532
  %v1534 = vsel %vm799, %v1533, 0.0
  %1535 = vadd.xlane.f32.xlu0 %v1534
  %v1536 = vpop.xlane.xlu0 %1535
  %v1537 = vrcp.pop %v1536
  %v1538 = vmul.f32 %v1533, %v1537
  %v1539 = vpack.c.bf16 %v1538, %v1538
  %v1540 = vlaneseq
  %v1541 = vshrl.u32 %v1540, 7
  %v1542 = vsub.s32 0, %v1541
  %v1543 = vrot.slane %v1371, %v1542
  %v1545 = vsel %vm799, %v1539, 0
  %v1547 = vsel %vm939, %v1471, 0
  %1549 = vmatprep.subr.bf16.mxu0 0
  %1550 = vmatpush1.bf16.msra.mxu0 0
  %1551 = vmatprep.subr.bf16.mxu0 0
  %1552 = vmatpush1.bf16.msra.mxu0 0
  %1553 = vmatprep.subr.bf16.mxu0 0
  %1554 = vmatpush1.bf16.msra.mxu0 0
  %1555 = vmatprep.subr.bf16.mxu0 0
  %1556 = vmatpush1.bf16.msra.mxu0 0
  %1557 = vmatprep.subr.bf16.mxu0 0
  %1558 = vmatpush1.bf16.msra.mxu0 0
  %1559 = vmatprep.subr.bf16.mxu0 0
  %1560 = vmatpush1.bf16.msra.mxu0 0
  %1561 = vmatprep.subr.bf16.mxu0 0
  %1562 = vmatpush1.bf16.msra.mxu0 0
  %1563 = vmatprep.subr.bf16.mxu0 0
  %1564 = vmatpush1.bf16.msra.mxu0 %v1547
  %1565 = vmatprep.subr.bf16.mxu0 0
  %1566 = vmatpush2.bf16.msra.mxu0 0
  %1567 = vmatprep.subr.bf16.mxu0 0
  %1568 = vmatpush2.bf16.msra.mxu0 0
  %1569 = vmatprep.subr.bf16.mxu0 0
  %1570 = vmatpush2.bf16.msra.mxu0 0
  %1571 = vmatprep.subr.bf16.mxu0 0
  %1572 = vmatpush2.bf16.msra.mxu0 0
  %1573 = vmatprep.subr.bf16.mxu0 0
  %1574 = vmatpush2.bf16.msra.mxu0 0
  %1575 = vmatprep.subr.bf16.mxu0 0
  %1576 = vmatpush2.bf16.msra.mxu0 0
  %1577 = vmatprep.subr.bf16.mxu0 0
  %1578 = vmatpush2.bf16.msra.mxu0 0
  %1579 = vmatprep.subr.bf16.mxu0 0
  %1580 = vmatpush2.bf16.msra.mxu0 0
  %1581 = vmatprep.mubr.bf16.mxu0 0
  %1582 = vmatmul.mubr.bf16.gmra.mxu0 %v1545
  %v1583 = vpop.f32.mrf.mxu0
  %v1584 = vadd.f32 %v1543, %v1583
  %v1585 = vpop.f32.mrf.mxu0
  %v1586 = vpop.f32.mrf.mxu0
  %v1587 = vpop.f32.mrf.mxu0
  %1588 = vdwg.mxu0
  %v1589 = vld [vmem:[%s2] sm:$0xff]
  %v1590 = vld [vmem:[%s2 + $0x8] sm:$0xff]
  %v1591 = vld [vmem:[%s2 + $0x10] sm:$0xff]
  %v1592 = vld [vmem:[%s2 + $0x18] sm:$0xff]
  %v1593 = vld [vmem:[%s2 + $0x20] sm:$0xff]
  %v1594 = vld [vmem:[%s2 + $0x28] sm:$0xff]
  %v1595 = vld [vmem:[%s2 + $0x30] sm:$0xff]
  %v1596 = vld [vmem:[%s2 + $0x38] sm:$0xff]
  %v1597 = vpack.c.bf16 %v1590, %v1589
  %v1598 = vpack.c.bf16 %v1592, %v1591
  %v1599 = vpack.c.bf16 %v1594, %v1593
  %v1600 = vpack.c.bf16 %v1596, %v1595
  %v1601 = vpack.c.bf16 %v1584, %v1584
  %v1603 = vsel %vm799, %v1597, 0
  %v1606 = vsel %vm799, %v1598, 0
  %v1609 = vsel %vm799, %v1599, 0
  %v1612 = vsel %vm799, %v1600, 0
  %v1615 = vsel %vm939, %v1601, 0
  %1617 = vmatprep.subr.bf16.mxu0 0
  %1618 = vmatpush1.bf16.msra.mxu0 0
  %1619 = vmatprep.subr.bf16.mxu0 0
  %1620 = vmatpush1.bf16.msra.mxu0 0
  %1621 = vmatprep.subr.bf16.mxu0 0
  %1622 = vmatpush1.bf16.msra.mxu0 0
  %1623 = vmatprep.subr.bf16.mxu0 0
  %1624 = vmatpush1.bf16.msra.mxu0 0
  %1625 = vmatprep.subr.bf16.mxu0 0
  %1626 = vmatpush1.bf16.msra.mxu0 0
  %1627 = vmatprep.subr.bf16.mxu0 0
  %1628 = vmatpush1.bf16.msra.mxu0 0
  %1629 = vmatprep.subr.bf16.mxu0 0
  %1630 = vmatpush1.bf16.msra.mxu0 0
  %1631 = vmatprep.subr.bf16.mxu0 0
  %1632 = vmatpush1.bf16.msra.mxu0 %v1615
  %1633 = vmatprep.subr.bf16.mxu0 0
  %1634 = vmatpush2.bf16.msra.mxu0 0
  %1635 = vmatprep.subr.bf16.mxu0 0
  %1636 = vmatpush2.bf16.msra.mxu0 0
  %1637 = vmatprep.subr.bf16.mxu0 0
  %1638 = vmatpush2.bf16.msra.mxu0 0
  %1639 = vmatprep.subr.bf16.mxu0 0
  %1640 = vmatpush2.bf16.msra.mxu0 0
  %1641 = vmatprep.subr.bf16.mxu0 0
  %1642 = vmatpush2.bf16.msra.mxu0 0
  %1643 = vmatprep.subr.bf16.mxu0 0
  %1644 = vmatpush2.bf16.msra.mxu0 0
  %1645 = vmatprep.subr.bf16.mxu0 0
  %1646 = vmatpush2.bf16.msra.mxu0 0
  %1647 = vmatprep.subr.bf16.mxu0 0
  %1648 = vmatpush2.bf16.msra.mxu0 0
  %1649 = vmatprep.mubr.bf16.mxu0 0
  %1650 = vmatmul.mubr.bf16.gmra.mxu0 %v1603
  %v1651 = vpop.f32.mrf.mxu0
  %v1652 = vadd.f32 0.0, %v1651
  %v1653 = vpop.f32.mrf.mxu0
  %v1654 = vpop.f32.mrf.mxu0
  %v1655 = vadd.f32 0.0, %v1654
  %v1656 = vpop.f32.mrf.mxu0
  %1657 = vmatprep.mubr.bf16.mxu0 0
  %1658 = vmatmul.mubr.bf16.gmra.mxu0 %v1606
  %v1659 = vpop.f32.mrf.mxu0
  %v1660 = vadd.f32 0.0, %v1659
  %v1661 = vpop.f32.mrf.mxu0
  %v1662 = vpop.f32.mrf.mxu0
  %v1663 = vadd.f32 0.0, %v1662
  %v1664 = vpop.f32.mrf.mxu0
  %1665 = vmatprep.mubr.bf16.mxu0 0
  %1666 = vmatmul.mubr.bf16.gmra.mxu0 %v1609
  %v1667 = vpop.f32.mrf.mxu0
  %v1668 = vadd.f32 0.0, %v1667
  %v1669 = vpop.f32.mrf.mxu0
  %v1670 = vpop.f32.mrf.mxu0
  %v1671 = vadd.f32 0.0, %v1670
  %v1672 = vpop.f32.mrf.mxu0
  %1673 = vmatprep.mubr.bf16.mxu0 0
  %1674 = vmatmul.mubr.bf16.gmra.mxu0 %v1612
  %v1675 = vpop.f32.mrf.mxu0
  %v1676 = vadd.f32 0.0, %v1675
  %v1677 = vpop.f32.mrf.mxu0
  %v1678 = vpop.f32.mrf.mxu0
  %v1679 = vadd.f32 0.0, %v1678
  %v1680 = vpop.f32.mrf.mxu0
  %1681 = vdwg.mxu0
  %v1682 = vld [vmem:[%s3] sm:$0xff]
  %v1683 = vld [vmem:[%s3 + $0x8] sm:$0xff]
  %v1684 = vld [vmem:[%s3 + $0x10] sm:$0xff]
  %v1685 = vld [vmem:[%s3 + $0x18] sm:$0xff]
  %v1686 = vld [vmem:[%s3 + $0x20] sm:$0xff]
  %v1687 = vld [vmem:[%s3 + $0x28] sm:$0xff]
  %v1688 = vld [vmem:[%s3 + $0x30] sm:$0xff]
  %v1689 = vld [vmem:[%s3 + $0x38] sm:$0xff]
  %v1690 = vld [vmem:[%s7] sm:$0xff]
  %v1691 = vld [vmem:[%s7 + $0x8] sm:$0xff]
  %v1692 = vld [vmem:[%s7 + $0x10] sm:$0xff]
  %v1693 = vld [vmem:[%s7 + $0x18] sm:$0xff]
  %v1694 = vld [vmem:[%s7 + $0x20] sm:$0xff]
  %v1695 = vld [vmem:[%s7 + $0x28] sm:$0xff]
  %v1696 = vld [vmem:[%s7 + $0x30] sm:$0xff]
  %v1697 = vld [vmem:[%s7 + $0x38] sm:$0xff]
  %v1698 = vld [vmem:[%s7 + $0x40] sm:$0x1]
  %v1699 = vld [vmem:[%s7 + $0x41] sm:$0x1]
  %v1700 = vpack.c.bf16 %v1655, %v1652
  %v1701 = vpack.c.bf16 %v1663, %v1660
  %v1702 = vpack.c.bf16 %v1671, %v1668
  %v1703 = vpack.c.bf16 %v1679, %v1676
  %v1704 = vpack.c.bf16 %v1691, %v1690
  %v1705 = vpack.c.bf16 %v1693, %v1692
  %v1706 = vlaneseq
  %v1707 = vshrl.u32 %v1706, 7
  %v1708 = vsub.s32 0, %v1707
  %v1709 = vrot.slane %v1698, %v1708
  %v1711 = vsel %vm205, %v1700, 0
  %v1714 = vsel %vm205, %v1701, 0
  %v1717 = vsel %vm205, %v1702, 0
  %v1720 = vsel %vm205, %v1703, 0
  %1722 = vmatprep.subr.bf16.mxu0 0
  %1723 = vmatpush1.bf16.msra.mxu0 0
  %1724 = vmatprep.subr.bf16.mxu0 0
  %1725 = vmatpush1.bf16.msra.mxu0 0
  %1726 = vmatprep.subr.bf16.mxu0 0
  %1727 = vmatpush1.bf16.msra.mxu0 0
  %1728 = vmatprep.subr.bf16.mxu0 0
  %1729 = vmatpush1.bf16.msra.mxu0 0
  %1730 = vmatprep.subr.bf16.mxu0 0
  %1731 = vmatpush1.bf16.msra.mxu0 0
  %1732 = vmatprep.subr.bf16.mxu0 0
  %1733 = vmatpush1.bf16.msra.mxu0 0
  %1734 = vmatprep.subr.bf16.mxu0 0
  %1735 = vmatpush1.bf16.msra.mxu0 %v1705
  %1736 = vmatprep.subr.bf16.mxu0 0
  %1737 = vmatpush1.bf16.msra.mxu0 %v1704
  %1738 = vmatprep.subr.bf16.mxu0 0
  %1739 = vmatpush2.bf16.msra.mxu0 0
  %1740 = vmatprep.subr.bf16.mxu0 0
  %1741 = vmatpush2.bf16.msra.mxu0 0
  %1742 = vmatprep.subr.bf16.mxu0 0
  %1743 = vmatpush2.bf16.msra.mxu0 0
  %1744 = vmatprep.subr.bf16.mxu0 0
  %1745 = vmatpush2.bf16.msra.mxu0 0
  %1746 = vmatprep.subr.bf16.mxu0 0
  %1747 = vmatpush2.bf16.msra.mxu0 0
  %1748 = vmatprep.subr.bf16.mxu0 0
  %1749 = vmatpush2.bf16.msra.mxu0 0
  %1750 = vmatprep.subr.bf16.mxu0 0
  %1751 = vmatpush2.bf16.msra.mxu0 0
  %1752 = vmatprep.subr.bf16.mxu0 0
  %1753 = vmatpush2.bf16.msra.mxu0 0
  %1754 = vmatprep.mubr.bf16.mxu0 0
  %1755 = vmatmul.mubr.bf16.gmra.mxu0 %v1711
  %v1756 = vpop.f32.mrf.mxu0
  %v1757 = vadd.f32 %v1709, %v1756
  %v1758 = vpop.f32.mrf.mxu0
  %v1759 = vpop.f32.mrf.mxu0
  %v1760 = vadd.f32 %v1709, %v1759
  %v1761 = vpop.f32.mrf.mxu0
  %1762 = vmatprep.mubr.bf16.mxu0 0
  %1763 = vmatmul.mubr.bf16.gmra.mxu0 %v1714
  %v1764 = vpop.f32.mrf.mxu0
  %v1765 = vadd.f32 %v1709, %v1764
  %v1766 = vpop.f32.mrf.mxu0
  %v1767 = vpop.f32.mrf.mxu0
  %v1768 = vadd.f32 %v1709, %v1767
  %v1769 = vpop.f32.mrf.mxu0
  %1770 = vmatprep.mubr.bf16.mxu0 0
  %1771 = vmatmul.mubr.bf16.gmra.mxu0 %v1717
  %v1772 = vpop.f32.mrf.mxu0
  %v1773 = vadd.f32 %v1709, %v1772
  %v1774 = vpop.f32.mrf.mxu0
  %v1775 = vpop.f32.mrf.mxu0
  %v1776 = vadd.f32 %v1709, %v1775
  %v1777 = vpop.f32.mrf.mxu0
  %1778 = vmatprep.mubr.bf16.mxu0 0
  %1779 = vmatmul.mubr.bf16.gmra.mxu0 %v1720
  %v1780 = vpop.f32.mrf.mxu0
  %v1781 = vadd.f32 %v1709, %v1780
  %v1782 = vpop.f32.mrf.mxu0
  %v1783 = vpop.f32.mrf.mxu0
  %v1784 = vadd.f32 %v1709, %v1783
  %v1785 = vpop.f32.mrf.mxu0
  %1786 = vdwg.mxu0
  %v1787 = vpack.c.bf16 %v1695, %v1694
  %v1788 = vpack.c.bf16 %v1697, %v1696
  %v1790 = vsel %vm205, 0, 0
  %1792 = vmatprep.subr.bf16.mxu0 0
  %1793 = vmatpush1.bf16.msra.mxu0 0
  %1794 = vmatprep.subr.bf16.mxu0 0
  %1795 = vmatpush1.bf16.msra.mxu0 0
  %1796 = vmatprep.subr.bf16.mxu0 0
  %1797 = vmatpush1.bf16.msra.mxu0 0
  %1798 = vmatprep.subr.bf16.mxu0 0
  %1799 = vmatpush1.bf16.msra.mxu0 0
  %1800 = vmatprep.subr.bf16.mxu0 0
  %1801 = vmatpush1.bf16.msra.mxu0 0
  %1802 = vmatprep.subr.bf16.mxu0 0
  %1803 = vmatpush1.bf16.msra.mxu0 0
  %1804 = vmatprep.subr.bf16.mxu0 0
  %1805 = vmatpush1.bf16.msra.mxu0 %v1788
  %1806 = vmatprep.subr.bf16.mxu0 0
  %1807 = vmatpush1.bf16.msra.mxu0 %v1787
  %1808 = vmatprep.subr.bf16.mxu0 0
  %1809 = vmatpush2.bf16.msra.mxu0 0
  %1810 = vmatprep.subr.bf16.mxu0 0
  %1811 = vmatpush2.bf16.msra.mxu0 0
  %1812 = vmatprep.subr.bf16.mxu0 0
  %1813 = vmatpush2.bf16.msra.mxu0 0
  %1814 = vmatprep.subr.bf16.mxu0 0
  %1815 = vmatpush2.bf16.msra.mxu0 0
  %1816 = vmatprep.subr.bf16.mxu0 0
  %1817 = vmatpush2.bf16.msra.mxu0 0
  %1818 = vmatprep.subr.bf16.mxu0 0
  %1819 = vmatpush2.bf16.msra.mxu0 0
  %1820 = vmatprep.subr.bf16.mxu0 0
  %1821 = vmatpush2.bf16.msra.mxu0 0
  %1822 = vmatprep.subr.bf16.mxu0 0
  %1823 = vmatpush2.bf16.msra.mxu0 0
  %1824 = vmatprep.mubr.bf16.mxu0 0
  %1825 = vmatmul.mubr.bf16.gmra.mxu0 %v1790
  %v1826 = vpop.f32.mrf.mxu0
  %v1827 = vadd.f32 0.0, %v1826
  %v1828 = vpop.f32.mrf.mxu0
  %v1829 = vpop.f32.mrf.mxu0
  %v1830 = vpop.f32.mrf.mxu0
  %1831 = vdwg.mxu0
  %v1832 = vadd.f32 %v1757, %v1827
  %v1833 = vxor.u32 %v1832, 2147483648
  %v1834 = vmul.f32 %v1833, 1.442695
  %v1835 = vpow.pop %v1834
  %v1836 = vadd.f32 %v1835, 1.0
  %v1837 = vrcp.pop %v1836
  %v1838 = vmul.f32 1.0, %v1837
  %v1839 = vlaneseq
  %v1840 = vshrl.u32 %v1839, 7
  %v1841 = vsub.s32 0, %v1840
  %v1842 = vrot.slane %v1699, %v1841
  %1844 = vrot.lane.b32.xlu0 %v1842, 64
  %v1845 = vpop.permute.xlu0 %1844
  %v1847 = vadd.f32 %v1827, %v1845
  %1849 = vrot.lane.b32.xlu0 %v1847, 64
  %v1850 = vpop.permute.xlu0 %1849
  %v1852 = vmul.f32 %v1838, %v1850
  %1854 = vrot.lane.b32.xlu0 %v1852, 64
  %v1855 = vpop.permute.xlu0 %1854
  %v1857 = vadd.f32 %v1757, %v1855
  %v1858 = vtanh.pop %v1857
  %v1859 = vsub.f32 1.0, %v1838
  %1861 = vrot.lane.b32.xlu0 %v1858, 96
  %v1862 = vpop.permute.xlu0 %1861
  %v1864 = vmul.f32 %v1859, %v1862
  %v1865 = vmul.f32 %v1838, 0.0
  %v1866 = vadd.f32 %v1864, %v1865
  %1868 = vset.pattern.permute.xlu0 0
  %1869 = vperm.xlu0 %1868, %v1682
  %v1870 = vpop.permute.xlu0 %1869
  %v1872 = vmul.f32 %v1870, %v1866
  %v1873 = vsub.f32 1.0, %v1682
  %1875 = vset.pattern.permute.xlu0 0
  %1876 = vperm.xlu0 %1875, %v1873
  %v1877 = vpop.permute.xlu0 %1876
  %v1879 = vmul.f32 %v1877, 0.0
  %v1880 = vadd.f32 %v1872, %v1879
  %v1881 = vpack.c.bf16 %v1880, %v1880
  %1883 = vrot.lane.b32.xlu0 %v1881, 96
  %v1884 = vpop.permute.xlu0 %1883
  %v1886 = vsel %vm205, %v1884, 0
  %1888 = vmatprep.subr.bf16.mxu0 0
  %1889 = vmatpush1.bf16.msra.mxu0 0
  %1890 = vmatprep.subr.bf16.mxu0 0
  %1891 = vmatpush1.bf16.msra.mxu0 0
  %1892 = vmatprep.subr.bf16.mxu0 0
  %1893 = vmatpush1.bf16.msra.mxu0 0
  %1894 = vmatprep.subr.bf16.mxu0 0
  %1895 = vmatpush1.bf16.msra.mxu0 0
  %1896 = vmatprep.subr.bf16.mxu0 0
  %1897 = vmatpush1.bf16.msra.mxu0 0
  %1898 = vmatprep.subr.bf16.mxu0 0
  %1899 = vmatpush1.bf16.msra.mxu0 0
  %1900 = vmatprep.subr.bf16.mxu0 0
  %1901 = vmatpush1.bf16.msra.mxu0 %v1788
  %1902 = vmatprep.subr.bf16.mxu0 0
  %1903 = vmatpush1.bf16.msra.mxu0 %v1787
  %1904 = vmatprep.subr.bf16.mxu0 0
  %1905 = vmatpush2.bf16.msra.mxu0 0
  %1906 = vmatprep.subr.bf16.mxu0 0
  %1907 = vmatpush2.bf16.msra.mxu0 0
  %1908 = vmatprep.subr.bf16.mxu0 0
  %1909 = vmatpush2.bf16.msra.mxu0 0
  %1910 = vmatprep.subr.bf16.mxu0 0
  %1911 = vmatpush2.bf16.msra.mxu0 0
  %1912 = vmatprep.subr.bf16.mxu0 0
  %1913 = vmatpush2.bf16.msra.mxu0 0
  %1914 = vmatprep.subr.bf16.mxu0 0
  %1915 = vmatpush2.bf16.msra.mxu0 0
  %1916 = vmatprep.subr.bf16.mxu0 0
  %1917 = vmatpush2.bf16.msra.mxu0 0
  %1918 = vmatprep.subr.bf16.mxu0 0
  %1919 = vmatpush2.bf16.msra.mxu0 0
  %1920 = vmatprep.mubr.bf16.mxu0 0
  %1921 = vmatmul.mubr.bf16.gmra.mxu0 %v1886
  %v1922 = vpop.f32.mrf.mxu0
  %v1923 = vadd.f32 0.0, %v1922
  %v1924 = vpop.f32.mrf.mxu0
  %v1925 = vpop.f32.mrf.mxu0
  %v1926 = vpop.f32.mrf.mxu0
  %1927 = vdwg.mxu0
  %v1928 = vadd.f32 %v1760, %v1923
  %v1929 = vxor.u32 %v1928, 2147483648
  %v1930 = vmul.f32 %v1929, 1.442695
  %v1931 = vpow.pop %v1930
  %v1932 = vadd.f32 %v1931, 1.0
  %v1933 = vrcp.pop %v1932
  %v1934 = vmul.f32 1.0, %v1933
  %v1935 = vadd.f32 %v1923, %v1845
  %1937 = vrot.lane.b32.xlu0 %v1935, 64
  %v1938 = vpop.permute.xlu0 %1937
  %v1940 = vmul.f32 %v1934, %v1938
  %1942 = vrot.lane.b32.xlu0 %v1940, 64
  %v1943 = vpop.permute.xlu0 %1942
  %v1945 = vadd.f32 %v1760, %v1943
  %v1946 = vtanh.pop %v1945
  %v1947 = vsub.f32 1.0, %v1934
  %1949 = vrot.lane.b32.xlu0 %v1946, 96
  %v1950 = vpop.permute.xlu0 %1949
  %v1952 = vmul.f32 %v1947, %v1950
  %v1953 = vmul.f32 %v1934, %v1880
  %v1954 = vadd.f32 %v1952, %v1953
  %1956 = vset.pattern.permute.xlu0 0
  %1957 = vperm.xlu0 %1956, %v1683
  %v1958 = vpop.permute.xlu0 %1957
  %v1960 = vmul.f32 %v1958, %v1954
  %v1961 = vsub.f32 1.0, %v1683
  %1963 = vset.pattern.permute.xlu0 0
  %1964 = vperm.xlu0 %1963, %v1961
  %v1965 = vpop.permute.xlu0 %1964
  %v1967 = vmul.f32 %v1965, %v1880
  %v1968 = vadd.f32 %v1960, %v1967
  %v1969 = vpack.c.bf16 %v1968, %v1968
  %1971 = vrot.lane.b32.xlu0 %v1969, 96
  %v1972 = vpop.permute.xlu0 %1971
  %v1974 = vsel %vm205, %v1972, 0
  %1976 = vmatprep.subr.bf16.mxu0 0
  %1977 = vmatpush1.bf16.msra.mxu0 0
  %1978 = vmatprep.subr.bf16.mxu0 0
  %1979 = vmatpush1.bf16.msra.mxu0 0
  %1980 = vmatprep.subr.bf16.mxu0 0
  %1981 = vmatpush1.bf16.msra.mxu0 0
  %1982 = vmatprep.subr.bf16.mxu0 0
  %1983 = vmatpush1.bf16.msra.mxu0 0
  %1984 = vmatprep.subr.bf16.mxu0 0
  %1985 = vmatpush1.bf16.msra.mxu0 0
  %1986 = vmatprep.subr.bf16.mxu0 0
  %1987 = vmatpush1.bf16.msra.mxu0 0
  %1988 = vmatprep.subr.bf16.mxu0 0
  %1989 = vmatpush1.bf16.msra.mxu0 %v1788
  %1990 = vmatprep.subr.bf16.mxu0 0
  %1991 = vmatpush1.bf16.msra.mxu0 %v1787
  %1992 = vmatprep.subr.bf16.mxu0 0
  %1993 = vmatpush2.bf16.msra.mxu0 0
  %1994 = vmatprep.subr.bf16.mxu0 0
  %1995 = vmatpush2.bf16.msra.mxu0 0
  %1996 = vmatprep.subr.bf16.mxu0 0
  %1997 = vmatpush2.bf16.msra.mxu0 0
  %1998 = vmatprep.subr.bf16.mxu0 0
  %1999 = vmatpush2.bf16.msra.mxu0 0
  %2000 = vmatprep.subr.bf16.mxu0 0
  %2001 = vmatpush2.bf16.msra.mxu0 0
  %2002 = vmatprep.subr.bf16.mxu0 0
  %2003 = vmatpush2.bf16.msra.mxu0 0
  %2004 = vmatprep.subr.bf16.mxu0 0
  %2005 = vmatpush2.bf16.msra.mxu0 0
  %2006 = vmatprep.subr.bf16.mxu0 0
  %2007 = vmatpush2.bf16.msra.mxu0 0
  %2008 = vmatprep.mubr.bf16.mxu0 0
  %2009 = vmatmul.mubr.bf16.gmra.mxu0 %v1974
  %v2010 = vpop.f32.mrf.mxu0
  %v2011 = vadd.f32 0.0, %v2010
  %v2012 = vpop.f32.mrf.mxu0
  %v2013 = vpop.f32.mrf.mxu0
  %v2014 = vpop.f32.mrf.mxu0
  %2015 = vdwg.mxu0
  %v2016 = vadd.f32 %v1765, %v2011
  %v2017 = vxor.u32 %v2016, 2147483648
  %v2018 = vmul.f32 %v2017, 1.442695
  %v2019 = vpow.pop %v2018
  %v2020 = vadd.f32 %v2019, 1.0
  %v2021 = vrcp.pop %v2020
  %v2022 = vmul.f32 1.0, %v2021
  %v2023 = vadd.f32 %v2011, %v1845
  %2025 = vrot.lane.b32.xlu0 %v2023, 64
  %v2026 = vpop.permute.xlu0 %2025
  %v2028 = vmul.f32 %v2022, %v2026
  %2030 = vrot.lane.b32.xlu0 %v2028, 64
  %v2031 = vpop.permute.xlu0 %2030
  %v2033 = vadd.f32 %v1765, %v2031
  %v2034 = vtanh.pop %v2033
  %v2035 = vsub.f32 1.0, %v2022
  %2037 = vrot.lane.b32.xlu0 %v2034, 96
  %v2038 = vpop.permute.xlu0 %2037
  %v2040 = vmul.f32 %v2035, %v2038
  %v2041 = vmul.f32 %v2022, %v1968
  %v2042 = vadd.f32 %v2040, %v2041
  %2044 = vset.pattern.permute.xlu0 0
  %2045 = vperm.xlu0 %2044, %v1684
  %v2046 = vpop.permute.xlu0 %2045
  %v2048 = vmul.f32 %v2046, %v2042
  %v2049 = vsub.f32 1.0, %v1684
  %2051 = vset.pattern.permute.xlu0 0
  %2052 = vperm.xlu0 %2051, %v2049
  %v2053 = vpop.permute.xlu0 %2052
  %v2055 = vmul.f32 %v2053, %v1968
  %v2056 = vadd.f32 %v2048, %v2055
  %v2057 = vpack.c.bf16 %v2056, %v2056
  %2059 = vrot.lane.b32.xlu0 %v2057, 96
  %v2060 = vpop.permute.xlu0 %2059
  %v2062 = vsel %vm205, %v2060, 0
  %2064 = vmatprep.subr.bf16.mxu0 0
  %2065 = vmatpush1.bf16.msra.mxu0 0
  %2066 = vmatprep.subr.bf16.mxu0 0
  %2067 = vmatpush1.bf16.msra.mxu0 0
  %2068 = vmatprep.subr.bf16.mxu0 0
  %2069 = vmatpush1.bf16.msra.mxu0 0
  %2070 = vmatprep.subr.bf16.mxu0 0
  %2071 = vmatpush1.bf16.msra.mxu0 0
  %2072 = vmatprep.subr.bf16.mxu0 0
  %2073 = vmatpush1.bf16.msra.mxu0 0
  %2074 = vmatprep.subr.bf16.mxu0 0
  %2075 = vmatpush1.bf16.msra.mxu0 0
  %2076 = vmatprep.subr.bf16.mxu0 0
  %2077 = vmatpush1.bf16.msra.mxu0 %v1788
  %2078 = vmatprep.subr.bf16.mxu0 0
  %2079 = vmatpush1.bf16.msra.mxu0 %v1787
  %2080 = vmatprep.subr.bf16.mxu0 0
  %2081 = vmatpush2.bf16.msra.mxu0 0
  %2082 = vmatprep.subr.bf16.mxu0 0
  %2083 = vmatpush2.bf16.msra.mxu0 0
  %2084 = vmatprep.subr.bf16.mxu0 0
  %2085 = vmatpush2.bf16.msra.mxu0 0
  %2086 = vmatprep.subr.bf16.mxu0 0
  %2087 = vmatpush2.bf16.msra.mxu0 0
  %2088 = vmatprep.subr.bf16.mxu0 0
  %2089 = vmatpush2.bf16.msra.mxu0 0
  %2090 = vmatprep.subr.bf16.mxu0 0
  %2091 = vmatpush2.bf16.msra.mxu0 0
  %2092 = vmatprep.subr.bf16.mxu0 0
  %2093 = vmatpush2.bf16.msra.mxu0 0
  %2094 = vmatprep.subr.bf16.mxu0 0
  %2095 = vmatpush2.bf16.msra.mxu0 0
  %2096 = vmatprep.mubr.bf16.mxu0 0
  %2097 = vmatmul.mubr.bf16.gmra.mxu0 %v2062
  %v2098 = vpop.f32.mrf.mxu0
  %v2099 = vadd.f32 0.0, %v2098
  %v2100 = vpop.f32.mrf.mxu0
  %v2101 = vpop.f32.mrf.mxu0
  %v2102 = vpop.f32.mrf.mxu0
  %2103 = vdwg.mxu0
  %v2104 = vadd.f32 %v1768, %v2099
  %v2105 = vxor.u32 %v2104, 2147483648
  %v2106 = vmul.f32 %v2105, 1.442695
  %v2107 = vpow.pop %v2106
  %v2108 = vadd.f32 %v2107, 1.0
  %v2109 = vrcp.pop %v2108
  %v2110 = vmul.f32 1.0, %v2109
  %v2111 = vadd.f32 %v2099, %v1845
  %2113 = vrot.lane.b32.xlu0 %v2111, 64
  %v2114 = vpop.permute.xlu0 %2113
  %v2116 = vmul.f32 %v2110, %v2114
  %2118 = vrot.lane.b32.xlu0 %v2116, 64
  %v2119 = vpop.permute.xlu0 %2118
  %v2121 = vadd.f32 %v1768, %v2119
  %v2122 = vtanh.pop %v2121
  %v2123 = vsub.f32 1.0, %v2110
  %2125 = vrot.lane.b32.xlu0 %v2122, 96
  %v2126 = vpop.permute.xlu0 %2125
  %v2128 = vmul.f32 %v2123, %v2126
  %v2129 = vmul.f32 %v2110, %v2056
  %v2130 = vadd.f32 %v2128, %v2129
  %2132 = vset.pattern.permute.xlu0 0
  %2133 = vperm.xlu0 %2132, %v1685
  %v2134 = vpop.permute.xlu0 %2133
  %v2136 = vmul.f32 %v2134, %v2130
  %v2137 = vsub.f32 1.0, %v1685
  %2139 = vset.pattern.permute.xlu0 0
  %2140 = vperm.xlu0 %2139, %v2137
  %v2141 = vpop.permute.xlu0 %2140
  %v2143 = vmul.f32 %v2141, %v2056
  %v2144 = vadd.f32 %v2136, %v2143
  %v2145 = vpack.c.bf16 %v2144, %v2144
  %2147 = vrot.lane.b32.xlu0 %v2145, 96
  %v2148 = vpop.permute.xlu0 %2147
  %v2150 = vsel %vm205, %v2148, 0
  %2152 = vmatprep.subr.bf16.mxu0 0
  %2153 = vmatpush1.bf16.msra.mxu0 0
  %2154 = vmatprep.subr.bf16.mxu0 0
  %2155 = vmatpush1.bf16.msra.mxu0 0
  %2156 = vmatprep.subr.bf16.mxu0 0
  %2157 = vmatpush1.bf16.msra.mxu0 0
  %2158 = vmatprep.subr.bf16.mxu0 0
  %2159 = vmatpush1.bf16.msra.mxu0 0
  %2160 = vmatprep.subr.bf16.mxu0 0
  %2161 = vmatpush1.bf16.msra.mxu0 0
  %2162 = vmatprep.subr.bf16.mxu0 0
  %2163 = vmatpush1.bf16.msra.mxu0 0
  %2164 = vmatprep.subr.bf16.mxu0 0
  %2165 = vmatpush1.bf16.msra.mxu0 %v1788
  %2166 = vmatprep.subr.bf16.mxu0 0
  %2167 = vmatpush1.bf16.msra.mxu0 %v1787
  %2168 = vmatprep.subr.bf16.mxu0 0
  %2169 = vmatpush2.bf16.msra.mxu0 0
  %2170 = vmatprep.subr.bf16.mxu0 0
  %2171 = vmatpush2.bf16.msra.mxu0 0
  %2172 = vmatprep.subr.bf16.mxu0 0
  %2173 = vmatpush2.bf16.msra.mxu0 0
  %2174 = vmatprep.subr.bf16.mxu0 0
  %2175 = vmatpush2.bf16.msra.mxu0 0
  %2176 = vmatprep.subr.bf16.mxu0 0
  %2177 = vmatpush2.bf16.msra.mxu0 0
  %2178 = vmatprep.subr.bf16.mxu0 0
  %2179 = vmatpush2.bf16.msra.mxu0 0
  %2180 = vmatprep.subr.bf16.mxu0 0
  %2181 = vmatpush2.bf16.msra.mxu0 0
  %2182 = vmatprep.subr.bf16.mxu0 0
  %2183 = vmatpush2.bf16.msra.mxu0 0
  %2184 = vmatprep.mubr.bf16.mxu0 0
  %2185 = vmatmul.mubr.bf16.gmra.mxu0 %v2150
  %v2186 = vpop.f32.mrf.mxu0
  %v2187 = vadd.f32 0.0, %v2186
  %v2188 = vpop.f32.mrf.mxu0
  %v2189 = vpop.f32.mrf.mxu0
  %v2190 = vpop.f32.mrf.mxu0
  %2191 = vdwg.mxu0
  %v2192 = vadd.f32 %v1773, %v2187
  %v2193 = vxor.u32 %v2192, 2147483648
  %v2194 = vmul.f32 %v2193, 1.442695
  %v2195 = vpow.pop %v2194
  %v2196 = vadd.f32 %v2195, 1.0
  %v2197 = vrcp.pop %v2196
  %v2198 = vmul.f32 1.0, %v2197
  %v2199 = vadd.f32 %v2187, %v1845
  %2201 = vrot.lane.b32.xlu0 %v2199, 64
  %v2202 = vpop.permute.xlu0 %2201
  %v2204 = vmul.f32 %v2198, %v2202
  %2206 = vrot.lane.b32.xlu0 %v2204, 64
  %v2207 = vpop.permute.xlu0 %2206
  %v2209 = vadd.f32 %v1773, %v2207
  %v2210 = vtanh.pop %v2209
  %v2211 = vsub.f32 1.0, %v2198
  %2213 = vrot.lane.b32.xlu0 %v2210, 96
  %v2214 = vpop.permute.xlu0 %2213
  %v2216 = vmul.f32 %v2211, %v2214
  %v2217 = vmul.f32 %v2198, %v2144
  %v2218 = vadd.f32 %v2216, %v2217
  %2220 = vset.pattern.permute.xlu0 0
  %2221 = vperm.xlu0 %2220, %v1686
  %v2222 = vpop.permute.xlu0 %2221
  %v2224 = vmul.f32 %v2222, %v2218
  %v2225 = vsub.f32 1.0, %v1686
  %2227 = vset.pattern.permute.xlu0 0
  %2228 = vperm.xlu0 %2227, %v2225
  %v2229 = vpop.permute.xlu0 %2228
  %v2231 = vmul.f32 %v2229, %v2144
  %v2232 = vadd.f32 %v2224, %v2231
  %v2233 = vpack.c.bf16 %v2232, %v2232
  %2235 = vrot.lane.b32.xlu0 %v2233, 96
  %v2236 = vpop.permute.xlu0 %2235
  %v2238 = vsel %vm205, %v2236, 0
  %2240 = vmatprep.subr.bf16.mxu0 0
  %2241 = vmatpush1.bf16.msra.mxu0 0
  %2242 = vmatprep.subr.bf16.mxu0 0
  %2243 = vmatpush1.bf16.msra.mxu0 0
  %2244 = vmatprep.subr.bf16.mxu0 0
  %2245 = vmatpush1.bf16.msra.mxu0 0
  %2246 = vmatprep.subr.bf16.mxu0 0
  %2247 = vmatpush1.bf16.msra.mxu0 0
  %2248 = vmatprep.subr.bf16.mxu0 0
  %2249 = vmatpush1.bf16.msra.mxu0 0
  %2250 = vmatprep.subr.bf16.mxu0 0
  %2251 = vmatpush1.bf16.msra.mxu0 0
  %2252 = vmatprep.subr.bf16.mxu0 0
  %2253 = vmatpush1.bf16.msra.mxu0 %v1788
  %2254 = vmatprep.subr.bf16.mxu0 0
  %2255 = vmatpush1.bf16.msra.mxu0 %v1787
  %2256 = vmatprep.subr.bf16.mxu0 0
  %2257 = vmatpush2.bf16.msra.mxu0 0
  %2258 = vmatprep.subr.bf16.mxu0 0
  %2259 = vmatpush2.bf16.msra.mxu0 0
  %2260 = vmatprep.subr.bf16.mxu0 0
  %2261 = vmatpush2.bf16.msra.mxu0 0
  %2262 = vmatprep.subr.bf16.mxu0 0
  %2263 = vmatpush2.bf16.msra.mxu0 0
  %2264 = vmatprep.subr.bf16.mxu0 0
  %2265 = vmatpush2.bf16.msra.mxu0 0
  %2266 = vmatprep.subr.bf16.mxu0 0
  %2267 = vmatpush2.bf16.msra.mxu0 0
  %2268 = vmatprep.subr.bf16.mxu0 0
  %2269 = vmatpush2.bf16.msra.mxu0 0
  %2270 = vmatprep.subr.bf16.mxu0 0
  %2271 = vmatpush2.bf16.msra.mxu0 0
  %2272 = vmatprep.mubr.bf16.mxu0 0
  %2273 = vmatmul.mubr.bf16.gmra.mxu0 %v2238
  %v2274 = vpop.f32.mrf.mxu0
  %v2275 = vadd.f32 0.0, %v2274
  %v2276 = vpop.f32.mrf.mxu0
  %v2277 = vpop.f32.mrf.mxu0
  %v2278 = vpop.f32.mrf.mxu0
  %2279 = vdwg.mxu0
  %v2280 = vadd.f32 %v1776, %v2275
  %v2281 = vxor.u32 %v2280, 2147483648
  %v2282 = vmul.f32 %v2281, 1.442695
  %v2283 = vpow.pop %v2282
  %v2284 = vadd.f32 %v2283, 1.0
  %v2285 = vrcp.pop %v2284
  %v2286 = vmul.f32 1.0, %v2285
  %v2287 = vadd.f32 %v2275, %v1845
  %2289 = vrot.lane.b32.xlu0 %v2287, 64
  %v2290 = vpop.permute.xlu0 %2289
  %v2292 = vmul.f32 %v2286, %v2290
  %2294 = vrot.lane.b32.xlu0 %v2292, 64
  %v2295 = vpop.permute.xlu0 %2294
  %v2297 = vadd.f32 %v1776, %v2295
  %v2298 = vtanh.pop %v2297
  %v2299 = vsub.f32 1.0, %v2286
  %2301 = vrot.lane.b32.xlu0 %v2298, 96
  %v2302 = vpop.permute.xlu0 %2301
  %v2304 = vmul.f32 %v2299, %v2302
  %v2305 = vmul.f32 %v2286, %v2232
  %v2306 = vadd.f32 %v2304, %v2305
  %2308 = vset.pattern.permute.xlu0 0
  %2309 = vperm.xlu0 %2308, %v1687
  %v2310 = vpop.permute.xlu0 %2309
  %v2312 = vmul.f32 %v2310, %v2306
  %v2313 = vsub.f32 1.0, %v1687
  %2315 = vset.pattern.permute.xlu0 0
  %2316 = vperm.xlu0 %2315, %v2313
  %v2317 = vpop.permute.xlu0 %2316
  %v2319 = vmul.f32 %v2317, %v2232
  %v2320 = vadd.f32 %v2312, %v2319
  %v2321 = vpack.c.bf16 %v2320, %v2320
  %2323 = vrot.lane.b32.xlu0 %v2321, 96
  %v2324 = vpop.permute.xlu0 %2323
  %v2326 = vsel %vm205, %v2324, 0
  %2328 = vmatprep.subr.bf16.mxu0 0
  %2329 = vmatpush1.bf16.msra.mxu0 0
  %2330 = vmatprep.subr.bf16.mxu0 0
  %2331 = vmatpush1.bf16.msra.mxu0 0
  %2332 = vmatprep.subr.bf16.mxu0 0
  %2333 = vmatpush1.bf16.msra.mxu0 0
  %2334 = vmatprep.subr.bf16.mxu0 0
  %2335 = vmatpush1.bf16.msra.mxu0 0
  %2336 = vmatprep.subr.bf16.mxu0 0
  %2337 = vmatpush1.bf16.msra.mxu0 0
  %2338 = vmatprep.subr.bf16.mxu0 0
  %2339 = vmatpush1.bf16.msra.mxu0 0
  %2340 = vmatprep.subr.bf16.mxu0 0
  %2341 = vmatpush1.bf16.msra.mxu0 %v1788
  %2342 = vmatprep.subr.bf16.mxu0 0
  %2343 = vmatpush1.bf16.msra.mxu0 %v1787
  %2344 = vmatprep.subr.bf16.mxu0 0
  %2345 = vmatpush2.bf16.msra.mxu0 0
  %2346 = vmatprep.subr.bf16.mxu0 0
  %2347 = vmatpush2.bf16.msra.mxu0 0
  %2348 = vmatprep.subr.bf16.mxu0 0
  %2349 = vmatpush2.bf16.msra.mxu0 0
  %2350 = vmatprep.subr.bf16.mxu0 0
  %2351 = vmatpush2.bf16.msra.mxu0 0
  %2352 = vmatprep.subr.bf16.mxu0 0
  %2353 = vmatpush2.bf16.msra.mxu0 0
  %2354 = vmatprep.subr.bf16.mxu0 0
  %2355 = vmatpush2.bf16.msra.mxu0 0
  %2356 = vmatprep.subr.bf16.mxu0 0
  %2357 = vmatpush2.bf16.msra.mxu0 0
  %2358 = vmatprep.subr.bf16.mxu0 0
  %2359 = vmatpush2.bf16.msra.mxu0 0
  %2360 = vmatprep.mubr.bf16.mxu0 0
  %2361 = vmatmul.mubr.bf16.gmra.mxu0 %v2326
  %v2362 = vpop.f32.mrf.mxu0
  %v2363 = vadd.f32 0.0, %v2362
  %v2364 = vpop.f32.mrf.mxu0
  %v2365 = vpop.f32.mrf.mxu0
  %v2366 = vpop.f32.mrf.mxu0
  %2367 = vdwg.mxu0
  %v2368 = vadd.f32 %v1781, %v2363
  %v2369 = vxor.u32 %v2368, 2147483648
  %v2370 = vmul.f32 %v2369, 1.442695
  %v2371 = vpow.pop %v2370
  %v2372 = vadd.f32 %v2371, 1.0
  %v2373 = vrcp.pop %v2372
  %v2374 = vmul.f32 1.0, %v2373
  %v2375 = vadd.f32 %v2363, %v1845
  %2377 = vrot.lane.b32.xlu0 %v2375, 64
  %v2378 = vpop.permute.xlu0 %2377
  %v2380 = vmul.f32 %v2374, %v2378
  %2382 = vrot.lane.b32.xlu0 %v2380, 64
  %v2383 = vpop.permute.xlu0 %2382
  %v2385 = vadd.f32 %v1781, %v2383
  %v2386 = vtanh.pop %v2385
  %v2387 = vsub.f32 1.0, %v2374
  %2389 = vrot.lane.b32.xlu0 %v2386, 96
  %v2390 = vpop.permute.xlu0 %2389
  %v2392 = vmul.f32 %v2387, %v2390
  %v2393 = vmul.f32 %v2374, %v2320
  %v2394 = vadd.f32 %v2392, %v2393
  %2396 = vset.pattern.permute.xlu0 0
  %2397 = vperm.xlu0 %2396, %v1688
  %v2398 = vpop.permute.xlu0 %2397
  %v2400 = vmul.f32 %v2398, %v2394
  %v2401 = vsub.f32 1.0, %v1688
  %2403 = vset.pattern.permute.xlu0 0
  %2404 = vperm.xlu0 %2403, %v2401
  %v2405 = vpop.permute.xlu0 %2404
  %v2407 = vmul.f32 %v2405, %v2320
  %v2408 = vadd.f32 %v2400, %v2407
  %v2409 = vpack.c.bf16 %v2408, %v2408
  %2411 = vrot.lane.b32.xlu0 %v2409, 96
  %v2412 = vpop.permute.xlu0 %2411
  %v2414 = vsel %vm205, %v2412, 0
  %2416 = vmatprep.subr.bf16.mxu0 0
  %2417 = vmatpush1.bf16.msra.mxu0 0
  %2418 = vmatprep.subr.bf16.mxu0 0
  %2419 = vmatpush1.bf16.msra.mxu0 0
  %2420 = vmatprep.subr.bf16.mxu0 0
  %2421 = vmatpush1.bf16.msra.mxu0 0
  %2422 = vmatprep.subr.bf16.mxu0 0
  %2423 = vmatpush1.bf16.msra.mxu0 0
  %2424 = vmatprep.subr.bf16.mxu0 0
  %2425 = vmatpush1.bf16.msra.mxu0 0
  %2426 = vmatprep.subr.bf16.mxu0 0
  %2427 = vmatpush1.bf16.msra.mxu0 0
  %2428 = vmatprep.subr.bf16.mxu0 0
  %2429 = vmatpush1.bf16.msra.mxu0 %v1788
  %2430 = vmatprep.subr.bf16.mxu0 0
  %2431 = vmatpush1.bf16.msra.mxu0 %v1787
  %2432 = vmatprep.subr.bf16.mxu0 0
  %2433 = vmatpush2.bf16.msra.mxu0 0
  %2434 = vmatprep.subr.bf16.mxu0 0
  %2435 = vmatpush2.bf16.msra.mxu0 0
  %2436 = vmatprep.subr.bf16.mxu0 0
  %2437 = vmatpush2.bf16.msra.mxu0 0
  %2438 = vmatprep.subr.bf16.mxu0 0
  %2439 = vmatpush2.bf16.msra.mxu0 0
  %2440 = vmatprep.subr.bf16.mxu0 0
  %2441 = vmatpush2.bf16.msra.mxu0 0
  %2442 = vmatprep.subr.bf16.mxu0 0
  %2443 = vmatpush2.bf16.msra.mxu0 0
  %2444 = vmatprep.subr.bf16.mxu0 0
  %2445 = vmatpush2.bf16.msra.mxu0 0
  %2446 = vmatprep.subr.bf16.mxu0 0
  %2447 = vmatpush2.bf16.msra.mxu0 0
  %2448 = vmatprep.mubr.bf16.mxu0 0
  %2449 = vmatmul.mubr.bf16.gmra.mxu0 %v2414
  %v2450 = vpop.f32.mrf.mxu0
  %v2451 = vadd.f32 0.0, %v2450
  %v2452 = vpop.f32.mrf.mxu0
  %v2453 = vpop.f32.mrf.mxu0
  %v2454 = vpop.f32.mrf.mxu0
  %2455 = vdwg.mxu0
  %v2456 = vadd.f32 %v1784, %v2451
  %v2457 = vxor.u32 %v2456, 2147483648
  %v2458 = vmul.f32 %v2457, 1.442695
  %v2459 = vpow.pop %v2458
  %v2460 = vadd.f32 %v2459, 1.0
  %v2461 = vrcp.pop %v2460
  %v2462 = vmul.f32 1.0, %v2461
  %v2463 = vadd.f32 %v2451, %v1845
  %2465 = vrot.lane.b32.xlu0 %v2463, 64
  %v2466 = vpop.permute.xlu0 %2465
  %v2468 = vmul.f32 %v2462, %v2466
  %2470 = vrot.lane.b32.xlu0 %v2468, 64
  %v2471 = vpop.permute.xlu0 %2470
  %v2473 = vadd.f32 %v1784, %v2471
  %v2474 = vtanh.pop %v2473
  %v2475 = vsub.f32 1.0, %v2462
  %2477 = vrot.lane.b32.xlu0 %v2474, 96
  %v2478 = vpop.permute.xlu0 %2477
  %v2480 = vmul.f32 %v2475, %v2478
  %v2481 = vmul.f32 %v2462, %v2408
  %v2482 = vadd.f32 %v2480, %v2481
  %2484 = vset.pattern.permute.xlu0 0
  %2485 = vperm.xlu0 %2484, %v1689
  %v2486 = vpop.permute.xlu0 %2485
  %v2488 = vmul.f32 %v2486, %v2482
  %v2489 = vld [vmem:[%s7 + $0x42] sm:$0xff]
  %v2490 = vld [vmem:[%s7 + $0x4a] sm:$0xff]
  %v2491 = vld [vmem:[%s7 + $0x52] sm:$0xff]
  %v2492 = vld [vmem:[%s7 + $0x5a] sm:$0xff]
  %v2493 = vld [vmem:[%s7 + $0x62] sm:$0xff]
  %v2494 = vld [vmem:[%s7 + $0x6a] sm:$0xff]
  %v2495 = vld [vmem:[%s7 + $0x72] sm:$0xff]
  %v2496 = vld [vmem:[%s7 + $0x7a] sm:$0xff]
  %v2497 = vld [vmem:[%s7 + $0x82] sm:$0x1]
  %v2498 = vld [vmem:[%s7 + $0x83] sm:$0x1]
  %v2499 = vpack.c.bf16 %v1960, %v1872
  %v2500 = vpack.c.bf16 %v2136, %v2048
  %v2501 = vpack.c.bf16 %v2312, %v2224
  %v2502 = vpack.c.bf16 %v2488, %v2400
  %v2503 = vpack.c.bf16 %v2490, %v2489
  %v2504 = vpack.c.bf16 %v2492, %v2491
  %v2505 = vlaneseq
  %v2506 = vshrl.u32 %v2505, 7
  %v2507 = vsub.s32 0, %v2506
  %v2508 = vrot.slane %v2497, %v2507
  %2513 = vrot.lane.b32.xlu0 %v2499, 96
  %v2514 = vpop.permute.xlu0 %2513
  %2515 = vrot.lane.b32.xlu0 %v2500, 96
  %v2516 = vpop.permute.xlu0 %2515
  %2517 = vrot.lane.b32.xlu0 %v2501, 96
  %v2518 = vpop.permute.xlu0 %2517
  %2519 = vrot.lane.b32.xlu0 %v2502, 96
  %v2520 = vpop.permute.xlu0 %2519
  %v2522 = vsel %vm205, %v2514, 0
  %v2525 = vsel %vm205, %v2516, 0
  %v2528 = vsel %vm205, %v2518, 0
  %v2531 = vsel %vm205, %v2520, 0
  %2533 = vmatprep.subr.bf16.mxu0 0
  %2534 = vmatpush1.bf16.msra.mxu0 0
  %2535 = vmatprep.subr.bf16.mxu0 0
  %2536 = vmatpush1.bf16.msra.mxu0 0
  %2537 = vmatprep.subr.bf16.mxu0 0
  %2538 = vmatpush1.bf16.msra.mxu0 0
  %2539 = vmatprep.subr.bf16.mxu0 0
  %2540 = vmatpush1.bf16.msra.mxu0 0
  %2541 = vmatprep.subr.bf16.mxu0 0
  %2542 = vmatpush1.bf16.msra.mxu0 0
  %2543 = vmatprep.subr.bf16.mxu0 0
  %2544 = vmatpush1.bf16.msra.mxu0 0
  %2545 = vmatprep.subr.bf16.mxu0 0
  %2546 = vmatpush1.bf16.msra.mxu0 %v2504
  %2547 = vmatprep.subr.bf16.mxu0 0
  %2548 = vmatpush1.bf16.msra.mxu0 %v2503
  %2549 = vmatprep.subr.bf16.mxu0 0
  %2550 = vmatpush2.bf16.msra.mxu0 0
  %2551 = vmatprep.subr.bf16.mxu0 0
  %2552 = vmatpush2.bf16.msra.mxu0 0
  %2553 = vmatprep.subr.bf16.mxu0 0
  %2554 = vmatpush2.bf16.msra.mxu0 0
  %2555 = vmatprep.subr.bf16.mxu0 0
  %2556 = vmatpush2.bf16.msra.mxu0 0
  %2557 = vmatprep.subr.bf16.mxu0 0
  %2558 = vmatpush2.bf16.msra.mxu0 0
  %2559 = vmatprep.subr.bf16.mxu0 0
  %2560 = vmatpush2.bf16.msra.mxu0 0
  %2561 = vmatprep.subr.bf16.mxu0 0
  %2562 = vmatpush2.bf16.msra.mxu0 0
  %2563 = vmatprep.subr.bf16.mxu0 0
  %2564 = vmatpush2.bf16.msra.mxu0 0
  %2565 = vmatprep.mubr.bf16.mxu0 0
  %2566 = vmatmul.mubr.bf16.gmra.mxu0 %v2522
  %v2567 = vpop.f32.mrf.mxu0
  %v2568 = vadd.f32 %v2508, %v2567
  %v2569 = vpop.f32.mrf.mxu0
  %v2570 = vpop.f32.mrf.mxu0
  %v2571 = vadd.f32 %v2508, %v2570
  %v2572 = vpop.f32.mrf.mxu0
  %2573 = vmatprep.mubr.bf16.mxu0 0
  %2574 = vmatmul.mubr.bf16.gmra.mxu0 %v2525
  %v2575 = vpop.f32.mrf.mxu0
  %v2576 = vadd.f32 %v2508, %v2575
  %v2577 = vpop.f32.mrf.mxu0
  %v2578 = vpop.f32.mrf.mxu0
  %v2579 = vadd.f32 %v2508, %v2578
  %v2580 = vpop.f32.mrf.mxu0
  %2581 = vmatprep.mubr.bf16.mxu0 0
  %2582 = vmatmul.mubr.bf16.gmra.mxu0 %v2528
  %v2583 = vpop.f32.mrf.mxu0
  %v2584 = vadd.f32 %v2508, %v2583
  %v2585 = vpop.f32.mrf.mxu0
  %v2586 = vpop.f32.mrf.mxu0
  %v2587 = vadd.f32 %v2508, %v2586
  %v2588 = vpop.f32.mrf.mxu0
  %2589 = vmatprep.mubr.bf16.mxu0 0
  %2590 = vmatmul.mubr.bf16.gmra.mxu0 %v2531
  %v2591 = vpop.f32.mrf.mxu0
  %v2592 = vadd.f32 %v2508, %v2591
  %v2593 = vpop.f32.mrf.mxu0
  %v2594 = vpop.f32.mrf.mxu0
  %v2595 = vadd.f32 %v2508, %v2594
  %v2596 = vpop.f32.mrf.mxu0
  %2597 = vdwg.mxu0
  %v2598 = vpack.c.bf16 %v2494, %v2493
  %v2599 = vpack.c.bf16 %v2496, %v2495
  %2600 = vmatprep.subr.bf16.mxu0 0
  %2601 = vmatpush1.bf16.msra.mxu0 0
  %2602 = vmatprep.subr.bf16.mxu0 0
  %2603 = vmatpush1.bf16.msra.mxu0 0
  %2604 = vmatprep.subr.bf16.mxu0 0
  %2605 = vmatpush1.bf16.msra.mxu0 0
  %2606 = vmatprep.subr.bf16.mxu0 0
  %2607 = vmatpush1.bf16.msra.mxu0 0
  %2608 = vmatprep.subr.bf16.mxu0 0
  %2609 = vmatpush1.bf16.msra.mxu0 0
  %2610 = vmatprep.subr.bf16.mxu0 0
  %2611 = vmatpush1.bf16.msra.mxu0 0
  %2612 = vmatprep.subr.bf16.mxu0 0
  %2613 = vmatpush1.bf16.msra.mxu0 %v2599
  %2614 = vmatprep.subr.bf16.mxu0 0
  %2615 = vmatpush1.bf16.msra.mxu0 %v2598
  %2616 = vmatprep.subr.bf16.mxu0 0
  %2617 = vmatpush2.bf16.msra.mxu0 0
  %2618 = vmatprep.subr.bf16.mxu0 0
  %2619 = vmatpush2.bf16.msra.mxu0 0
  %2620 = vmatprep.subr.bf16.mxu0 0
  %2621 = vmatpush2.bf16.msra.mxu0 0
  %2622 = vmatprep.subr.bf16.mxu0 0
  %2623 = vmatpush2.bf16.msra.mxu0 0
  %2624 = vmatprep.subr.bf16.mxu0 0
  %2625 = vmatpush2.bf16.msra.mxu0 0
  %2626 = vmatprep.subr.bf16.mxu0 0
  %2627 = vmatpush2.bf16.msra.mxu0 0
  %2628 = vmatprep.subr.bf16.mxu0 0
  %2629 = vmatpush2.bf16.msra.mxu0 0
  %2630 = vmatprep.subr.bf16.mxu0 0
  %2631 = vmatpush2.bf16.msra.mxu0 0
  %2632 = vmatprep.mubr.bf16.mxu0 0
  %2633 = vmatmul.mubr.bf16.gmra.mxu0 %v1790
  %v2634 = vpop.f32.mrf.mxu0
  %v2635 = vadd.f32 0.0, %v2634
  %v2636 = vpop.f32.mrf.mxu0
  %v2637 = vpop.f32.mrf.mxu0
  %v2638 = vpop.f32.mrf.mxu0
  %2639 = vdwg.mxu0
  %v2640 = vadd.f32 %v2568, %v2635
  %v2641 = vxor.u32 %v2640, 2147483648
  %v2642 = vmul.f32 %v2641, 1.442695
  %v2643 = vpow.pop %v2642
  %v2644 = vadd.f32 %v2643, 1.0
  %v2645 = vrcp.pop %v2644
  %v2646 = vmul.f32 1.0, %v2645
  %v2647 = vlaneseq
  %v2648 = vshrl.u32 %v2647, 7
  %v2649 = vsub.s32 0, %v2648
  %v2650 = vrot.slane %v2498, %v2649
  %2652 = vrot.lane.b32.xlu0 %v2650, 64
  %v2653 = vpop.permute.xlu0 %2652
  %v2655 = vadd.f32 %v2635, %v2653
  %2657 = vrot.lane.b32.xlu0 %v2655, 64
  %v2658 = vpop.permute.xlu0 %2657
  %v2660 = vmul.f32 %v2646, %v2658
  %2662 = vrot.lane.b32.xlu0 %v2660, 64
  %v2663 = vpop.permute.xlu0 %2662
  %v2665 = vadd.f32 %v2568, %v2663
  %v2666 = vtanh.pop %v2665
  %v2667 = vsub.f32 1.0, %v2646
  %2669 = vrot.lane.b32.xlu0 %v2666, 96
  %v2670 = vpop.permute.xlu0 %2669
  %v2672 = vmul.f32 %v2667, %v2670
  %v2673 = vmul.f32 %v2646, 0.0
  %v2674 = vadd.f32 %v2672, %v2673
  %v2675 = vmul.f32 %v1870, %v2674
  %v2676 = vadd.f32 %v2675, %v1879
  %v2677 = vpack.c.bf16 %v2676, %v2676
  %2679 = vrot.lane.b32.xlu0 %v2677, 96
  %v2680 = vpop.permute.xlu0 %2679
  %v2682 = vsel %vm205, %v2680, 0
  %2684 = vmatprep.subr.bf16.mxu0 0
  %2685 = vmatpush1.bf16.msra.mxu0 0
  %2686 = vmatprep.subr.bf16.mxu0 0
  %2687 = vmatpush1.bf16.msra.mxu0 0
  %2688 = vmatprep.subr.bf16.mxu0 0
  %2689 = vmatpush1.bf16.msra.mxu0 0
  %2690 = vmatprep.subr.bf16.mxu0 0
  %2691 = vmatpush1.bf16.msra.mxu0 0
  %2692 = vmatprep.subr.bf16.mxu0 0
  %2693 = vmatpush1.bf16.msra.mxu0 0
  %2694 = vmatprep.subr.bf16.mxu0 0
  %2695 = vmatpush1.bf16.msra.mxu0 0
  %2696 = vmatprep.subr.bf16.mxu0 0
  %2697 = vmatpush1.bf16.msra.mxu0 %v2599
  %2698 = vmatprep.subr.bf16.mxu0 0
  %2699 = vmatpush1.bf16.msra.mxu0 %v2598
  %2700 = vmatprep.subr.bf16.mxu0 0
  %2701 = vmatpush2.bf16.msra.mxu0 0
  %2702 = vmatprep.subr.bf16.mxu0 0
  %2703 = vmatpush2.bf16.msra.mxu0 0
  %2704 = vmatprep.subr.bf16.mxu0 0
  %2705 = vmatpush2.bf16.msra.mxu0 0
  %2706 = vmatprep.subr.bf16.mxu0 0
  %2707 = vmatpush2.bf16.msra.mxu0 0
  %2708 = vmatprep.subr.bf16.mxu0 0
  %2709 = vmatpush2.bf16.msra.mxu0 0
  %2710 = vmatprep.subr.bf16.mxu0 0
  %2711 = vmatpush2.bf16.msra.mxu0 0
  %2712 = vmatprep.subr.bf16.mxu0 0
  %2713 = vmatpush2.bf16.msra.mxu0 0
  %2714 = vmatprep.subr.bf16.mxu0 0
  %2715 = vmatpush2.bf16.msra.mxu0 0
  %2716 = vmatprep.mubr.bf16.mxu0 0
  %2717 = vmatmul.mubr.bf16.gmra.mxu0 %v2682
  %v2718 = vpop.f32.mrf.mxu0
  %v2719 = vadd.f32 0.0, %v2718
  %v2720 = vpop.f32.mrf.mxu0
  %v2721 = vpop.f32.mrf.mxu0
  %v2722 = vpop.f32.mrf.mxu0
  %2723 = vdwg.mxu0
  %v2724 = vadd.f32 %v2571, %v2719
  %v2725 = vxor.u32 %v2724, 2147483648
  %v2726 = vmul.f32 %v2725, 1.442695
  %v2727 = vpow.pop %v2726
  %v2728 = vadd.f32 %v2727, 1.0
  %v2729 = vrcp.pop %v2728
  %v2730 = vmul.f32 1.0, %v2729
  %v2731 = vadd.f32 %v2719, %v2653
  %2733 = vrot.lane.b32.xlu0 %v2731, 64
  %v2734 = vpop.permute.xlu0 %2733
  %v2736 = vmul.f32 %v2730, %v2734
  %2738 = vrot.lane.b32.xlu0 %v2736, 64
  %v2739 = vpop.permute.xlu0 %2738
  %v2741 = vadd.f32 %v2571, %v2739
  %v2742 = vtanh.pop %v2741
  %v2743 = vsub.f32 1.0, %v2730
  %2745 = vrot.lane.b32.xlu0 %v2742, 96
  %v2746 = vpop.permute.xlu0 %2745
  %v2748 = vmul.f32 %v2743, %v2746
  %v2749 = vmul.f32 %v2730, %v2676
  %v2750 = vadd.f32 %v2748, %v2749
  %v2751 = vmul.f32 %v1958, %v2750
  %v2752 = vmul.f32 %v1965, %v2676
  %v2753 = vadd.f32 %v2751, %v2752
  %v2754 = vpack.c.bf16 %v2753, %v2753
  %2756 = vrot.lane.b32.xlu0 %v2754, 96
  %v2757 = vpop.permute.xlu0 %2756
  %v2759 = vsel %vm205, %v2757, 0
  %2761 = vmatprep.subr.bf16.mxu0 0
  %2762 = vmatpush1.bf16.msra.mxu0 0
  %2763 = vmatprep.subr.bf16.mxu0 0
  %2764 = vmatpush1.bf16.msra.mxu0 0
  %2765 = vmatprep.subr.bf16.mxu0 0
  %2766 = vmatpush1.bf16.msra.mxu0 0
  %2767 = vmatprep.subr.bf16.mxu0 0
  %2768 = vmatpush1.bf16.msra.mxu0 0
  %2769 = vmatprep.subr.bf16.mxu0 0
  %2770 = vmatpush1.bf16.msra.mxu0 0
  %2771 = vmatprep.subr.bf16.mxu0 0
  %2772 = vmatpush1.bf16.msra.mxu0 0
  %2773 = vmatprep.subr.bf16.mxu0 0
  %2774 = vmatpush1.bf16.msra.mxu0 %v2599
  %2775 = vmatprep.subr.bf16.mxu0 0
  %2776 = vmatpush1.bf16.msra.mxu0 %v2598
  %2777 = vmatprep.subr.bf16.mxu0 0
  %2778 = vmatpush2.bf16.msra.mxu0 0
  %2779 = vmatprep.subr.bf16.mxu0 0
  %2780 = vmatpush2.bf16.msra.mxu0 0
  %2781 = vmatprep.subr.bf16.mxu0 0
  %2782 = vmatpush2.bf16.msra.mxu0 0
  %2783 = vmatprep.subr.bf16.mxu0 0
  %2784 = vmatpush2.bf16.msra.mxu0 0
  %2785 = vmatprep.subr.bf16.mxu0 0
  %2786 = vmatpush2.bf16.msra.mxu0 0
  %2787 = vmatprep.subr.bf16.mxu0 0
  %2788 = vmatpush2.bf16.msra.mxu0 0
  %2789 = vmatprep.subr.bf16.mxu0 0
  %2790 = vmatpush2.bf16.msra.mxu0 0
  %2791 = vmatprep.subr.bf16.mxu0 0
  %2792 = vmatpush2.bf16.msra.mxu0 0
  %2793 = vmatprep.mubr.bf16.mxu0 0
  %2794 = vmatmul.mubr.bf16.gmra.mxu0 %v2759
  %v2795 = vpop.f32.mrf.mxu0
  %v2796 = vadd.f32 0.0, %v2795
  %v2797 = vpop.f32.mrf.mxu0
  %v2798 = vpop.f32.mrf.mxu0
  %v2799 = vpop.f32.mrf.mxu0
  %2800 = vdwg.mxu0
  %v2801 = vadd.f32 %v2576, %v2796
  %v2802 = vxor.u32 %v2801, 2147483648
  %v2803 = vmul.f32 %v2802, 1.442695
  %v2804 = vpow.pop %v2803
  %v2805 = vadd.f32 %v2804, 1.0
  %v2806 = vrcp.pop %v2805
  %v2807 = vmul.f32 1.0, %v2806
  %v2808 = vadd.f32 %v2796, %v2653
  %2810 = vrot.lane.b32.xlu0 %v2808, 64
  %v2811 = vpop.permute.xlu0 %2810
  %v2813 = vmul.f32 %v2807, %v2811
  %2815 = vrot.lane.b32.xlu0 %v2813, 64
  %v2816 = vpop.permute.xlu0 %2815
  %v2818 = vadd.f32 %v2576, %v2816
  %v2819 = vtanh.pop %v2818
  %v2820 = vsub.f32 1.0, %v2807
  %2822 = vrot.lane.b32.xlu0 %v2819, 96
  %v2823 = vpop.permute.xlu0 %2822
  %v2825 = vmul.f32 %v2820, %v2823
  %v2826 = vmul.f32 %v2807, %v2753
  %v2827 = vadd.f32 %v2825, %v2826
  %v2828 = vmul.f32 %v2046, %v2827
  %v2829 = vmul.f32 %v2053, %v2753
  %v2830 = vadd.f32 %v2828, %v2829
  %v2831 = vpack.c.bf16 %v2830, %v2830
  %2833 = vrot.lane.b32.xlu0 %v2831, 96
  %v2834 = vpop.permute.xlu0 %2833
  %v2836 = vsel %vm205, %v2834, 0
  %2838 = vmatprep.subr.bf16.mxu0 0
  %2839 = vmatpush1.bf16.msra.mxu0 0
  %2840 = vmatprep.subr.bf16.mxu0 0
  %2841 = vmatpush1.bf16.msra.mxu0 0
  %2842 = vmatprep.subr.bf16.mxu0 0
  %2843 = vmatpush1.bf16.msra.mxu0 0
  %2844 = vmatprep.subr.bf16.mxu0 0
  %2845 = vmatpush1.bf16.msra.mxu0 0
  %2846 = vmatprep.subr.bf16.mxu0 0
  %2847 = vmatpush1.bf16.msra.mxu0 0
  %2848 = vmatprep.subr.bf16.mxu0 0
  %2849 = vmatpush1.bf16.msra.mxu0 0
  %2850 = vmatprep.subr.bf16.mxu0 0
  %2851 = vmatpush1.bf16.msra.mxu0 %v2599
  %2852 = vmatprep.subr.bf16.mxu0 0
  %2853 = vmatpush1.bf16.msra.mxu0 %v2598
  %2854 = vmatprep.subr.bf16.mxu0 0
  %2855 = vmatpush2.bf16.msra.mxu0 0
  %2856 = vmatprep.subr.bf16.mxu0 0
  %2857 = vmatpush2.bf16.msra.mxu0 0
  %2858 = vmatprep.subr.bf16.mxu0 0
  %2859 = vmatpush2.bf16.msra.mxu0 0
  %2860 = vmatprep.subr.bf16.mxu0 0
  %2861 = vmatpush2.bf16.msra.mxu0 0
  %2862 = vmatprep.subr.bf16.mxu0 0
  %2863 = vmatpush2.bf16.msra.mxu0 0
  %2864 = vmatprep.subr.bf16.mxu0 0
  %2865 = vmatpush2.bf16.msra.mxu0 0
  %2866 = vmatprep.subr.bf16.mxu0 0
  %2867 = vmatpush2.bf16.msra.mxu0 0
  %2868 = vmatprep.subr.bf16.mxu0 0
  %2869 = vmatpush2.bf16.msra.mxu0 0
  %2870 = vmatprep.mubr.bf16.mxu0 0
  %2871 = vmatmul.mubr.bf16.gmra.mxu0 %v2836
  %v2872 = vpop.f32.mrf.mxu0
  %v2873 = vadd.f32 0.0, %v2872
  %v2874 = vpop.f32.mrf.mxu0
  %v2875 = vpop.f32.mrf.mxu0
  %v2876 = vpop.f32.mrf.mxu0
  %2877 = vdwg.mxu0
  %v2878 = vadd.f32 %v2579, %v2873
  %v2879 = vxor.u32 %v2878, 2147483648
  %v2880 = vmul.f32 %v2879, 1.442695
  %v2881 = vpow.pop %v2880
  %v2882 = vadd.f32 %v2881, 1.0
  %v2883 = vrcp.pop %v2882
  %v2884 = vmul.f32 1.0, %v2883
  %v2885 = vadd.f32 %v2873, %v2653
  %2887 = vrot.lane.b32.xlu0 %v2885, 64
  %v2888 = vpop.permute.xlu0 %2887
  %v2890 = vmul.f32 %v2884, %v2888
  %2892 = vrot.lane.b32.xlu0 %v2890, 64
  %v2893 = vpop.permute.xlu0 %2892
  %v2895 = vadd.f32 %v2579, %v2893
  %v2896 = vtanh.pop %v2895
  %v2897 = vsub.f32 1.0, %v2884
  %2899 = vrot.lane.b32.xlu0 %v2896, 96
  %v2900 = vpop.permute.xlu0 %2899
  %v2902 = vmul.f32 %v2897, %v2900
  %v2903 = vmul.f32 %v2884, %v2830
  %v2904 = vadd.f32 %v2902, %v2903
  %v2905 = vmul.f32 %v2134, %v2904
  %v2906 = vmul.f32 %v2141, %v2830
  %v2907 = vadd.f32 %v2905, %v2906
  %v2908 = vpack.c.bf16 %v2907, %v2907
  %2910 = vrot.lane.b32.xlu0 %v2908, 96
  %v2911 = vpop.permute.xlu0 %2910
  %v2913 = vsel %vm205, %v2911, 0
  %2915 = vmatprep.subr.bf16.mxu0 0
  %2916 = vmatpush1.bf16.msra.mxu0 0
  %2917 = vmatprep.subr.bf16.mxu0 0
  %2918 = vmatpush1.bf16.msra.mxu0 0
  %2919 = vmatprep.subr.bf16.mxu0 0
  %2920 = vmatpush1.bf16.msra.mxu0 0
  %2921 = vmatprep.subr.bf16.mxu0 0
  %2922 = vmatpush1.bf16.msra.mxu0 0
  %2923 = vmatprep.subr.bf16.mxu0 0
  %2924 = vmatpush1.bf16.msra.mxu0 0
  %2925 = vmatprep.subr.bf16.mxu0 0
  %2926 = vmatpush1.bf16.msra.mxu0 0
  %2927 = vmatprep.subr.bf16.mxu0 0
  %2928 = vmatpush1.bf16.msra.mxu0 %v2599
  %2929 = vmatprep.subr.bf16.mxu0 0
  %2930 = vmatpush1.bf16.msra.mxu0 %v2598
  %2931 = vmatprep.subr.bf16.mxu0 0
  %2932 = vmatpush2.bf16.msra.mxu0 0
  %2933 = vmatprep.subr.bf16.mxu0 0
  %2934 = vmatpush2.bf16.msra.mxu0 0
  %2935 = vmatprep.subr.bf16.mxu0 0
  %2936 = vmatpush2.bf16.msra.mxu0 0
  %2937 = vmatprep.subr.bf16.mxu0 0
  %2938 = vmatpush2.bf16.msra.mxu0 0
  %2939 = vmatprep.subr.bf16.mxu0 0
  %2940 = vmatpush2.bf16.msra.mxu0 0
  %2941 = vmatprep.subr.bf16.mxu0 0
  %2942 = vmatpush2.bf16.msra.mxu0 0
  %2943 = vmatprep.subr.bf16.mxu0 0
  %2944 = vmatpush2.bf16.msra.mxu0 0
  %2945 = vmatprep.subr.bf16.mxu0 0
  %2946 = vmatpush2.bf16.msra.mxu0 0
  %2947 = vmatprep.mubr.bf16.mxu0 0
  %2948 = vmatmul.mubr.bf16.gmra.mxu0 %v2913
  %v2949 = vpop.f32.mrf.mxu0
  %v2950 = vadd.f32 0.0, %v2949
  %v2951 = vpop.f32.mrf.mxu0
  %v2952 = vpop.f32.mrf.mxu0
  %v2953 = vpop.f32.mrf.mxu0
  %2954 = vdwg.mxu0
  %v2955 = vadd.f32 %v2584, %v2950
  %v2956 = vxor.u32 %v2955, 2147483648
  %v2957 = vmul.f32 %v2956, 1.442695
  %v2958 = vpow.pop %v2957
  %v2959 = vadd.f32 %v2958, 1.0
  %v2960 = vrcp.pop %v2959
  %v2961 = vmul.f32 1.0, %v2960
  %v2962 = vadd.f32 %v2950, %v2653
  %2964 = vrot.lane.b32.xlu0 %v2962, 64
  %v2965 = vpop.permute.xlu0 %2964
  %v2967 = vmul.f32 %v2961, %v2965
  %2969 = vrot.lane.b32.xlu0 %v2967, 64
  %v2970 = vpop.permute.xlu0 %2969
  %v2972 = vadd.f32 %v2584, %v2970
  %v2973 = vtanh.pop %v2972
  %v2974 = vsub.f32 1.0, %v2961
  %2976 = vrot.lane.b32.xlu0 %v2973, 96
  %v2977 = vpop.permute.xlu0 %2976
  %v2979 = vmul.f32 %v2974, %v2977
  %v2980 = vmul.f32 %v2961, %v2907
  %v2981 = vadd.f32 %v2979, %v2980
  %v2982 = vmul.f32 %v2222, %v2981
  %v2983 = vmul.f32 %v2229, %v2907
  %v2984 = vadd.f32 %v2982, %v2983
  %v2985 = vpack.c.bf16 %v2984, %v2984
  %2987 = vrot.lane.b32.xlu0 %v2985, 96
  %v2988 = vpop.permute.xlu0 %2987
  %v2990 = vsel %vm205, %v2988, 0
  %2992 = vmatprep.subr.bf16.mxu0 0
  %2993 = vmatpush1.bf16.msra.mxu0 0
  %2994 = vmatprep.subr.bf16.mxu0 0
  %2995 = vmatpush1.bf16.msra.mxu0 0
  %2996 = vmatprep.subr.bf16.mxu0 0
  %2997 = vmatpush1.bf16.msra.mxu0 0
  %2998 = vmatprep.subr.bf16.mxu0 0
  %2999 = vmatpush1.bf16.msra.mxu0 0
  %3000 = vmatprep.subr.bf16.mxu0 0
  %3001 = vmatpush1.bf16.msra.mxu0 0
  %3002 = vmatprep.subr.bf16.mxu0 0
  %3003 = vmatpush1.bf16.msra.mxu0 0
  %3004 = vmatprep.subr.bf16.mxu0 0
  %3005 = vmatpush1.bf16.msra.mxu0 %v2599
  %3006 = vmatprep.subr.bf16.mxu0 0
  %3007 = vmatpush1.bf16.msra.mxu0 %v2598
  %3008 = vmatprep.subr.bf16.mxu0 0
  %3009 = vmatpush2.bf16.msra.mxu0 0
  %3010 = vmatprep.subr.bf16.mxu0 0
  %3011 = vmatpush2.bf16.msra.mxu0 0
  %3012 = vmatprep.subr.bf16.mxu0 0
  %3013 = vmatpush2.bf16.msra.mxu0 0
  %3014 = vmatprep.subr.bf16.mxu0 0
  %3015 = vmatpush2.bf16.msra.mxu0 0
  %3016 = vmatprep.subr.bf16.mxu0 0
  %3017 = vmatpush2.bf16.msra.mxu0 0
  %3018 = vmatprep.subr.bf16.mxu0 0
  %3019 = vmatpush2.bf16.msra.mxu0 0
  %3020 = vmatprep.subr.bf16.mxu0 0
  %3021 = vmatpush2.bf16.msra.mxu0 0
  %3022 = vmatprep.subr.bf16.mxu0 0
  %3023 = vmatpush2.bf16.msra.mxu0 0
  %3024 = vmatprep.mubr.bf16.mxu0 0
  %3025 = vmatmul.mubr.bf16.gmra.mxu0 %v2990
  %v3026 = vpop.f32.mrf.mxu0
  %v3027 = vadd.f32 0.0, %v3026
  %v3028 = vpop.f32.mrf.mxu0
  %v3029 = vpop.f32.mrf.mxu0
  %v3030 = vpop.f32.mrf.mxu0
  %3031 = vdwg.mxu0
  %v3032 = vadd.f32 %v2587, %v3027
  %v3033 = vxor.u32 %v3032, 2147483648
  %v3034 = vmul.f32 %v3033, 1.442695
  %v3035 = vpow.pop %v3034
  %v3036 = vadd.f32 %v3035, 1.0
  %v3037 = vrcp.pop %v3036
  %v3038 = vmul.f32 1.0, %v3037
  %v3039 = vadd.f32 %v3027, %v2653
  %3041 = vrot.lane.b32.xlu0 %v3039, 64
  %v3042 = vpop.permute.xlu0 %3041
  %v3044 = vmul.f32 %v3038, %v3042
  %3046 = vrot.lane.b32.xlu0 %v3044, 64
  %v3047 = vpop.permute.xlu0 %3046
  %v3049 = vadd.f32 %v2587, %v3047
  %v3050 = vtanh.pop %v3049
  %v3051 = vsub.f32 1.0, %v3038
  %3053 = vrot.lane.b32.xlu0 %v3050, 96
  %v3054 = vpop.permute.xlu0 %3053
  %v3056 = vmul.f32 %v3051, %v3054
  %v3057 = vmul.f32 %v3038, %v2984
  %v3058 = vadd.f32 %v3056, %v3057
  %v3059 = vmul.f32 %v2310, %v3058
  %v3060 = vmul.f32 %v2317, %v2984
  %v3061 = vadd.f32 %v3059, %v3060
  %v3062 = vpack.c.bf16 %v3061, %v3061
  %3064 = vrot.lane.b32.xlu0 %v3062, 96
  %v3065 = vpop.permute.xlu0 %3064
  %v3067 = vsel %vm205, %v3065, 0
  %3069 = vmatprep.subr.bf16.mxu0 0
  %3070 = vmatpush1.bf16.msra.mxu0 0
  %3071 = vmatprep.subr.bf16.mxu0 0
  %3072 = vmatpush1.bf16.msra.mxu0 0
  %3073 = vmatprep.subr.bf16.mxu0 0
  %3074 = vmatpush1.bf16.msra.mxu0 0
  %3075 = vmatprep.subr.bf16.mxu0 0
  %3076 = vmatpush1.bf16.msra.mxu0 0
  %3077 = vmatprep.subr.bf16.mxu0 0
  %3078 = vmatpush1.bf16.msra.mxu0 0
  %3079 = vmatprep.subr.bf16.mxu0 0
  %3080 = vmatpush1.bf16.msra.mxu0 0
  %3081 = vmatprep.subr.bf16.mxu0 0
  %3082 = vmatpush1.bf16.msra.mxu0 %v2599
  %3083 = vmatprep.subr.bf16.mxu0 0
  %3084 = vmatpush1.bf16.msra.mxu0 %v2598
  %3085 = vmatprep.subr.bf16.mxu0 0
  %3086 = vmatpush2.bf16.msra.mxu0 0
  %3087 = vmatprep.subr.bf16.mxu0 0
  %3088 = vmatpush2.bf16.msra.mxu0 0
  %3089 = vmatprep.subr.bf16.mxu0 0
  %3090 = vmatpush2.bf16.msra.mxu0 0
  %3091 = vmatprep.subr.bf16.mxu0 0
  %3092 = vmatpush2.bf16.msra.mxu0 0
  %3093 = vmatprep.subr.bf16.mxu0 0
  %3094 = vmatpush2.bf16.msra.mxu0 0
  %3095 = vmatprep.subr.bf16.mxu0 0
  %3096 = vmatpush2.bf16.msra.mxu0 0
  %3097 = vmatprep.subr.bf16.mxu0 0
  %3098 = vmatpush2.bf16.msra.mxu0 0
  %3099 = vmatprep.subr.bf16.mxu0 0
  %3100 = vmatpush2.bf16.msra.mxu0 0
  %3101 = vmatprep.mubr.bf16.mxu0 0
  %3102 = vmatmul.mubr.bf16.gmra.mxu0 %v3067
  %v3103 = vpop.f32.mrf.mxu0
  %v3104 = vadd.f32 0.0, %v3103
  %v3105 = vpop.f32.mrf.mxu0
  %v3106 = vpop.f32.mrf.mxu0
  %v3107 = vpop.f32.mrf.mxu0
  %3108 = vdwg.mxu0
  %v3109 = vadd.f32 %v2592, %v3104
  %v3110 = vxor.u32 %v3109, 2147483648
  %v3111 = vmul.f32 %v3110, 1.442695
  %v3112 = vpow.pop %v3111
  %v3113 = vadd.f32 %v3112, 1.0
  %v3114 = vrcp.pop %v3113
  %v3115 = vmul.f32 1.0, %v3114
  %v3116 = vadd.f32 %v3104, %v2653
  %3118 = vrot.lane.b32.xlu0 %v3116, 64
  %v3119 = vpop.permute.xlu0 %3118
  %v3121 = vmul.f32 %v3115, %v3119
  %3123 = vrot.lane.b32.xlu0 %v3121, 64
  %v3124 = vpop.permute.xlu0 %3123
  %v3126 = vadd.f32 %v2592, %v3124
  %v3127 = vtanh.pop %v3126
  %v3128 = vsub.f32 1.0, %v3115
  %3130 = vrot.lane.b32.xlu0 %v3127, 96
  %v3131 = vpop.permute.xlu0 %3130
  %v3133 = vmul.f32 %v3128, %v3131
  %v3134 = vmul.f32 %v3115, %v3061
  %v3135 = vadd.f32 %v3133, %v3134
  %v3136 = vmul.f32 %v2398, %v3135
  %v3137 = vmul.f32 %v2405, %v3061
  %v3138 = vadd.f32 %v3136, %v3137
  %v3139 = vpack.c.bf16 %v3138, %v3138
  %3141 = vrot.lane.b32.xlu0 %v3139, 96
  %v3142 = vpop.permute.xlu0 %3141
  %v3144 = vsel %vm205, %v3142, 0
  %3146 = vmatprep.subr.bf16.mxu0 0
  %3147 = vmatpush1.bf16.msra.mxu0 0
  %3148 = vmatprep.subr.bf16.mxu0 0
  %3149 = vmatpush1.bf16.msra.mxu0 0
  %3150 = vmatprep.subr.bf16.mxu0 0
  %3151 = vmatpush1.bf16.msra.mxu0 0
  %3152 = vmatprep.subr.bf16.mxu0 0
  %3153 = vmatpush1.bf16.msra.mxu0 0
  %3154 = vmatprep.subr.bf16.mxu0 0
  %3155 = vmatpush1.bf16.msra.mxu0 0
  %3156 = vmatprep.subr.bf16.mxu0 0
  %3157 = vmatpush1.bf16.msra.mxu0 0
  %3158 = vmatprep.subr.bf16.mxu0 0
  %3159 = vmatpush1.bf16.msra.mxu0 %v2599
  %3160 = vmatprep.subr.bf16.mxu0 0
  %3161 = vmatpush1.bf16.msra.mxu0 %v2598
  %3162 = vmatprep.subr.bf16.mxu0 0
  %3163 = vmatpush2.bf16.msra.mxu0 0
  %3164 = vmatprep.subr.bf16.mxu0 0
  %3165 = vmatpush2.bf16.msra.mxu0 0
  %3166 = vmatprep.subr.bf16.mxu0 0
  %3167 = vmatpush2.bf16.msra.mxu0 0
  %3168 = vmatprep.subr.bf16.mxu0 0
  %3169 = vmatpush2.bf16.msra.mxu0 0
  %3170 = vmatprep.subr.bf16.mxu0 0
  %3171 = vmatpush2.bf16.msra.mxu0 0
  %3172 = vmatprep.subr.bf16.mxu0 0
  %3173 = vmatpush2.bf16.msra.mxu0 0
  %3174 = vmatprep.subr.bf16.mxu0 0
  %3175 = vmatpush2.bf16.msra.mxu0 0
  %3176 = vmatprep.subr.bf16.mxu0 0
  %3177 = vmatpush2.bf16.msra.mxu0 0
  %3178 = vmatprep.mubr.bf16.mxu0 0
  %3179 = vmatmul.mubr.bf16.gmra.mxu0 %v3144
  %v3180 = vpop.f32.mrf.mxu0
  %v3181 = vadd.f32 0.0, %v3180
  %v3182 = vpop.f32.mrf.mxu0
  %v3183 = vpop.f32.mrf.mxu0
  %v3184 = vpop.f32.mrf.mxu0
  %3185 = vdwg.mxu0
  %v3186 = vadd.f32 %v2595, %v3181
  %v3187 = vxor.u32 %v3186, 2147483648
  %v3188 = vmul.f32 %v3187, 1.442695
  %v3189 = vpow.pop %v3188
  %v3190 = vadd.f32 %v3189, 1.0
  %v3191 = vrcp.pop %v3190
  %v3192 = vmul.f32 1.0, %v3191
  %v3193 = vadd.f32 %v3181, %v2653
  %3195 = vrot.lane.b32.xlu0 %v3193, 64
  %v3196 = vpop.permute.xlu0 %3195
  %v3198 = vmul.f32 %v3192, %v3196
  %3200 = vrot.lane.b32.xlu0 %v3198, 64
  %v3201 = vpop.permute.xlu0 %3200
  %v3203 = vadd.f32 %v2595, %v3201
  %v3204 = vtanh.pop %v3203
  %v3205 = vsub.f32 1.0, %v3192
  %3207 = vrot.lane.b32.xlu0 %v3204, 96
  %v3208 = vpop.permute.xlu0 %3207
  %v3210 = vmul.f32 %v3205, %v3208
  %v3211 = vmul.f32 %v3192, %v3138
  %v3212 = vadd.f32 %v3210, %v3211
  %v3213 = vmul.f32 %v2486, %v3212
  %v3214 = vsub.f32 1.0, %v1689
  %3216 = vset.pattern.permute.xlu0 0
  %3217 = vperm.xlu0 %3216, %v3214
  %v3218 = vpop.permute.xlu0 %3217
  %v3220 = vmul.f32 %v3218, %v3138
  %v3221 = vadd.f32 %v3213, %v3220
  %v3222 = vld [vmem:[%s6 + $0x3] sm:$0x1]
  %v3223 = vld [vmem:[%s6 + $0x4] sm:$0xff]
  %v3224 = vld [vmem:[%s6 + $0xc] sm:$0xff]
  %v3225 = vld [vmem:[%s6 + $0x14] sm:$0xff]
  %v3226 = vld [vmem:[%s6 + $0x1c] sm:$0xff]
  %v3227 = vpack.c.bf16 %v3221, %v3221
  %v3228 = vpack.c.bf16 %v3224, %v3223
  %v3229 = vpack.c.bf16 %v3226, %v3225
  %v3230 = vlaneseq
  %v3231 = vshrl.u32 %v3230, 7
  %v3232 = vsub.s32 0, %v3231
  %v3233 = vrot.slane %v3222, %v3232
  %3235 = vrot.lane.b32.xlu0 %v3227, 96
  %v3236 = vpop.permute.xlu0 %3235
  %v3238 = vsel %vm205, %v3236, 0
  %3240 = vmatprep.subr.bf16.mxu0 0
  %3241 = vmatpush1.bf16.msra.mxu0 0
  %3242 = vmatprep.subr.bf16.mxu0 0
  %3243 = vmatpush1.bf16.msra.mxu0 0
  %3244 = vmatprep.subr.bf16.mxu0 0
  %3245 = vmatpush1.bf16.msra.mxu0 0
  %3246 = vmatprep.subr.bf16.mxu0 0
  %3247 = vmatpush1.bf16.msra.mxu0 0
  %3248 = vmatprep.subr.bf16.mxu0 0
  %3249 = vmatpush1.bf16.msra.mxu0 0
  %3250 = vmatprep.subr.bf16.mxu0 0
  %3251 = vmatpush1.bf16.msra.mxu0 0
  %3252 = vmatprep.subr.bf16.mxu0 0
  %3253 = vmatpush1.bf16.msra.mxu0 %v3229
  %3254 = vmatprep.subr.bf16.mxu0 0
  %3255 = vmatpush1.bf16.msra.mxu0 %v3228
  %3256 = vmatprep.subr.bf16.mxu0 0
  %3257 = vmatpush2.bf16.msra.mxu0 0
  %3258 = vmatprep.subr.bf16.mxu0 0
  %3259 = vmatpush2.bf16.msra.mxu0 0
  %3260 = vmatprep.subr.bf16.mxu0 0
  %3261 = vmatpush2.bf16.msra.mxu0 0
  %3262 = vmatprep.subr.bf16.mxu0 0
  %3263 = vmatpush2.bf16.msra.mxu0 0
  %3264 = vmatprep.subr.bf16.mxu0 0
  %3265 = vmatpush2.bf16.msra.mxu0 0
  %3266 = vmatprep.subr.bf16.mxu0 0
  %3267 = vmatpush2.bf16.msra.mxu0 0
  %3268 = vmatprep.subr.bf16.mxu0 0
  %3269 = vmatpush2.bf16.msra.mxu0 0
  %3270 = vmatprep.subr.bf16.mxu0 0
  %3271 = vmatpush2.bf16.msra.mxu0 0
  %3272 = vmatprep.mubr.bf16.mxu0 0
  %3273 = vmatmul.mubr.bf16.gmra.mxu0 %v3238
  %v3274 = vpop.f32.mrf.mxu0
  %v3275 = vadd.f32 %v3233, %v3274
  %v3276 = vpop.f32.mrf.mxu0
  %v3277 = vpop.f32.mrf.mxu0
  %v3278 = vpop.f32.mrf.mxu0
  %3279 = vdwg.mxu0
  %3280 = vst [vmem:[%s8] sm:$0xff] %v3275
  // Predicated region
  $region34: #{gat_with_gru_forward.1} parent=0 // pred_check
    _
  $region35: #{gat_with_gru_forward.1} parent=0 // pred_check_branch
    %3282 = sbr.rel (0) target = $region37
  $region36: #{gat_with_gru_forward.1} parent=0 // pred_region
    _
  $region37: #{gat_with_gru_forward.1} parent=0 // pred_fallthru
    _
  // Predicated region
  $region38: #{gat_with_gru_forward.1} parent=0 // pred_check
    _
  $region39: #{gat_with_gru_forward.1} parent=0 // pred_check_branch
    %3284 = sbr.rel (0) target = $region41
  $region40: #{gat_with_gru_forward.1} parent=0 // pred_region
    _
  $region41: #{gat_with_gru_forward.1} parent=0 // pred_fallthru
    _

</llo_original>
